<compile_context>
chip_gen: v5e
topology: v5e:2x2
jax: 0.10.0
libtpu: 0.0.40
codegen_flags: <defaults>
</compile_context>

<pallas_src>
import functools

import jax
import jax.numpy as jnp
from jax.experimental import pallas as pl
from jax.experimental.pallas import tpu as pltpu


def _round_up(x, m):
    return (x + m - 1) // m * m


# ---------------------------------------------------------------------------
# Fused ResBlock kernel (one grid step == one batch element)
# ---------------------------------------------------------------------------
def _resblock_kernel(x_ref, w1_ref, b1_ref, w2_ref, b2_ref, wid_ref, bid_ref,
                     o_ref, h1_ref, imc1_ref, imc2_ref, pool_ref,
                     *, Wp, H, W, Ho, Wo, R1, Ci, C1, delta):
    Hp = H + 2

    # ---- conv1 im2col: 9 shifted copies of the resident x block into VMEM ----------
    for kh in range(3):
        for kw in range(3):
            t = kh * 3 + kw
            off = kh * Wp + kw + delta                       # static offset
            imc1_ref[:, t * Ci:(t + 1) * Ci] = x_ref[off:off + R1, :]

    # ---- conv1: ONE (R1, 9*Ci) @ (9*Ci, C1) matmul + bias + ReLU + pad-ring mask ----
    h1 = jnp.dot(imc1_ref[...], w1_ref[...], preferred_element_type=jnp.float32)
    h1 = jnp.maximum(h1 + b1_ref[...], 0.0)
    # interior mask computed in-kernel (replaces the old (R1,1) f32 mask input);
    # float div-free row/col recovery: +0.5 keeps floor() exact for integer q.
    q = jax.lax.broadcasted_iota(jnp.int32, (R1, 1), 0).astype(jnp.float32)
    qi = jnp.floor((q + 0.5) * (1.0 / Wp))
    qj = q - qi * Wp
    interior = ((q < float(Hp * Wp)) & (qi >= 1.0) & (qi <= float(H))
                & (qj >= 1.0) & (qj <= float(W)))
    h1_ref[...] = jnp.where(interior, h1, 0.0)               # zero-padded conv1 output

    # ---- conv2 im2col (stride-2 taps of resident h1) + whole-image 2x2 avg pool -----
    for a in range(Ho):
        r0 = a * Wo
        for kh in range(3):
            row = (2 * a + kh) * Wp
            for kw in range(3):
                t = kh * 3 + kw
                imc2_ref[r0:r0 + Wo, t * C1:(t + 1) * C1] = \
                    h1_ref[pl.ds(row + kw, Wo, stride=2), :]
        pooled = jnp.zeros((Wo, Ci), jnp.float32)
        for r in range(2):
            for c in range(2):
                start = (2 * a + r + 3) * Wp + c + 1
                pooled = pooled + x_ref[pl.ds(start, Wo, stride=2), :]
        pool_ref[r0:r0 + Wo, :] = pooled * 0.25

    # ---- conv2 and idconv: one matmul each, add, ReLU, single dense store -----------
    h2 = jnp.dot(imc2_ref[...], w2_ref[...], preferred_element_type=jnp.float32)
    h2 = jnp.maximum(h2 + b2_ref[...], 0.0)
    idc = jnp.dot(pool_ref[...], wid_ref[...],
                  preferred_element_type=jnp.float32) + bid_ref[...]
    o_ref[...] = jnp.maximum(h2 + idc, 0.0)


# ---------------------------------------------------------------------------
# Wrapper (layout glue only)
# ---------------------------------------------------------------------------
def resblock_forward(x_nchw, params, s=2):
    """ReLU(convs(x) + idconv(avgpool2(x))) -- PyTorch ResBlock with ni != nf, s=2."""
    assert s == 2, "only the downsampling (s=2) ResBlock configuration is implemented"
    N, Ci, H, W = x_nchw.shape
    assert H % 2 == 0 and W % 2 == 0   # TODO(synk): ceil_mode partial pool windows
    nf = params["b1"].shape[0]

    Hp, Wp = H + 2, W + 2
    Ho, Wo = H // 2, W // 2
    M2 = Ho * Wo
    C1 = _round_up(nf, 8)              # intermediate / output channel width (no 128 pad)
    K1, K2 = 9 * Ci, 9 * C1
    R1 = _round_up(Hp * Wp, 8)         # conv1 rows computed per batch (padded layout)
    delta = Wp - 1                     # static tap-offset shift (H pre-pad of 3 rows)
    e_bot = -(-(R1 + 1) // Wp) - H     # bottom H-pad so all 9 tap slices stay in-bounds
    Rext = (H + 3 + e_bot) * Wp

    # NCHW -> NHWC transpose + ONE jnp.pad (H by (3,e_bot), W by (1,1)) + free reshape.
    x = jnp.transpose(x_nchw, (0, 2, 3, 1))
    x_ext = jnp.pad(x, ((0, 0), (3, e_bot), (1, 1), (0, 0))).reshape(N, Rext, Ci)

    # Weights flattened for the single-matmul-per-conv formulation; contraction dims
    # keep their natural size, output channels padded only to the sublane multiple C1.
    w1f = jnp.pad(params["w1"].reshape(K1, nf), ((0, 0), (0, C1 - nf)))
    w2f = jnp.pad(params["w2"].reshape(9, nf, nf),
                  ((0, 0), (0, C1 - nf), (0, C1 - nf))).reshape(K2, C1)
    widf = jnp.pad(params["wid"].reshape(Ci, nf), ((0, 0), (0, C1 - nf)))
    b1 = jnp.pad(params["b1"], (0, C1 - nf)).reshape(1, C1)
    b2 = jnp.pad(params["b2"], (0, C1 - nf)).reshape(1, C1)
    bid = jnp.pad(params["bid"], (0, C1 - nf)).reshape(1, C1)

    kernel = functools.partial(_resblock_kernel, Wp=Wp, H=H, W=W, Ho=Ho, Wo=Wo,
                               R1=R1, Ci=Ci, C1=C1, delta=delta)

    out = pl.pallas_call(
        kernel,
        out_shape=jax.ShapeDtypeStruct((N, M2, C1), jnp.float32),
        grid=(N,),
        in_specs=[
            pl.BlockSpec((None, Rext, Ci), lambda n: (n, 0, 0)),   # x_ext, per batch
            pl.BlockSpec((K1, C1), lambda n: (0, 0)),              # w1 flat (resident)
            pl.BlockSpec((1, C1), lambda n: (0, 0)),               # b1
            pl.BlockSpec((K2, C1), lambda n: (0, 0)),              # w2 flat (resident)
            pl.BlockSpec((1, C1), lambda n: (0, 0)),               # b2
            pl.BlockSpec((Ci, C1), lambda n: (0, 0)),              # wid
            pl.BlockSpec((1, C1), lambda n: (0, 0)),               # bid
        ],
        out_specs=pl.BlockSpec((None, M2, C1), lambda n: (n, 0, 0)),
        scratch_shapes=[
            pltpu.VMEM((R1, C1), jnp.float32),    # h1 (padded layout, stays in VMEM)
            pltpu.VMEM((R1, K1), jnp.float32),    # conv1 im2col
            pltpu.VMEM((M2, K2), jnp.float32),    # conv2 im2col
            pltpu.VMEM((M2, Ci), jnp.float32),    # pooled x (skip path)
        ],
        compiler_params=pltpu.CompilerParams(
            dimension_semantics=("parallel",),
            vmem_limit_bytes=32 * 1024 * 1024),
    )(x_ext, w1f, b1, w2f, b2, widf, bid)

    out = out[:, :, :nf].reshape(N, Ho, Wo, nf)                    # drop C1-nf lanes
    return jnp.transpose(out, (0, 3, 1, 2))                        # NHWC -> NCHW


# ---------------------------------------------------------------------------
# Plain-JAX reference (correctness check only)
# ---------------------------------------------------------------------------
def resblock_ref(x_nchw, params, s=2):
    dn = ("NHWC", "HWIO", "NHWC")
    x = jnp.transpose(x_nchw, (0, 2, 3, 1))
    h1 = jax.lax.conv_general_dilated(x, params["w1"], (1, 1), ((1, 1), (1, 1)),
                                      dimension_numbers=dn) + params["b1"]
    h1 = jnp.maximum(h1, 0.0)
    h2 = jax.lax.conv_general_dilated(h1, params["w2"], (s, s), ((1, 1), (1, 1)),
                                      dimension_numbers=dn) + params["b2"]
    h2 = jnp.maximum(h2, 0.0)
    n, hh, ww, c = x.shape
    pooled = x.reshape(n, hh // 2, 2, ww // 2, 2, c).mean(axis=(2, 4))
    idc = jax.lax.conv_general_dilated(pooled, params["wid"], (1, 1), ((0, 0), (0, 0)),
                                       dimension_numbers=dn) + params["bid"]
    out = jnp.maximum(h2 + idc, 0.0)
    return jnp.transpose(out, (0, 3, 1, 2))


if __name__ == "__main__":
    ni, nf, s = 4, 8, 2
    n, h, w = 2, 16, 16

    key = jax.random.PRNGKey(0)
    k0, k1, k2, k3, k4, k5, kx = jax.random.split(key, 7)
    params = {
        "w1": jax.random.normal(k0, (3, 3, ni, nf), jnp.float32) * 0.1,   # HWIO
        "b1": jax.random.normal(k1, (nf,), jnp.float32) * 0.1,
        "w2": jax.random.normal(k2, (3, 3, nf, nf), jnp.float32) * 0.1,
        "b2": jax.random.normal(k3, (nf,), jnp.float32) * 0.1,
        "wid": jax.random.normal(k4, (1, 1, ni, nf), jnp.float32) * 0.1,
        "bid": jax.random.normal(k5, (nf,), jnp.float32) * 0.1,
    }
    x = jax.random.normal(kx, (n, ni, h, w), jnp.float32)                  # NCHW input

    out = jax.jit(lambda xx, pp: resblock_forward(xx, pp, s=s))(x, params)
    out = jax.block_until_ready(out)

    assert out.shape == (n, nf, h // s, w // s), out.shape
    ref = resblock_ref(x, params, s=s)
    if not jnp.allclose(out, ref, atol=1e-3, rtol=1e-3):
        err = jnp.max(jnp.abs(out - ref))
        raise AssertionError(f"Pallas ResBlock mismatch, max abs err {err}")
    print("KERNEL_OK")
</pallas_src>

<mosaic_0001>
module attributes {stable_mosaic.version = 11 : i64} {
  func.func @_resblock_kernel(%arg0: i32, %arg1: memref<1x396x4xf32, #tpu.memory_space<vmem>>, %arg2: memref<36x8xf32, #tpu.memory_space<vmem>>, %arg3: memref<1x8xf32, #tpu.memory_space<vmem>>, %arg4: memref<72x8xf32, #tpu.memory_space<vmem>>, %arg5: memref<1x8xf32, #tpu.memory_space<vmem>>, %arg6: memref<4x8xf32, #tpu.memory_space<vmem>>, %arg7: memref<1x8xf32, #tpu.memory_space<vmem>>, %arg8: memref<1x64x8xf32, #tpu.memory_space<vmem>>, %arg9: memref<328x8xf32, #tpu.memory_space<vmem>>, %arg10: memref<328x36xf32, #tpu.memory_space<vmem>>, %arg11: memref<64x72xf32, #tpu.memory_space<vmem>>, %arg12: memref<64x4xf32, #tpu.memory_space<vmem>>) attributes {dimension_semantics = [#tpu.dimension_semantics<parallel>], iteration_bounds = array<i64: 2>, scalar_prefetch = 0 : i64, scratch_operands = 4 : i64, tpu.core_type = #tpu.core_type<tc>, window_params = [{transform_indices = @transform_0, window_bounds = array<i64: 1, 396, 4>}, {pipeline_mode = #tpu.pipeline_mode<synchronous>, transform_indices = @transform_1, window_bounds = array<i64: 36, 8>}, {pipeline_mode = #tpu.pipeline_mode<synchronous>, transform_indices = @transform_2, window_bounds = array<i64: 1, 8>}, {pipeline_mode = #tpu.pipeline_mode<synchronous>, transform_indices = @transform_3, window_bounds = array<i64: 72, 8>}, {pipeline_mode = #tpu.pipeline_mode<synchronous>, transform_indices = @transform_4, window_bounds = array<i64: 1, 8>}, {pipeline_mode = #tpu.pipeline_mode<synchronous>, transform_indices = @transform_5, window_bounds = array<i64: 4, 8>}, {pipeline_mode = #tpu.pipeline_mode<synchronous>, transform_indices = @transform_6, window_bounds = array<i64: 1, 8>}, {transform_indices = @transform_7, window_bounds = array<i64: 1, 64, 8>}]} {
    %c0 = arith.constant 0 : index
    %c17 = arith.constant 17 : index
    %c0_0 = arith.constant 0 : index
    %0 = vector.load %arg1[%c0, %c17, %c0_0] : memref<1x396x4xf32, #tpu.memory_space<vmem>>, vector<1x328x4xf32>
    %1 = vector.shape_cast %0 : vector<1x328x4xf32> to vector<328x4xf32>
    %c0_1 = arith.constant 0 : index
    %c0_2 = arith.constant 0 : index
    %2 = vector.load %arg10[%c0_1, %c0_2] : memref<328x36xf32, #tpu.memory_space<vmem>>, vector<328x4xf32>
    tpu.vector_store %arg10[%c0_1, %c0_2], %1 {strides = array<i32>} : memref<328x36xf32, #tpu.memory_space<vmem>>, vector<328x4xf32>,
    %c0_3 = arith.constant 0 : index
    %c18 = arith.constant 18 : index
    %c0_4 = arith.constant 0 : index
    %3 = vector.load %arg1[%c0_3, %c18, %c0_4] : memref<1x396x4xf32, #tpu.memory_space<vmem>>, vector<1x328x4xf32>
    %4 = vector.shape_cast %3 : vector<1x328x4xf32> to vector<328x4xf32>
    %c0_5 = arith.constant 0 : index
    %c4 = arith.constant 4 : index
    %5 = vector.load %arg10[%c0_5, %c4] : memref<328x36xf32, #tpu.memory_space<vmem>>, vector<328x4xf32>
    tpu.vector_store %arg10[%c0_5, %c4], %4 {strides = array<i32>} : memref<328x36xf32, #tpu.memory_space<vmem>>, vector<328x4xf32>,
    %c0_6 = arith.constant 0 : index
    %c19 = arith.constant 19 : index
    %c0_7 = arith.constant 0 : index
    %6 = vector.load %arg1[%c0_6, %c19, %c0_7] : memref<1x396x4xf32, #tpu.memory_space<vmem>>, vector<1x328x4xf32>
    %7 = vector.shape_cast %6 : vector<1x328x4xf32> to vector<328x4xf32>
    %c0_8 = arith.constant 0 : index
    %c8 = arith.constant 8 : index
    %8 = vector.load %arg10[%c0_8, %c8] : memref<328x36xf32, #tpu.memory_space<vmem>>, vector<328x4xf32>
    tpu.vector_store %arg10[%c0_8, %c8], %7 {strides = array<i32>} : memref<328x36xf32, #tpu.memory_space<vmem>>, vector<328x4xf32>,
    %c0_9 = arith.constant 0 : index
    %c35 = arith.constant 35 : index
    %c0_10 = arith.constant 0 : index
    %9 = vector.load %arg1[%c0_9, %c35, %c0_10] : memref<1x396x4xf32, #tpu.memory_space<vmem>>, vector<1x328x4xf32>
    %10 = vector.shape_cast %9 : vector<1x328x4xf32> to vector<328x4xf32>
    %c0_11 = arith.constant 0 : index
    %c12 = arith.constant 12 : index
    %11 = vector.load %arg10[%c0_11, %c12] : memref<328x36xf32, #tpu.memory_space<vmem>>, vector<328x4xf32>
    tpu.vector_store %arg10[%c0_11, %c12], %10 {strides = array<i32>} : memref<328x36xf32, #tpu.memory_space<vmem>>, vector<328x4xf32>,
    %c0_12 = arith.constant 0 : index
    %c36 = arith.constant 36 : index
    %c0_13 = arith.constant 0 : index
    %12 = vector.load %arg1[%c0_12, %c36, %c0_13] : memref<1x396x4xf32, #tpu.memory_space<vmem>>, vector<1x328x4xf32>
    %13 = vector.shape_cast %12 : vector<1x328x4xf32> to vector<328x4xf32>
    %c0_14 = arith.constant 0 : index
    %c16 = arith.constant 16 : index
    %14 = vector.load %arg10[%c0_14, %c16] : memref<328x36xf32, #tpu.memory_space<vmem>>, vector<328x4xf32>
    tpu.vector_store %arg10[%c0_14, %c16], %13 {strides = array<i32>} : memref<328x36xf32, #tpu.memory_space<vmem>>, vector<328x4xf32>,
    %c0_15 = arith.constant 0 : index
    %c37 = arith.constant 37 : index
    %c0_16 = arith.constant 0 : index
    %15 = vector.load %arg1[%c0_15, %c37, %c0_16] : memref<1x396x4xf32, #tpu.memory_space<vmem>>, vector<1x328x4xf32>
    %16 = vector.shape_cast %15 : vector<1x328x4xf32> to vector<328x4xf32>
    %c0_17 = arith.constant 0 : index
    %c20 = arith.constant 20 : index
    %17 = vector.load %arg10[%c0_17, %c20] : memref<328x36xf32, #tpu.memory_space<vmem>>, vector<328x4xf32>
    tpu.vector_store %arg10[%c0_17, %c20], %16 {strides = array<i32>} : memref<328x36xf32, #tpu.memory_space<vmem>>, vector<328x4xf32>,
    %c0_18 = arith.constant 0 : index
    %c53 = arith.constant 53 : index
    %c0_19 = arith.constant 0 : index
    %18 = vector.load %arg1[%c0_18, %c53, %c0_19] : memref<1x396x4xf32, #tpu.memory_space<vmem>>, vector<1x328x4xf32>
    %19 = vector.shape_cast %18 : vector<1x328x4xf32> to vector<328x4xf32>
    %c0_20 = arith.constant 0 : index
    %c24 = arith.constant 24 : index
    %20 = vector.load %arg10[%c0_20, %c24] : memref<328x36xf32, #tpu.memory_space<vmem>>, vector<328x4xf32>
    tpu.vector_store %arg10[%c0_20, %c24], %19 {strides = array<i32>} : memref<328x36xf32, #tpu.memory_space<vmem>>, vector<328x4xf32>,
    %c0_21 = arith.constant 0 : index
    %c54 = arith.constant 54 : index
    %c0_22 = arith.constant 0 : index
    %21 = vector.load %arg1[%c0_21, %c54, %c0_22] : memref<1x396x4xf32, #tpu.memory_space<vmem>>, vector<1x328x4xf32>
    %22 = vector.shape_cast %21 : vector<1x328x4xf32> to vector<328x4xf32>
    %c0_23 = arith.constant 0 : index
    %c28 = arith.constant 28 : index
    %23 = vector.load %arg10[%c0_23, %c28] : memref<328x36xf32, #tpu.memory_space<vmem>>, vector<328x4xf32>
    tpu.vector_store %arg10[%c0_23, %c28], %22 {strides = array<i32>} : memref<328x36xf32, #tpu.memory_space<vmem>>, vector<328x4xf32>,
    %c0_24 = arith.constant 0 : index
    %c55 = arith.constant 55 : index
    %c0_25 = arith.constant 0 : index
    %24 = vector.load %arg1[%c0_24, %c55, %c0_25] : memref<1x396x4xf32, #tpu.memory_space<vmem>>, vector<1x328x4xf32>
    %25 = vector.shape_cast %24 : vector<1x328x4xf32> to vector<328x4xf32>
    %c0_26 = arith.constant 0 : index
    %c32 = arith.constant 32 : index
    %26 = vector.load %arg10[%c0_26, %c32] : memref<328x36xf32, #tpu.memory_space<vmem>>, vector<328x4xf32>
    tpu.vector_store %arg10[%c0_26, %c32], %25 {strides = array<i32>} : memref<328x36xf32, #tpu.memory_space<vmem>>, vector<328x4xf32>,
    %c0_27 = arith.constant 0 : index
    %c0_28 = arith.constant 0 : index
    %27 = vector.load %arg10[%c0_27, %c0_28] : memref<328x36xf32, #tpu.memory_space<vmem>>, vector<328x36xf32>
    %c0_29 = arith.constant 0 : index
    %c0_30 = arith.constant 0 : index
    %28 = vector.load %arg2[%c0_29, %c0_30] : memref<36x8xf32, #tpu.memory_space<vmem>>, vector<36x8xf32>
    %cst = arith.constant dense<0.000000e+00> : vector<328x8xf32>
    %29 = tpu.matmul %27, %28, %cst {dimension_numbers = #tpu.dot_dimension_numbers<[1], [0], [0], [1], [0, 0, 1, 1], [], []>} : vector<328x36xf32>, vector<36x8xf32>, vector<328x8xf32> -> vector<328x8xf32>
    %c0_31 = arith.constant 0 : index
    %c0_32 = arith.constant 0 : index
    %30 = vector.load %arg3[%c0_31, %c0_32] : memref<1x8xf32, #tpu.memory_space<vmem>>, vector<1x8xf32>
    %31 = vector.broadcast %30 : vector<1x8xf32> to vector<328x8xf32>
    %32 = arith.addf %29, %31 : vector<328x8xf32>
    %cst_33 = arith.constant 0.000000e+00 : f32
    %33 = vector.broadcast %cst_33 : f32 to vector<328x8xf32>
    %34 = arith.maximumf %32, %33 : vector<328x8xf32>
    %35 = tpu.iota {dimensions = array<i32: 0>} : vector<328x1xi32>
    %36 = arith.sitofp %35 : vector<328x1xi32> to vector<328x1xf32>
    %cst_34 = arith.constant 5.000000e-01 : f32
    %37 = vector.broadcast %cst_34 : f32 to vector<328x1xf32>
    %38 = arith.addf %36, %37 : vector<328x1xf32>
    %cst_35 = arith.constant 0.055555556 : f32
    %39 = vector.broadcast %cst_35 : f32 to vector<328x1xf32>
    %40 = arith.mulf %38, %39 : vector<328x1xf32>
    %41 = math.floor %40 : vector<328x1xf32>
    %cst_36 = arith.constant 1.800000e+01 : f32
    %42 = vector.broadcast %cst_36 : f32 to vector<328x1xf32>
    %43 = arith.mulf %41, %42 : vector<328x1xf32>
    %44 = arith.subf %36, %43 : vector<328x1xf32>
    %cst_37 = arith.constant 3.240000e+02 : f32
    %45 = vector.broadcast %cst_37 : f32 to vector<328x1xf32>
    %46 = arith.cmpf olt, %36, %45 : vector<328x1xf32>
    %cst_38 = arith.constant 1.000000e+00 : f32
    %47 = vector.broadcast %cst_38 : f32 to vector<328x1xf32>
    %48 = arith.cmpf oge, %41, %47 : vector<328x1xf32>
    %49 = arith.andi %46, %48 : vector<328x1xi1>
    %cst_39 = arith.constant 1.600000e+01 : f32
    %50 = vector.broadcast %cst_39 : f32 to vector<328x1xf32>
    %51 = arith.cmpf ole, %41, %50 : vector<328x1xf32>
    %52 = arith.andi %49, %51 : vector<328x1xi1>
    %cst_40 = arith.constant 1.000000e+00 : f32
    %53 = vector.broadcast %cst_40 : f32 to vector<328x1xf32>
    %54 = arith.cmpf oge, %44, %53 : vector<328x1xf32>
    %55 = arith.andi %52, %54 : vector<328x1xi1>
    %cst_41 = arith.constant 1.600000e+01 : f32
    %56 = vector.broadcast %cst_41 : f32 to vector<328x1xf32>
    %57 = arith.cmpf ole, %44, %56 : vector<328x1xf32>
    %58 = arith.andi %55, %57 : vector<328x1xi1>
    %cst_42 = arith.constant 0.000000e+00 : f32
    %59 = vector.shape_cast %58 : vector<328x1xi1> to vector<328x1xi1>
    %60 = vector.broadcast %59 : vector<328x1xi1> to vector<328x8xi1>
    %61 = vector.broadcast %cst_42 : f32 to vector<328x8xf32>
    %62 = arith.select %60, %34, %61 : vector<328x8xi1>, vector<328x8xf32>
    %c0_43 = arith.constant 0 : index
    %c0_44 = arith.constant 0 : index
    %63 = vector.load %arg9[%c0_43, %c0_44] : memref<328x8xf32, #tpu.memory_space<vmem>>, vector<328x8xf32>
    tpu.vector_store %arg9[%c0_43, %c0_44], %62 {strides = array<i32>} : memref<328x8xf32, #tpu.memory_space<vmem>>, vector<328x8xf32>,
    %c0_45 = arith.constant 0 : index
    %c0_46 = arith.constant 0 : index
    %64 = tpu.strided_load %arg9[%c0_45, %c0_46] {strides = array<i32: 2, 1>} : memref<328x8xf32, #tpu.memory_space<vmem>>, vector<8x8xf32>
    %c0_47 = arith.constant 0 : index
    %c0_48 = arith.constant 0 : index
    %65 = vector.load %arg11[%c0_47, %c0_48] : memref<64x72xf32, #tpu.memory_space<vmem>>, vector<8x8xf32>
    tpu.vector_store %arg11[%c0_47, %c0_48], %64 {strides = array<i32>} : memref<64x72xf32, #tpu.memory_space<vmem>>, vector<8x8xf32>,
    %c1 = arith.constant 1 : index
    %c0_49 = arith.constant 0 : index
    %66 = tpu.strided_load %arg9[%c1, %c0_49] {strides = array<i32: 2, 1>} : memref<328x8xf32, #tpu.memory_space<vmem>>, vector<8x8xf32>
    %c0_50 = arith.constant 0 : index
    %c8_51 = arith.constant 8 : index
    %67 = vector.load %arg11[%c0_50, %c8_51] : memref<64x72xf32, #tpu.memory_space<vmem>>, vector<8x8xf32>
    tpu.vector_store %arg11[%c0_50, %c8_51], %66 {strides = array<i32>} : memref<64x72xf32, #tpu.memory_space<vmem>>, vector<8x8xf32>,
    %c2 = arith.constant 2 : index
    %c0_52 = arith.constant 0 : index
    %68 = tpu.strided_load %arg9[%c2, %c0_52] {strides = array<i32: 2, 1>} : memref<328x8xf32, #tpu.memory_space<vmem>>, vector<8x8xf32>
    %c0_53 = arith.constant 0 : index
    %c16_54 = arith.constant 16 : index
    %69 = vector.load %arg11[%c0_53, %c16_54] : memref<64x72xf32, #tpu.memory_space<vmem>>, vector<8x8xf32>
    tpu.vector_store %arg11[%c0_53, %c16_54], %68 {strides = array<i32>} : memref<64x72xf32, #tpu.memory_space<vmem>>, vector<8x8xf32>,
    %c18_55 = arith.constant 18 : index
    %c0_56 = arith.constant 0 : index
    %70 = tpu.strided_load %arg9[%c18_55, %c0_56] {strides = array<i32: 2, 1>} : memref<328x8xf32, #tpu.memory_space<vmem>>, vector<8x8xf32>
    %c0_57 = arith.constant 0 : index
    %c24_58 = arith.constant 24 : index
    %71 = vector.load %arg11[%c0_57, %c24_58] : memref<64x72xf32, #tpu.memory_space<vmem>>, vector<8x8xf32>
    tpu.vector_store %arg11[%c0_57, %c24_58], %70 {strides = array<i32>} : memref<64x72xf32, #tpu.memory_space<vmem>>, vector<8x8xf32>,
    %c19_59 = arith.constant 19 : index
    %c0_60 = arith.constant 0 : index
    %72 = tpu.strided_load %arg9[%c19_59, %c0_60] {strides = array<i32: 2, 1>} : memref<328x8xf32, #tpu.memory_space<vmem>>, vector<8x8xf32>
    %c0_61 = arith.constant 0 : index
    %c32_62 = arith.constant 32 : index
    %73 = vector.load %arg11[%c0_61, %c32_62] : memref<64x72xf32, #tpu.memory_space<vmem>>, vector<8x8xf32>
    tpu.vector_store %arg11[%c0_61, %c32_62], %72 {strides = array<i32>} : memref<64x72xf32, #tpu.memory_space<vmem>>, vector<8x8xf32>,
    %c20_63 = arith.constant 20 : index
    %c0_64 = arith.constant 0 : index
    %74 = tpu.strided_load %arg9[%c20_63, %c0_64] {strides = array<i32: 2, 1>} : memref<328x8xf32, #tpu.memory_space<vmem>>, vector<8x8xf32>
    %c0_65 = arith.constant 0 : index
    %c40 = arith.constant 40 : index
    %75 = vector.load %arg11[%c0_65, %c40] : memref<64x72xf32, #tpu.memory_space<vmem>>, vector<8x8xf32>
    tpu.vector_store %arg11[%c0_65, %c40], %74 {strides = array<i32>} : memref<64x72xf32, #tpu.memory_space<vmem>>, vector<8x8xf32>,
    %c36_66 = arith.constant 36 : index
    %c0_67 = arith.constant 0 : index
    %76 = tpu.strided_load %arg9[%c36_66, %c0_67] {strides = array<i32: 2, 1>} : memref<328x8xf32, #tpu.memory_space<vmem>>, vector<8x8xf32>
    %c0_68 = arith.constant 0 : index
    %c48 = arith.constant 48 : index
    %77 = vector.load %arg11[%c0_68, %c48] : memref<64x72xf32, #tpu.memory_space<vmem>>, vector<8x8xf32>
    tpu.vector_store %arg11[%c0_68, %c48], %76 {strides = array<i32>} : memref<64x72xf32, #tpu.memory_space<vmem>>, vector<8x8xf32>,
    %c37_69 = arith.constant 37 : index
    %c0_70 = arith.constant 0 : index
    %78 = tpu.strided_load %arg9[%c37_69, %c0_70] {strides = array<i32: 2, 1>} : memref<328x8xf32, #tpu.memory_space<vmem>>, vector<8x8xf32>
    %c0_71 = arith.constant 0 : index
    %c56 = arith.constant 56 : index
    %79 = vector.load %arg11[%c0_71, %c56] : memref<64x72xf32, #tpu.memory_space<vmem>>, vector<8x8xf32>
    tpu.vector_store %arg11[%c0_71, %c56], %78 {strides = array<i32>} : memref<64x72xf32, #tpu.memory_space<vmem>>, vector<8x8xf32>,
    %c38 = arith.constant 38 : index
    %c0_72 = arith.constant 0 : index
    %80 = tpu.strided_load %arg9[%c38, %c0_72] {strides = array<i32: 2, 1>} : memref<328x8xf32, #tpu.memory_space<vmem>>, vector<8x8xf32>
    %c0_73 = arith.constant 0 : index
    %c64 = arith.constant 64 : index
    %81 = vector.load %arg11[%c0_73, %c64] : memref<64x72xf32, #tpu.memory_space<vmem>>, vector<8x8xf32>
    tpu.vector_store %arg11[%c0_73, %c64], %80 {strides = array<i32>} : memref<64x72xf32, #tpu.memory_space<vmem>>, vector<8x8xf32>,
    %cst_74 = arith.constant 0.000000e+00 : f32
    %82 = vector.broadcast %cst_74 : f32 to vector<8x4xf32>
    %c0_75 = arith.constant 0 : index
    %c55_76 = arith.constant 55 : index
    %c0_77 = arith.constant 0 : index
    %83 = tpu.strided_load %arg1[%c0_75, %c55_76, %c0_77] {strides = array<i32: 1, 2, 1>} : memref<1x396x4xf32, #tpu.memory_space<vmem>>, vector<1x8x4xf32>
    %84 = vector.shape_cast %83 : vector<1x8x4xf32> to vector<8x4xf32>
    %85 = arith.addf %82, %84 : vector<8x4xf32>
    %c0_78 = arith.constant 0 : index
    %c56_79 = arith.constant 56 : index
    %c0_80 = arith.constant 0 : index
    %86 = tpu.strided_load %arg1[%c0_78, %c56_79, %c0_80] {strides = array<i32: 1, 2, 1>} : memref<1x396x4xf32, #tpu.memory_space<vmem>>, vector<1x8x4xf32>
    %87 = vector.shape_cast %86 : vector<1x8x4xf32> to vector<8x4xf32>
    %88 = arith.addf %85, %87 : vector<8x4xf32>
    %c0_81 = arith.constant 0 : index
    %c73 = arith.constant 73 : index
    %c0_82 = arith.constant 0 : index
    %89 = tpu.strided_load %arg1[%c0_81, %c73, %c0_82] {strides = array<i32: 1, 2, 1>} : memref<1x396x4xf32, #tpu.memory_space<vmem>>, vector<1x8x4xf32>
    %90 = vector.shape_cast %89 : vector<1x8x4xf32> to vector<8x4xf32>
    %91 = arith.addf %88, %90 : vector<8x4xf32>
    %c0_83 = arith.constant 0 : index
    %c74 = arith.constant 74 : index
    %c0_84 = arith.constant 0 : index
    %92 = tpu.strided_load %arg1[%c0_83, %c74, %c0_84] {strides = array<i32: 1, 2, 1>} : memref<1x396x4xf32, #tpu.memory_space<vmem>>, vector<1x8x4xf32>
    %93 = vector.shape_cast %92 : vector<1x8x4xf32> to vector<8x4xf32>
    %94 = arith.addf %91, %93 : vector<8x4xf32>
    %cst_85 = arith.constant 2.500000e-01 : f32
    %95 = vector.broadcast %cst_85 : f32 to vector<8x4xf32>
    %96 = arith.mulf %94, %95 : vector<8x4xf32>
    %c0_86 = arith.constant 0 : index
    %c0_87 = arith.constant 0 : index
    %97 = vector.load %arg12[%c0_86, %c0_87] : memref<64x4xf32, #tpu.memory_space<vmem>>, vector<8x4xf32>
    tpu.vector_store %arg12[%c0_86, %c0_87], %96 {strides = array<i32>} : memref<64x4xf32, #tpu.memory_space<vmem>>, vector<8x4xf32>,
    %c36_88 = arith.constant 36 : index
    %c0_89 = arith.constant 0 : index
    %98 = tpu.strided_load %arg9[%c36_88, %c0_89] {strides = array<i32: 2, 1>} : memref<328x8xf32, #tpu.memory_space<vmem>>, vector<8x8xf32>
    %c8_90 = arith.constant 8 : index
    %c0_91 = arith.constant 0 : index
    %99 = vector.load %arg11[%c8_90, %c0_91] : memref<64x72xf32, #tpu.memory_space<vmem>>, vector<8x8xf32>
    tpu.vector_store %arg11[%c8_90, %c0_91], %98 {strides = array<i32>} : memref<64x72xf32, #tpu.memory_space<vmem>>, vector<8x8xf32>,
    %c37_92 = arith.constant 37 : index
    %c0_93 = arith.constant 0 : index
    %100 = tpu.strided_load %arg9[%c37_92, %c0_93] {strides = array<i32: 2, 1>} : memref<328x8xf32, #tpu.memory_space<vmem>>, vector<8x8xf32>
    %c8_94 = arith.constant 8 : index
    %c8_95 = arith.constant 8 : index
    %101 = vector.load %arg11[%c8_94, %c8_95] : memref<64x72xf32, #tpu.memory_space<vmem>>, vector<8x8xf32>
    tpu.vector_store %arg11[%c8_94, %c8_95], %100 {strides = array<i32>} : memref<64x72xf32, #tpu.memory_space<vmem>>, vector<8x8xf32>,
    %c38_96 = arith.constant 38 : index
    %c0_97 = arith.constant 0 : index
    %102 = tpu.strided_load %arg9[%c38_96, %c0_97] {strides = array<i32: 2, 1>} : memref<328x8xf32, #tpu.memory_space<vmem>>, vector<8x8xf32>
    %c8_98 = arith.constant 8 : index
    %c16_99 = arith.constant 16 : index
    %103 = vector.load %arg11[%c8_98, %c16_99] : memref<64x72xf32, #tpu.memory_space<vmem>>, vector<8x8xf32>
    tpu.vector_store %arg11[%c8_98, %c16_99], %102 {strides = array<i32>} : memref<64x72xf32, #tpu.memory_space<vmem>>, vector<8x8xf32>,
    %c54_100 = arith.constant 54 : index
    %c0_101 = arith.constant 0 : index
    %104 = tpu.strided_load %arg9[%c54_100, %c0_101] {strides = array<i32: 2, 1>} : memref<328x8xf32, #tpu.memory_space<vmem>>, vector<8x8xf32>
    %c8_102 = arith.constant 8 : index
    %c24_103 = arith.constant 24 : index
    %105 = vector.load %arg11[%c8_102, %c24_103] : memref<64x72xf32, #tpu.memory_space<vmem>>, vector<8x8xf32>
    tpu.vector_store %arg11[%c8_102, %c24_103], %104 {strides = array<i32>} : memref<64x72xf32, #tpu.memory_space<vmem>>, vector<8x8xf32>,
    %c55_104 = arith.constant 55 : index
    %c0_105 = arith.constant 0 : index
    %106 = tpu.strided_load %arg9[%c55_104, %c0_105] {strides = array<i32: 2, 1>} : memref<328x8xf32, #tpu.memory_space<vmem>>, vector<8x8xf32>
    %c8_106 = arith.constant 8 : index
    %c32_107 = arith.constant 32 : index
    %107 = vector.load %arg11[%c8_106, %c32_107] : memref<64x72xf32, #tpu.memory_space<vmem>>, vector<8x8xf32>
    tpu.vector_store %arg11[%c8_106, %c32_107], %106 {strides = array<i32>} : memref<64x72xf32, #tpu.memory_space<vmem>>, vector<8x8xf32>,
    %c56_108 = arith.constant 56 : index
    %c0_109 = arith.constant 0 : index
    %108 = tpu.strided_load %arg9[%c56_108, %c0_109] {strides = array<i32: 2, 1>} : memref<328x8xf32, #tpu.memory_space<vmem>>, vector<8x8xf32>
    %c8_110 = arith.constant 8 : index
    %c40_111 = arith.constant 40 : index
    %109 = vector.load %arg11[%c8_110, %c40_111] : memref<64x72xf32, #tpu.memory_space<vmem>>, vector<8x8xf32>
    tpu.vector_store %arg11[%c8_110, %c40_111], %108 {strides = array<i32>} : memref<64x72xf32, #tpu.memory_space<vmem>>, vector<8x8xf32>,
    %c72 = arith.constant 72 : index
    %c0_112 = arith.constant 0 : index
    %110 = tpu.strided_load %arg9[%c72, %c0_112] {strides = array<i32: 2, 1>} : memref<328x8xf32, #tpu.memory_space<vmem>>, vector<8x8xf32>
    %c8_113 = arith.constant 8 : index
    %c48_114 = arith.constant 48 : index
    %111 = vector.load %arg11[%c8_113, %c48_114] : memref<64x72xf32, #tpu.memory_space<vmem>>, vector<8x8xf32>
    tpu.vector_store %arg11[%c8_113, %c48_114], %110 {strides = array<i32>} : memref<64x72xf32, #tpu.memory_space<vmem>>, vector<8x8xf32>,
    %c73_115 = arith.constant 73 : index
    %c0_116 = arith.constant 0 : index
    %112 = tpu.strided_load %arg9[%c73_115, %c0_116] {strides = array<i32: 2, 1>} : memref<328x8xf32, #tpu.memory_space<vmem>>, vector<8x8xf32>
    %c8_117 = arith.constant 8 : index
    %c56_118 = arith.constant 56 : index
    %113 = vector.load %arg11[%c8_117, %c56_118] : memref<64x72xf32, #tpu.memory_space<vmem>>, vector<8x8xf32>
    tpu.vector_store %arg11[%c8_117, %c56_118], %112 {strides = array<i32>} : memref<64x72xf32, #tpu.memory_space<vmem>>, vector<8x8xf32>,
    %c74_119 = arith.constant 74 : index
    %c0_120 = arith.constant 0 : index
    %114 = tpu.strided_load %arg9[%c74_119, %c0_120] {strides = array<i32: 2, 1>} : memref<328x8xf32, #tpu.memory_space<vmem>>, vector<8x8xf32>
    %c8_121 = arith.constant 8 : index
    %c64_122 = arith.constant 64 : index
    %115 = vector.load %arg11[%c8_121, %c64_122] : memref<64x72xf32, #tpu.memory_space<vmem>>, vector<8x8xf32>
    tpu.vector_store %arg11[%c8_121, %c64_122], %114 {strides = array<i32>} : memref<64x72xf32, #tpu.memory_space<vmem>>, vector<8x8xf32>,
    %cst_123 = arith.constant 0.000000e+00 : f32
    %116 = vector.broadcast %cst_123 : f32 to vector<8x4xf32>
    %c0_124 = arith.constant 0 : index
    %c91 = arith.constant 91 : index
    %c0_125 = arith.constant 0 : index
    %117 = tpu.strided_load %arg1[%c0_124, %c91, %c0_125] {strides = array<i32: 1, 2, 1>} : memref<1x396x4xf32, #tpu.memory_space<vmem>>, vector<1x8x4xf32>
    %118 = vector.shape_cast %117 : vector<1x8x4xf32> to vector<8x4xf32>
    %119 = arith.addf %116, %118 : vector<8x4xf32>
    %c0_126 = arith.constant 0 : index
    %c92 = arith.constant 92 : index
    %c0_127 = arith.constant 0 : index
    %120 = tpu.strided_load %arg1[%c0_126, %c92, %c0_127] {strides = array<i32: 1, 2, 1>} : memref<1x396x4xf32, #tpu.memory_space<vmem>>, vector<1x8x4xf32>
    %121 = vector.shape_cast %120 : vector<1x8x4xf32> to vector<8x4xf32>
    %122 = arith.addf %119, %121 : vector<8x4xf32>
    %c0_128 = arith.constant 0 : index
    %c109 = arith.constant 109 : index
    %c0_129 = arith.constant 0 : index
    %123 = tpu.strided_load %arg1[%c0_128, %c109, %c0_129] {strides = array<i32: 1, 2, 1>} : memref<1x396x4xf32, #tpu.memory_space<vmem>>, vector<1x8x4xf32>
    %124 = vector.shape_cast %123 : vector<1x8x4xf32> to vector<8x4xf32>
    %125 = arith.addf %122, %124 : vector<8x4xf32>
    %c0_130 = arith.constant 0 : index
    %c110 = arith.constant 110 : index
    %c0_131 = arith.constant 0 : index
    %126 = tpu.strided_load %arg1[%c0_130, %c110, %c0_131] {strides = array<i32: 1, 2, 1>} : memref<1x396x4xf32, #tpu.memory_space<vmem>>, vector<1x8x4xf32>
    %127 = vector.shape_cast %126 : vector<1x8x4xf32> to vector<8x4xf32>
    %128 = arith.addf %125, %127 : vector<8x4xf32>
    %cst_132 = arith.constant 2.500000e-01 : f32
    %129 = vector.broadcast %cst_132 : f32 to vector<8x4xf32>
    %130 = arith.mulf %128, %129 : vector<8x4xf32>
    %c8_133 = arith.constant 8 : index
    %c0_134 = arith.constant 0 : index
    %131 = vector.load %arg12[%c8_133, %c0_134] : memref<64x4xf32, #tpu.memory_space<vmem>>, vector<8x4xf32>
    tpu.vector_store %arg12[%c8_133, %c0_134], %130 {strides = array<i32>} : memref<64x4xf32, #tpu.memory_space<vmem>>, vector<8x4xf32>,
    %c72_135 = arith.constant 72 : index
    %c0_136 = arith.constant 0 : index
    %132 = tpu.strided_load %arg9[%c72_135, %c0_136] {strides = array<i32: 2, 1>} : memref<328x8xf32, #tpu.memory_space<vmem>>, vector<8x8xf32>
    %c16_137 = arith.constant 16 : index
    %c0_138 = arith.constant 0 : index
    %133 = vector.load %arg11[%c16_137, %c0_138] : memref<64x72xf32, #tpu.memory_space<vmem>>, vector<8x8xf32>
    tpu.vector_store %arg11[%c16_137, %c0_138], %132 {strides = array<i32>} : memref<64x72xf32, #tpu.memory_space<vmem>>, vector<8x8xf32>,
    %c73_139 = arith.constant 73 : index
    %c0_140 = arith.constant 0 : index
    %134 = tpu.strided_load %arg9[%c73_139, %c0_140] {strides = array<i32: 2, 1>} : memref<328x8xf32, #tpu.memory_space<vmem>>, vector<8x8xf32>
    %c16_141 = arith.constant 16 : index
    %c8_142 = arith.constant 8 : index
    %135 = vector.load %arg11[%c16_141, %c8_142] : memref<64x72xf32, #tpu.memory_space<vmem>>, vector<8x8xf32>
    tpu.vector_store %arg11[%c16_141, %c8_142], %134 {strides = array<i32>} : memref<64x72xf32, #tpu.memory_space<vmem>>, vector<8x8xf32>,
    %c74_143 = arith.constant 74 : index
    %c0_144 = arith.constant 0 : index
    %136 = tpu.strided_load %arg9[%c74_143, %c0_144] {strides = array<i32: 2, 1>} : memref<328x8xf32, #tpu.memory_space<vmem>>, vector<8x8xf32>
    %c16_145 = arith.constant 16 : index
    %c16_146 = arith.constant 16 : index
    %137 = vector.load %arg11[%c16_145, %c16_146] : memref<64x72xf32, #tpu.memory_space<vmem>>, vector<8x8xf32>
    tpu.vector_store %arg11[%c16_145, %c16_146], %136 {strides = array<i32>} : memref<64x72xf32, #tpu.memory_space<vmem>>, vector<8x8xf32>,
    %c90 = arith.constant 90 : index
    %c0_147 = arith.constant 0 : index
    %138 = tpu.strided_load %arg9[%c90, %c0_147] {strides = array<i32: 2, 1>} : memref<328x8xf32, #tpu.memory_space<vmem>>, vector<8x8xf32>
    %c16_148 = arith.constant 16 : index
    %c24_149 = arith.constant 24 : index
    %139 = vector.load %arg11[%c16_148, %c24_149] : memref<64x72xf32, #tpu.memory_space<vmem>>, vector<8x8xf32>
    tpu.vector_store %arg11[%c16_148, %c24_149], %138 {strides = array<i32>} : memref<64x72xf32, #tpu.memory_space<vmem>>, vector<8x8xf32>,
    %c91_150 = arith.constant 91 : index
    %c0_151 = arith.constant 0 : index
    %140 = tpu.strided_load %arg9[%c91_150, %c0_151] {strides = array<i32: 2, 1>} : memref<328x8xf32, #tpu.memory_space<vmem>>, vector<8x8xf32>
    %c16_152 = arith.constant 16 : index
    %c32_153 = arith.constant 32 : index
    %141 = vector.load %arg11[%c16_152, %c32_153] : memref<64x72xf32, #tpu.memory_space<vmem>>, vector<8x8xf32>
    tpu.vector_store %arg11[%c16_152, %c32_153], %140 {strides = array<i32>} : memref<64x72xf32, #tpu.memory_space<vmem>>, vector<8x8xf32>,
    %c92_154 = arith.constant 92 : index
    %c0_155 = arith.constant 0 : index
    %142 = tpu.strided_load %arg9[%c92_154, %c0_155] {strides = array<i32: 2, 1>} : memref<328x8xf32, #tpu.memory_space<vmem>>, vector<8x8xf32>
    %c16_156 = arith.constant 16 : index
    %c40_157 = arith.constant 40 : index
    %143 = vector.load %arg11[%c16_156, %c40_157] : memref<64x72xf32, #tpu.memory_space<vmem>>, vector<8x8xf32>
    tpu.vector_store %arg11[%c16_156, %c40_157], %142 {strides = array<i32>} : memref<64x72xf32, #tpu.memory_space<vmem>>, vector<8x8xf32>,
    %c108 = arith.constant 108 : index
    %c0_158 = arith.constant 0 : index
    %144 = tpu.strided_load %arg9[%c108, %c0_158] {strides = array<i32: 2, 1>} : memref<328x8xf32, #tpu.memory_space<vmem>>, vector<8x8xf32>
    %c16_159 = arith.constant 16 : index
    %c48_160 = arith.constant 48 : index
    %145 = vector.load %arg11[%c16_159, %c48_160] : memref<64x72xf32, #tpu.memory_space<vmem>>, vector<8x8xf32>
    tpu.vector_store %arg11[%c16_159, %c48_160], %144 {strides = array<i32>} : memref<64x72xf32, #tpu.memory_space<vmem>>, vector<8x8xf32>,
    %c109_161 = arith.constant 109 : index
    %c0_162 = arith.constant 0 : index
    %146 = tpu.strided_load %arg9[%c109_161, %c0_162] {strides = array<i32: 2, 1>} : memref<328x8xf32, #tpu.memory_space<vmem>>, vector<8x8xf32>
    %c16_163 = arith.constant 16 : index
    %c56_164 = arith.constant 56 : index
    %147 = vector.load %arg11[%c16_163, %c56_164] : memref<64x72xf32, #tpu.memory_space<vmem>>, vector<8x8xf32>
    tpu.vector_store %arg11[%c16_163, %c56_164], %146 {strides = array<i32>} : memref<64x72xf32, #tpu.memory_space<vmem>>, vector<8x8xf32>,
    %c110_165 = arith.constant 110 : index
    %c0_166 = arith.constant 0 : index
    %148 = tpu.strided_load %arg9[%c110_165, %c0_166] {strides = array<i32: 2, 1>} : memref<328x8xf32, #tpu.memory_space<vmem>>, vector<8x8xf32>
    %c16_167 = arith.constant 16 : index
    %c64_168 = arith.constant 64 : index
    %149 = vector.load %arg11[%c16_167, %c64_168] : memref<64x72xf32, #tpu.memory_space<vmem>>, vector<8x8xf32>
    tpu.vector_store %arg11[%c16_167, %c64_168], %148 {strides = array<i32>} : memref<64x72xf32, #tpu.memory_space<vmem>>, vector<8x8xf32>,
    %cst_169 = arith.constant 0.000000e+00 : f32
    %150 = vector.broadcast %cst_169 : f32 to vector<8x4xf32>
    %c0_170 = arith.constant 0 : index
    %c127 = arith.constant 127 : index
    %c0_171 = arith.constant 0 : index
    %151 = tpu.strided_load %arg1[%c0_170, %c127, %c0_171] {strides = array<i32: 1, 2, 1>} : memref<1x396x4xf32, #tpu.memory_space<vmem>>, vector<1x8x4xf32>
    %152 = vector.shape_cast %151 : vector<1x8x4xf32> to vector<8x4xf32>
    %153 = arith.addf %150, %152 : vector<8x4xf32>
    %c0_172 = arith.constant 0 : index
    %c128 = arith.constant 128 : index
    %c0_173 = arith.constant 0 : index
    %154 = tpu.strided_load %arg1[%c0_172, %c128, %c0_173] {strides = array<i32: 1, 2, 1>} : memref<1x396x4xf32, #tpu.memory_space<vmem>>, vector<1x8x4xf32>
    %155 = vector.shape_cast %154 : vector<1x8x4xf32> to vector<8x4xf32>
    %156 = arith.addf %153, %155 : vector<8x4xf32>
    %c0_174 = arith.constant 0 : index
    %c145 = arith.constant 145 : index
    %c0_175 = arith.constant 0 : index
    %157 = tpu.strided_load %arg1[%c0_174, %c145, %c0_175] {strides = array<i32: 1, 2, 1>} : memref<1x396x4xf32, #tpu.memory_space<vmem>>, vector<1x8x4xf32>
    %158 = vector.shape_cast %157 : vector<1x8x4xf32> to vector<8x4xf32>
    %159 = arith.addf %156, %158 : vector<8x4xf32>
    %c0_176 = arith.constant 0 : index
    %c146 = arith.constant 146 : index
    %c0_177 = arith.constant 0 : index
    %160 = tpu.strided_load %arg1[%c0_176, %c146, %c0_177] {strides = array<i32: 1, 2, 1>} : memref<1x396x4xf32, #tpu.memory_space<vmem>>, vector<1x8x4xf32>
    %161 = vector.shape_cast %160 : vector<1x8x4xf32> to vector<8x4xf32>
    %162 = arith.addf %159, %161 : vector<8x4xf32>
    %cst_178 = arith.constant 2.500000e-01 : f32
    %163 = vector.broadcast %cst_178 : f32 to vector<8x4xf32>
    %164 = arith.mulf %162, %163 : vector<8x4xf32>
    %c16_179 = arith.constant 16 : index
    %c0_180 = arith.constant 0 : index
    %165 = vector.load %arg12[%c16_179, %c0_180] : memref<64x4xf32, #tpu.memory_space<vmem>>, vector<8x4xf32>
    tpu.vector_store %arg12[%c16_179, %c0_180], %164 {strides = array<i32>} : memref<64x4xf32, #tpu.memory_space<vmem>>, vector<8x4xf32>,
    %c108_181 = arith.constant 108 : index
    %c0_182 = arith.constant 0 : index
    %166 = tpu.strided_load %arg9[%c108_181, %c0_182] {strides = array<i32: 2, 1>} : memref<328x8xf32, #tpu.memory_space<vmem>>, vector<8x8xf32>
    %c24_183 = arith.constant 24 : index
    %c0_184 = arith.constant 0 : index
    %167 = vector.load %arg11[%c24_183, %c0_184] : memref<64x72xf32, #tpu.memory_space<vmem>>, vector<8x8xf32>
    tpu.vector_store %arg11[%c24_183, %c0_184], %166 {strides = array<i32>} : memref<64x72xf32, #tpu.memory_space<vmem>>, vector<8x8xf32>,
    %c109_185 = arith.constant 109 : index
    %c0_186 = arith.constant 0 : index
    %168 = tpu.strided_load %arg9[%c109_185, %c0_186] {strides = array<i32: 2, 1>} : memref<328x8xf32, #tpu.memory_space<vmem>>, vector<8x8xf32>
    %c24_187 = arith.constant 24 : index
    %c8_188 = arith.constant 8 : index
    %169 = vector.load %arg11[%c24_187, %c8_188] : memref<64x72xf32, #tpu.memory_space<vmem>>, vector<8x8xf32>
    tpu.vector_store %arg11[%c24_187, %c8_188], %168 {strides = array<i32>} : memref<64x72xf32, #tpu.memory_space<vmem>>, vector<8x8xf32>,
    %c110_189 = arith.constant 110 : index
    %c0_190 = arith.constant 0 : index
    %170 = tpu.strided_load %arg9[%c110_189, %c0_190] {strides = array<i32: 2, 1>} : memref<328x8xf32, #tpu.memory_space<vmem>>, vector<8x8xf32>
    %c24_191 = arith.constant 24 : index
    %c16_192 = arith.constant 16 : index
    %171 = vector.load %arg11[%c24_191, %c16_192] : memref<64x72xf32, #tpu.memory_space<vmem>>, vector<8x8xf32>
    tpu.vector_store %arg11[%c24_191, %c16_192], %170 {strides = array<i32>} : memref<64x72xf32, #tpu.memory_space<vmem>>, vector<8x8xf32>,
    %c126 = arith.constant 126 : index
    %c0_193 = arith.constant 0 : index
    %172 = tpu.strided_load %arg9[%c126, %c0_193] {strides = array<i32: 2, 1>} : memref<328x8xf32, #tpu.memory_space<vmem>>, vector<8x8xf32>
    %c24_194 = arith.constant 24 : index
    %c24_195 = arith.constant 24 : index
    %173 = vector.load %arg11[%c24_194, %c24_195] : memref<64x72xf32, #tpu.memory_space<vmem>>, vector<8x8xf32>
    tpu.vector_store %arg11[%c24_194, %c24_195], %172 {strides = array<i32>} : memref<64x72xf32, #tpu.memory_space<vmem>>, vector<8x8xf32>,
    %c127_196 = arith.constant 127 : index
    %c0_197 = arith.constant 0 : index
    %174 = tpu.strided_load %arg9[%c127_196, %c0_197] {strides = array<i32: 2, 1>} : memref<328x8xf32, #tpu.memory_space<vmem>>, vector<8x8xf32>
    %c24_198 = arith.constant 24 : index
    %c32_199 = arith.constant 32 : index
    %175 = vector.load %arg11[%c24_198, %c32_199] : memref<64x72xf32, #tpu.memory_space<vmem>>, vector<8x8xf32>
    tpu.vector_store %arg11[%c24_198, %c32_199], %174 {strides = array<i32>} : memref<64x72xf32, #tpu.memory_space<vmem>>, vector<8x8xf32>,
    %c128_200 = arith.constant 128 : index
    %c0_201 = arith.constant 0 : index
    %176 = tpu.strided_load %arg9[%c128_200, %c0_201] {strides = array<i32: 2, 1>} : memref<328x8xf32, #tpu.memory_space<vmem>>, vector<8x8xf32>
    %c24_202 = arith.constant 24 : index
    %c40_203 = arith.constant 40 : index
    %177 = vector.load %arg11[%c24_202, %c40_203] : memref<64x72xf32, #tpu.memory_space<vmem>>, vector<8x8xf32>
    tpu.vector_store %arg11[%c24_202, %c40_203], %176 {strides = array<i32>} : memref<64x72xf32, #tpu.memory_space<vmem>>, vector<8x8xf32>,
    %c144 = arith.constant 144 : index
    %c0_204 = arith.constant 0 : index
    %178 = tpu.strided_load %arg9[%c144, %c0_204] {strides = array<i32: 2, 1>} : memref<328x8xf32, #tpu.memory_space<vmem>>, vector<8x8xf32>
    %c24_205 = arith.constant 24 : index
    %c48_206 = arith.constant 48 : index
    %179 = vector.load %arg11[%c24_205, %c48_206] : memref<64x72xf32, #tpu.memory_space<vmem>>, vector<8x8xf32>
    tpu.vector_store %arg11[%c24_205, %c48_206], %178 {strides = array<i32>} : memref<64x72xf32, #tpu.memory_space<vmem>>, vector<8x8xf32>,
    %c145_207 = arith.constant 145 : index
    %c0_208 = arith.constant 0 : index
    %180 = tpu.strided_load %arg9[%c145_207, %c0_208] {strides = array<i32: 2, 1>} : memref<328x8xf32, #tpu.memory_space<vmem>>, vector<8x8xf32>
    %c24_209 = arith.constant 24 : index
    %c56_210 = arith.constant 56 : index
    %181 = vector.load %arg11[%c24_209, %c56_210] : memref<64x72xf32, #tpu.memory_space<vmem>>, vector<8x8xf32>
    tpu.vector_store %arg11[%c24_209, %c56_210], %180 {strides = array<i32>} : memref<64x72xf32, #tpu.memory_space<vmem>>, vector<8x8xf32>,
    %c146_211 = arith.constant 146 : index
    %c0_212 = arith.constant 0 : index
    %182 = tpu.strided_load %arg9[%c146_211, %c0_212] {strides = array<i32: 2, 1>} : memref<328x8xf32, #tpu.memory_space<vmem>>, vector<8x8xf32>
    %c24_213 = arith.constant 24 : index
    %c64_214 = arith.constant 64 : index
    %183 = vector.load %arg11[%c24_213, %c64_214] : memref<64x72xf32, #tpu.memory_space<vmem>>, vector<8x8xf32>
    tpu.vector_store %arg11[%c24_213, %c64_214], %182 {strides = array<i32>} : memref<64x72xf32, #tpu.memory_space<vmem>>, vector<8x8xf32>,
    %cst_215 = arith.constant 0.000000e+00 : f32
    %184 = vector.broadcast %cst_215 : f32 to vector<8x4xf32>
    %c0_216 = arith.constant 0 : index
    %c163 = arith.constant 163 : index
    %c0_217 = arith.constant 0 : index
    %185 = tpu.strided_load %arg1[%c0_216, %c163, %c0_217] {strides = array<i32: 1, 2, 1>} : memref<1x396x4xf32, #tpu.memory_space<vmem>>, vector<1x8x4xf32>
    %186 = vector.shape_cast %185 : vector<1x8x4xf32> to vector<8x4xf32>
    %187 = arith.addf %184, %186 : vector<8x4xf32>
    %c0_218 = arith.constant 0 : index
    %c164 = arith.constant 164 : index
    %c0_219 = arith.constant 0 : index
    %188 = tpu.strided_load %arg1[%c0_218, %c164, %c0_219] {strides = array<i32: 1, 2, 1>} : memref<1x396x4xf32, #tpu.memory_space<vmem>>, vector<1x8x4xf32>
    %189 = vector.shape_cast %188 : vector<1x8x4xf32> to vector<8x4xf32>
    %190 = arith.addf %187, %189 : vector<8x4xf32>
    %c0_220 = arith.constant 0 : index
    %c181 = arith.constant 181 : index
    %c0_221 = arith.constant 0 : index
    %191 = tpu.strided_load %arg1[%c0_220, %c181, %c0_221] {strides = array<i32: 1, 2, 1>} : memref<1x396x4xf32, #tpu.memory_space<vmem>>, vector<1x8x4xf32>
    %192 = vector.shape_cast %191 : vector<1x8x4xf32> to vector<8x4xf32>
    %193 = arith.addf %190, %192 : vector<8x4xf32>
    %c0_222 = arith.constant 0 : index
    %c182 = arith.constant 182 : index
    %c0_223 = arith.constant 0 : index
    %194 = tpu.strided_load %arg1[%c0_222, %c182, %c0_223] {strides = array<i32: 1, 2, 1>} : memref<1x396x4xf32, #tpu.memory_space<vmem>>, vector<1x8x4xf32>
    %195 = vector.shape_cast %194 : vector<1x8x4xf32> to vector<8x4xf32>
    %196 = arith.addf %193, %195 : vector<8x4xf32>
    %cst_224 = arith.constant 2.500000e-01 : f32
    %197 = vector.broadcast %cst_224 : f32 to vector<8x4xf32>
    %198 = arith.mulf %196, %197 : vector<8x4xf32>
    %c24_225 = arith.constant 24 : index
    %c0_226 = arith.constant 0 : index
    %199 = vector.load %arg12[%c24_225, %c0_226] : memref<64x4xf32, #tpu.memory_space<vmem>>, vector<8x4xf32>
    tpu.vector_store %arg12[%c24_225, %c0_226], %198 {strides = array<i32>} : memref<64x4xf32, #tpu.memory_space<vmem>>, vector<8x4xf32>,
    %c144_227 = arith.constant 144 : index
    %c0_228 = arith.constant 0 : index
    %200 = tpu.strided_load %arg9[%c144_227, %c0_228] {strides = array<i32: 2, 1>} : memref<328x8xf32, #tpu.memory_space<vmem>>, vector<8x8xf32>
    %c32_229 = arith.constant 32 : index
    %c0_230 = arith.constant 0 : index
    %201 = vector.load %arg11[%c32_229, %c0_230] : memref<64x72xf32, #tpu.memory_space<vmem>>, vector<8x8xf32>
    tpu.vector_store %arg11[%c32_229, %c0_230], %200 {strides = array<i32>} : memref<64x72xf32, #tpu.memory_space<vmem>>, vector<8x8xf32>,
    %c145_231 = arith.constant 145 : index
    %c0_232 = arith.constant 0 : index
    %202 = tpu.strided_load %arg9[%c145_231, %c0_232] {strides = array<i32: 2, 1>} : memref<328x8xf32, #tpu.memory_space<vmem>>, vector<8x8xf32>
    %c32_233 = arith.constant 32 : index
    %c8_234 = arith.constant 8 : index
    %203 = vector.load %arg11[%c32_233, %c8_234] : memref<64x72xf32, #tpu.memory_space<vmem>>, vector<8x8xf32>
    tpu.vector_store %arg11[%c32_233, %c8_234], %202 {strides = array<i32>} : memref<64x72xf32, #tpu.memory_space<vmem>>, vector<8x8xf32>,
    %c146_235 = arith.constant 146 : index
    %c0_236 = arith.constant 0 : index
    %204 = tpu.strided_load %arg9[%c146_235, %c0_236] {strides = array<i32: 2, 1>} : memref<328x8xf32, #tpu.memory_space<vmem>>, vector<8x8xf32>
    %c32_237 = arith.constant 32 : index
    %c16_238 = arith.constant 16 : index
    %205 = vector.load %arg11[%c32_237, %c16_238] : memref<64x72xf32, #tpu.memory_space<vmem>>, vector<8x8xf32>
    tpu.vector_store %arg11[%c32_237, %c16_238], %204 {strides = array<i32>} : memref<64x72xf32, #tpu.memory_space<vmem>>, vector<8x8xf32>,
    %c162 = arith.constant 162 : index
    %c0_239 = arith.constant 0 : index
    %206 = tpu.strided_load %arg9[%c162, %c0_239] {strides = array<i32: 2, 1>} : memref<328x8xf32, #tpu.memory_space<vmem>>, vector<8x8xf32>
    %c32_240 = arith.constant 32 : index
    %c24_241 = arith.constant 24 : index
    %207 = vector.load %arg11[%c32_240, %c24_241] : memref<64x72xf32, #tpu.memory_space<vmem>>, vector<8x8xf32>
    tpu.vector_store %arg11[%c32_240, %c24_241], %206 {strides = array<i32>} : memref<64x72xf32, #tpu.memory_space<vmem>>, vector<8x8xf32>,
    %c163_242 = arith.constant 163 : index
    %c0_243 = arith.constant 0 : index
    %208 = tpu.strided_load %arg9[%c163_242, %c0_243] {strides = array<i32: 2, 1>} : memref<328x8xf32, #tpu.memory_space<vmem>>, vector<8x8xf32>
    %c32_244 = arith.constant 32 : index
    %c32_245 = arith.constant 32 : index
    %209 = vector.load %arg11[%c32_244, %c32_245] : memref<64x72xf32, #tpu.memory_space<vmem>>, vector<8x8xf32>
    tpu.vector_store %arg11[%c32_244, %c32_245], %208 {strides = array<i32>} : memref<64x72xf32, #tpu.memory_space<vmem>>, vector<8x8xf32>,
    %c164_246 = arith.constant 164 : index
    %c0_247 = arith.constant 0 : index
    %210 = tpu.strided_load %arg9[%c164_246, %c0_247] {strides = array<i32: 2, 1>} : memref<328x8xf32, #tpu.memory_space<vmem>>, vector<8x8xf32>
    %c32_248 = arith.constant 32 : index
    %c40_249 = arith.constant 40 : index
    %211 = vector.load %arg11[%c32_248, %c40_249] : memref<64x72xf32, #tpu.memory_space<vmem>>, vector<8x8xf32>
    tpu.vector_store %arg11[%c32_248, %c40_249], %210 {strides = array<i32>} : memref<64x72xf32, #tpu.memory_space<vmem>>, vector<8x8xf32>,
    %c180 = arith.constant 180 : index
    %c0_250 = arith.constant 0 : index
    %212 = tpu.strided_load %arg9[%c180, %c0_250] {strides = array<i32: 2, 1>} : memref<328x8xf32, #tpu.memory_space<vmem>>, vector<8x8xf32>
    %c32_251 = arith.constant 32 : index
    %c48_252 = arith.constant 48 : index
    %213 = vector.load %arg11[%c32_251, %c48_252] : memref<64x72xf32, #tpu.memory_space<vmem>>, vector<8x8xf32>
    tpu.vector_store %arg11[%c32_251, %c48_252], %212 {strides = array<i32>} : memref<64x72xf32, #tpu.memory_space<vmem>>, vector<8x8xf32>,
    %c181_253 = arith.constant 181 : index
    %c0_254 = arith.constant 0 : index
    %214 = tpu.strided_load %arg9[%c181_253, %c0_254] {strides = array<i32: 2, 1>} : memref<328x8xf32, #tpu.memory_space<vmem>>, vector<8x8xf32>
    %c32_255 = arith.constant 32 : index
    %c56_256 = arith.constant 56 : index
    %215 = vector.load %arg11[%c32_255, %c56_256] : memref<64x72xf32, #tpu.memory_space<vmem>>, vector<8x8xf32>
    tpu.vector_store %arg11[%c32_255, %c56_256], %214 {strides = array<i32>} : memref<64x72xf32, #tpu.memory_space<vmem>>, vector<8x8xf32>,
    %c182_257 = arith.constant 182 : index
    %c0_258 = arith.constant 0 : index
    %216 = tpu.strided_load %arg9[%c182_257, %c0_258] {strides = array<i32: 2, 1>} : memref<328x8xf32, #tpu.memory_space<vmem>>, vector<8x8xf32>
    %c32_259 = arith.constant 32 : index
    %c64_260 = arith.constant 64 : index
    %217 = vector.load %arg11[%c32_259, %c64_260] : memref<64x72xf32, #tpu.memory_space<vmem>>, vector<8x8xf32>
    tpu.vector_store %arg11[%c32_259, %c64_260], %216 {strides = array<i32>} : memref<64x72xf32, #tpu.memory_space<vmem>>, vector<8x8xf32>,
    %cst_261 = arith.constant 0.000000e+00 : f32
    %218 = vector.broadcast %cst_261 : f32 to vector<8x4xf32>
    %c0_262 = arith.constant 0 : index
    %c199 = arith.constant 199 : index
    %c0_263 = arith.constant 0 : index
    %219 = tpu.strided_load %arg1[%c0_262, %c199, %c0_263] {strides = array<i32: 1, 2, 1>} : memref<1x396x4xf32, #tpu.memory_space<vmem>>, vector<1x8x4xf32>
    %220 = vector.shape_cast %219 : vector<1x8x4xf32> to vector<8x4xf32>
    %221 = arith.addf %218, %220 : vector<8x4xf32>
    %c0_264 = arith.constant 0 : index
    %c200 = arith.constant 200 : index
    %c0_265 = arith.constant 0 : index
    %222 = tpu.strided_load %arg1[%c0_264, %c200, %c0_265] {strides = array<i32: 1, 2, 1>} : memref<1x396x4xf32, #tpu.memory_space<vmem>>, vector<1x8x4xf32>
    %223 = vector.shape_cast %222 : vector<1x8x4xf32> to vector<8x4xf32>
    %224 = arith.addf %221, %223 : vector<8x4xf32>
    %c0_266 = arith.constant 0 : index
    %c217 = arith.constant 217 : index
    %c0_267 = arith.constant 0 : index
    %225 = tpu.strided_load %arg1[%c0_266, %c217, %c0_267] {strides = array<i32: 1, 2, 1>} : memref<1x396x4xf32, #tpu.memory_space<vmem>>, vector<1x8x4xf32>
    %226 = vector.shape_cast %225 : vector<1x8x4xf32> to vector<8x4xf32>
    %227 = arith.addf %224, %226 : vector<8x4xf32>
    %c0_268 = arith.constant 0 : index
    %c218 = arith.constant 218 : index
    %c0_269 = arith.constant 0 : index
    %228 = tpu.strided_load %arg1[%c0_268, %c218, %c0_269] {strides = array<i32: 1, 2, 1>} : memref<1x396x4xf32, #tpu.memory_space<vmem>>, vector<1x8x4xf32>
    %229 = vector.shape_cast %228 : vector<1x8x4xf32> to vector<8x4xf32>
    %230 = arith.addf %227, %229 : vector<8x4xf32>
    %cst_270 = arith.constant 2.500000e-01 : f32
    %231 = vector.broadcast %cst_270 : f32 to vector<8x4xf32>
    %232 = arith.mulf %230, %231 : vector<8x4xf32>
    %c32_271 = arith.constant 32 : index
    %c0_272 = arith.constant 0 : index
    %233 = vector.load %arg12[%c32_271, %c0_272] : memref<64x4xf32, #tpu.memory_space<vmem>>, vector<8x4xf32>
    tpu.vector_store %arg12[%c32_271, %c0_272], %232 {strides = array<i32>} : memref<64x4xf32, #tpu.memory_space<vmem>>, vector<8x4xf32>,
    %c180_273 = arith.constant 180 : index
    %c0_274 = arith.constant 0 : index
    %234 = tpu.strided_load %arg9[%c180_273, %c0_274] {strides = array<i32: 2, 1>} : memref<328x8xf32, #tpu.memory_space<vmem>>, vector<8x8xf32>
    %c40_275 = arith.constant 40 : index
    %c0_276 = arith.constant 0 : index
    %235 = vector.load %arg11[%c40_275, %c0_276] : memref<64x72xf32, #tpu.memory_space<vmem>>, vector<8x8xf32>
    tpu.vector_store %arg11[%c40_275, %c0_276], %234 {strides = array<i32>} : memref<64x72xf32, #tpu.memory_space<vmem>>, vector<8x8xf32>,
    %c181_277 = arith.constant 181 : index
    %c0_278 = arith.constant 0 : index
    %236 = tpu.strided_load %arg9[%c181_277, %c0_278] {strides = array<i32: 2, 1>} : memref<328x8xf32, #tpu.memory_space<vmem>>, vector<8x8xf32>
    %c40_279 = arith.constant 40 : index
    %c8_280 = arith.constant 8 : index
    %237 = vector.load %arg11[%c40_279, %c8_280] : memref<64x72xf32, #tpu.memory_space<vmem>>, vector<8x8xf32>
    tpu.vector_store %arg11[%c40_279, %c8_280], %236 {strides = array<i32>} : memref<64x72xf32, #tpu.memory_space<vmem>>, vector<8x8xf32>,
    %c182_281 = arith.constant 182 : index
    %c0_282 = arith.constant 0 : index
    %238 = tpu.strided_load %arg9[%c182_281, %c0_282] {strides = array<i32: 2, 1>} : memref<328x8xf32, #tpu.memory_space<vmem>>, vector<8x8xf32>
    %c40_283 = arith.constant 40 : index
    %c16_284 = arith.constant 16 : index
    %239 = vector.load %arg11[%c40_283, %c16_284] : memref<64x72xf32, #tpu.memory_space<vmem>>, vector<8x8xf32>
    tpu.vector_store %arg11[%c40_283, %c16_284], %238 {strides = array<i32>} : memref<64x72xf32, #tpu.memory_space<vmem>>, vector<8x8xf32>,
    %c198 = arith.constant 198 : index
    %c0_285 = arith.constant 0 : index
    %240 = tpu.strided_load %arg9[%c198, %c0_285] {strides = array<i32: 2, 1>} : memref<328x8xf32, #tpu.memory_space<vmem>>, vector<8x8xf32>
    %c40_286 = arith.constant 40 : index
    %c24_287 = arith.constant 24 : index
    %241 = vector.load %arg11[%c40_286, %c24_287] : memref<64x72xf32, #tpu.memory_space<vmem>>, vector<8x8xf32>
    tpu.vector_store %arg11[%c40_286, %c24_287], %240 {strides = array<i32>} : memref<64x72xf32, #tpu.memory_space<vmem>>, vector<8x8xf32>,
    %c199_288 = arith.constant 199 : index
    %c0_289 = arith.constant 0 : index
    %242 = tpu.strided_load %arg9[%c199_288, %c0_289] {strides = array<i32: 2, 1>} : memref<328x8xf32, #tpu.memory_space<vmem>>, vector<8x8xf32>
    %c40_290 = arith.constant 40 : index
    %c32_291 = arith.constant 32 : index
    %243 = vector.load %arg11[%c40_290, %c32_291] : memref<64x72xf32, #tpu.memory_space<vmem>>, vector<8x8xf32>
    tpu.vector_store %arg11[%c40_290, %c32_291], %242 {strides = array<i32>} : memref<64x72xf32, #tpu.memory_space<vmem>>, vector<8x8xf32>,
    %c200_292 = arith.constant 200 : index
    %c0_293 = arith.constant 0 : index
    %244 = tpu.strided_load %arg9[%c200_292, %c0_293] {strides = array<i32: 2, 1>} : memref<328x8xf32, #tpu.memory_space<vmem>>, vector<8x8xf32>
    %c40_294 = arith.constant 40 : index
    %c40_295 = arith.constant 40 : index
    %245 = vector.load %arg11[%c40_294, %c40_295] : memref<64x72xf32, #tpu.memory_space<vmem>>, vector<8x8xf32>
    tpu.vector_store %arg11[%c40_294, %c40_295], %244 {strides = array<i32>} : memref<64x72xf32, #tpu.memory_space<vmem>>, vector<8x8xf32>,
    %c216 = arith.constant 216 : index
    %c0_296 = arith.constant 0 : index
    %246 = tpu.strided_load %arg9[%c216, %c0_296] {strides = array<i32: 2, 1>} : memref<328x8xf32, #tpu.memory_space<vmem>>, vector<8x8xf32>
    %c40_297 = arith.constant 40 : index
    %c48_298 = arith.constant 48 : index
    %247 = vector.load %arg11[%c40_297, %c48_298] : memref<64x72xf32, #tpu.memory_space<vmem>>, vector<8x8xf32>
    tpu.vector_store %arg11[%c40_297, %c48_298], %246 {strides = array<i32>} : memref<64x72xf32, #tpu.memory_space<vmem>>, vector<8x8xf32>,
    %c217_299 = arith.constant 217 : index
    %c0_300 = arith.constant 0 : index
    %248 = tpu.strided_load %arg9[%c217_299, %c0_300] {strides = array<i32: 2, 1>} : memref<328x8xf32, #tpu.memory_space<vmem>>, vector<8x8xf32>
    %c40_301 = arith.constant 40 : index
    %c56_302 = arith.constant 56 : index
    %249 = vector.load %arg11[%c40_301, %c56_302] : memref<64x72xf32, #tpu.memory_space<vmem>>, vector<8x8xf32>
    tpu.vector_store %arg11[%c40_301, %c56_302], %248 {strides = array<i32>} : memref<64x72xf32, #tpu.memory_space<vmem>>, vector<8x8xf32>,
    %c218_303 = arith.constant 218 : index
    %c0_304 = arith.constant 0 : index
    %250 = tpu.strided_load %arg9[%c218_303, %c0_304] {strides = array<i32: 2, 1>} : memref<328x8xf32, #tpu.memory_space<vmem>>, vector<8x8xf32>
    %c40_305 = arith.constant 40 : index
    %c64_306 = arith.constant 64 : index
    %251 = vector.load %arg11[%c40_305, %c64_306] : memref<64x72xf32, #tpu.memory_space<vmem>>, vector<8x8xf32>
    tpu.vector_store %arg11[%c40_305, %c64_306], %250 {strides = array<i32>} : memref<64x72xf32, #tpu.memory_space<vmem>>, vector<8x8xf32>,
    %cst_307 = arith.constant 0.000000e+00 : f32
    %252 = vector.broadcast %cst_307 : f32 to vector<8x4xf32>
    %c0_308 = arith.constant 0 : index
    %c235 = arith.constant 235 : index
    %c0_309 = arith.constant 0 : index
    %253 = tpu.strided_load %arg1[%c0_308, %c235, %c0_309] {strides = array<i32: 1, 2, 1>} : memref<1x396x4xf32, #tpu.memory_space<vmem>>, vector<1x8x4xf32>
    %254 = vector.shape_cast %253 : vector<1x8x4xf32> to vector<8x4xf32>
    %255 = arith.addf %252, %254 : vector<8x4xf32>
    %c0_310 = arith.constant 0 : index
    %c236 = arith.constant 236 : index
    %c0_311 = arith.constant 0 : index
    %256 = tpu.strided_load %arg1[%c0_310, %c236, %c0_311] {strides = array<i32: 1, 2, 1>} : memref<1x396x4xf32, #tpu.memory_space<vmem>>, vector<1x8x4xf32>
    %257 = vector.shape_cast %256 : vector<1x8x4xf32> to vector<8x4xf32>
    %258 = arith.addf %255, %257 : vector<8x4xf32>
    %c0_312 = arith.constant 0 : index
    %c253 = arith.constant 253 : index
    %c0_313 = arith.constant 0 : index
    %259 = tpu.strided_load %arg1[%c0_312, %c253, %c0_313] {strides = array<i32: 1, 2, 1>} : memref<1x396x4xf32, #tpu.memory_space<vmem>>, vector<1x8x4xf32>
    %260 = vector.shape_cast %259 : vector<1x8x4xf32> to vector<8x4xf32>
    %261 = arith.addf %258, %260 : vector<8x4xf32>
    %c0_314 = arith.constant 0 : index
    %c254 = arith.constant 254 : index
    %c0_315 = arith.constant 0 : index
    %262 = tpu.strided_load %arg1[%c0_314, %c254, %c0_315] {strides = array<i32: 1, 2, 1>} : memref<1x396x4xf32, #tpu.memory_space<vmem>>, vector<1x8x4xf32>
    %263 = vector.shape_cast %262 : vector<1x8x4xf32> to vector<8x4xf32>
    %264 = arith.addf %261, %263 : vector<8x4xf32>
    %cst_316 = arith.constant 2.500000e-01 : f32
    %265 = vector.broadcast %cst_316 : f32 to vector<8x4xf32>
    %266 = arith.mulf %264, %265 : vector<8x4xf32>
    %c40_317 = arith.constant 40 : index
    %c0_318 = arith.constant 0 : index
    %267 = vector.load %arg12[%c40_317, %c0_318] : memref<64x4xf32, #tpu.memory_space<vmem>>, vector<8x4xf32>
    tpu.vector_store %arg12[%c40_317, %c0_318], %266 {strides = array<i32>} : memref<64x4xf32, #tpu.memory_space<vmem>>, vector<8x4xf32>,
    %c216_319 = arith.constant 216 : index
    %c0_320 = arith.constant 0 : index
    %268 = tpu.strided_load %arg9[%c216_319, %c0_320] {strides = array<i32: 2, 1>} : memref<328x8xf32, #tpu.memory_space<vmem>>, vector<8x8xf32>
    %c48_321 = arith.constant 48 : index
    %c0_322 = arith.constant 0 : index
    %269 = vector.load %arg11[%c48_321, %c0_322] : memref<64x72xf32, #tpu.memory_space<vmem>>, vector<8x8xf32>
    tpu.vector_store %arg11[%c48_321, %c0_322], %268 {strides = array<i32>} : memref<64x72xf32, #tpu.memory_space<vmem>>, vector<8x8xf32>,
    %c217_323 = arith.constant 217 : index
    %c0_324 = arith.constant 0 : index
    %270 = tpu.strided_load %arg9[%c217_323, %c0_324] {strides = array<i32: 2, 1>} : memref<328x8xf32, #tpu.memory_space<vmem>>, vector<8x8xf32>
    %c48_325 = arith.constant 48 : index
    %c8_326 = arith.constant 8 : index
    %271 = vector.load %arg11[%c48_325, %c8_326] : memref<64x72xf32, #tpu.memory_space<vmem>>, vector<8x8xf32>
    tpu.vector_store %arg11[%c48_325, %c8_326], %270 {strides = array<i32>} : memref<64x72xf32, #tpu.memory_space<vmem>>, vector<8x8xf32>,
    %c218_327 = arith.constant 218 : index
    %c0_328 = arith.constant 0 : index
    %272 = tpu.strided_load %arg9[%c218_327, %c0_328] {strides = array<i32: 2, 1>} : memref<328x8xf32, #tpu.memory_space<vmem>>, vector<8x8xf32>
    %c48_329 = arith.constant 48 : index
    %c16_330 = arith.constant 16 : index
    %273 = vector.load %arg11[%c48_329, %c16_330] : memref<64x72xf32, #tpu.memory_space<vmem>>, vector<8x8xf32>
    tpu.vector_store %arg11[%c48_329, %c16_330], %272 {strides = array<i32>} : memref<64x72xf32, #tpu.memory_space<vmem>>, vector<8x8xf32>,
    %c234 = arith.constant 234 : index
    %c0_331 = arith.constant 0 : index
    %274 = tpu.strided_load %arg9[%c234, %c0_331] {strides = array<i32: 2, 1>} : memref<328x8xf32, #tpu.memory_space<vmem>>, vector<8x8xf32>
    %c48_332 = arith.constant 48 : index
    %c24_333 = arith.constant 24 : index
    %275 = vector.load %arg11[%c48_332, %c24_333] : memref<64x72xf32, #tpu.memory_space<vmem>>, vector<8x8xf32>
    tpu.vector_store %arg11[%c48_332, %c24_333], %274 {strides = array<i32>} : memref<64x72xf32, #tpu.memory_space<vmem>>, vector<8x8xf32>,
    %c235_334 = arith.constant 235 : index
    %c0_335 = arith.constant 0 : index
    %276 = tpu.strided_load %arg9[%c235_334, %c0_335] {strides = array<i32: 2, 1>} : memref<328x8xf32, #tpu.memory_space<vmem>>, vector<8x8xf32>
    %c48_336 = arith.constant 48 : index
    %c32_337 = arith.constant 32 : index
    %277 = vector.load %arg11[%c48_336, %c32_337] : memref<64x72xf32, #tpu.memory_space<vmem>>, vector<8x8xf32>
    tpu.vector_store %arg11[%c48_336, %c32_337], %276 {strides = array<i32>} : memref<64x72xf32, #tpu.memory_space<vmem>>, vector<8x8xf32>,
    %c236_338 = arith.constant 236 : index
    %c0_339 = arith.constant 0 : index
    %278 = tpu.strided_load %arg9[%c236_338, %c0_339] {strides = array<i32: 2, 1>} : memref<328x8xf32, #tpu.memory_space<vmem>>, vector<8x8xf32>
    %c48_340 = arith.constant 48 : index
    %c40_341 = arith.constant 40 : index
    %279 = vector.load %arg11[%c48_340, %c40_341] : memref<64x72xf32, #tpu.memory_space<vmem>>, vector<8x8xf32>
    tpu.vector_store %arg11[%c48_340, %c40_341], %278 {strides = array<i32>} : memref<64x72xf32, #tpu.memory_space<vmem>>, vector<8x8xf32>,
    %c252 = arith.constant 252 : index
    %c0_342 = arith.constant 0 : index
    %280 = tpu.strided_load %arg9[%c252, %c0_342] {strides = array<i32: 2, 1>} : memref<328x8xf32, #tpu.memory_space<vmem>>, vector<8x8xf32>
    %c48_343 = arith.constant 48 : index
    %c48_344 = arith.constant 48 : index
    %281 = vector.load %arg11[%c48_343, %c48_344] : memref<64x72xf32, #tpu.memory_space<vmem>>, vector<8x8xf32>
    tpu.vector_store %arg11[%c48_343, %c48_344], %280 {strides = array<i32>} : memref<64x72xf32, #tpu.memory_space<vmem>>, vector<8x8xf32>,
    %c253_345 = arith.constant 253 : index
    %c0_346 = arith.constant 0 : index
    %282 = tpu.strided_load %arg9[%c253_345, %c0_346] {strides = array<i32: 2, 1>} : memref<328x8xf32, #tpu.memory_space<vmem>>, vector<8x8xf32>
    %c48_347 = arith.constant 48 : index
    %c56_348 = arith.constant 56 : index
    %283 = vector.load %arg11[%c48_347, %c56_348] : memref<64x72xf32, #tpu.memory_space<vmem>>, vector<8x8xf32>
    tpu.vector_store %arg11[%c48_347, %c56_348], %282 {strides = array<i32>} : memref<64x72xf32, #tpu.memory_space<vmem>>, vector<8x8xf32>,
    %c254_349 = arith.constant 254 : index
    %c0_350 = arith.constant 0 : index
    %284 = tpu.strided_load %arg9[%c254_349, %c0_350] {strides = array<i32: 2, 1>} : memref<328x8xf32, #tpu.memory_space<vmem>>, vector<8x8xf32>
    %c48_351 = arith.constant 48 : index
    %c64_352 = arith.constant 64 : index
    %285 = vector.load %arg11[%c48_351, %c64_352] : memref<64x72xf32, #tpu.memory_space<vmem>>, vector<8x8xf32>
    tpu.vector_store %arg11[%c48_351, %c64_352], %284 {strides = array<i32>} : memref<64x72xf32, #tpu.memory_space<vmem>>, vector<8x8xf32>,
    %cst_353 = arith.constant 0.000000e+00 : f32
    %286 = vector.broadcast %cst_353 : f32 to vector<8x4xf32>
    %c0_354 = arith.constant 0 : index
    %c271 = arith.constant 271 : index
    %c0_355 = arith.constant 0 : index
    %287 = tpu.strided_load %arg1[%c0_354, %c271, %c0_355] {strides = array<i32: 1, 2, 1>} : memref<1x396x4xf32, #tpu.memory_space<vmem>>, vector<1x8x4xf32>
    %288 = vector.shape_cast %287 : vector<1x8x4xf32> to vector<8x4xf32>
    %289 = arith.addf %286, %288 : vector<8x4xf32>
    %c0_356 = arith.constant 0 : index
    %c272 = arith.constant 272 : index
    %c0_357 = arith.constant 0 : index
    %290 = tpu.strided_load %arg1[%c0_356, %c272, %c0_357] {strides = array<i32: 1, 2, 1>} : memref<1x396x4xf32, #tpu.memory_space<vmem>>, vector<1x8x4xf32>
    %291 = vector.shape_cast %290 : vector<1x8x4xf32> to vector<8x4xf32>
    %292 = arith.addf %289, %291 : vector<8x4xf32>
    %c0_358 = arith.constant 0 : index
    %c289 = arith.constant 289 : index
    %c0_359 = arith.constant 0 : index
    %293 = tpu.strided_load %arg1[%c0_358, %c289, %c0_359] {strides = array<i32: 1, 2, 1>} : memref<1x396x4xf32, #tpu.memory_space<vmem>>, vector<1x8x4xf32>
    %294 = vector.shape_cast %293 : vector<1x8x4xf32> to vector<8x4xf32>
    %295 = arith.addf %292, %294 : vector<8x4xf32>
    %c0_360 = arith.constant 0 : index
    %c290 = arith.constant 290 : index
    %c0_361 = arith.constant 0 : index
    %296 = tpu.strided_load %arg1[%c0_360, %c290, %c0_361] {strides = array<i32: 1, 2, 1>} : memref<1x396x4xf32, #tpu.memory_space<vmem>>, vector<1x8x4xf32>
    %297 = vector.shape_cast %296 : vector<1x8x4xf32> to vector<8x4xf32>
    %298 = arith.addf %295, %297 : vector<8x4xf32>
    %cst_362 = arith.constant 2.500000e-01 : f32
    %299 = vector.broadcast %cst_362 : f32 to vector<8x4xf32>
    %300 = arith.mulf %298, %299 : vector<8x4xf32>
    %c48_363 = arith.constant 48 : index
    %c0_364 = arith.constant 0 : index
    %301 = vector.load %arg12[%c48_363, %c0_364] : memref<64x4xf32, #tpu.memory_space<vmem>>, vector<8x4xf32>
    tpu.vector_store %arg12[%c48_363, %c0_364], %300 {strides = array<i32>} : memref<64x4xf32, #tpu.memory_space<vmem>>, vector<8x4xf32>,
    %c252_365 = arith.constant 252 : index
    %c0_366 = arith.constant 0 : index
    %302 = tpu.strided_load %arg9[%c252_365, %c0_366] {strides = array<i32: 2, 1>} : memref<328x8xf32, #tpu.memory_space<vmem>>, vector<8x8xf32>
    %c56_367 = arith.constant 56 : index
    %c0_368 = arith.constant 0 : index
    %303 = vector.load %arg11[%c56_367, %c0_368] : memref<64x72xf32, #tpu.memory_space<vmem>>, vector<8x8xf32>
    tpu.vector_store %arg11[%c56_367, %c0_368], %302 {strides = array<i32>} : memref<64x72xf32, #tpu.memory_space<vmem>>, vector<8x8xf32>,
    %c253_369 = arith.constant 253 : index
    %c0_370 = arith.constant 0 : index
    %304 = tpu.strided_load %arg9[%c253_369, %c0_370] {strides = array<i32: 2, 1>} : memref<328x8xf32, #tpu.memory_space<vmem>>, vector<8x8xf32>
    %c56_371 = arith.constant 56 : index
    %c8_372 = arith.constant 8 : index
    %305 = vector.load %arg11[%c56_371, %c8_372] : memref<64x72xf32, #tpu.memory_space<vmem>>, vector<8x8xf32>
    tpu.vector_store %arg11[%c56_371, %c8_372], %304 {strides = array<i32>} : memref<64x72xf32, #tpu.memory_space<vmem>>, vector<8x8xf32>,
    %c254_373 = arith.constant 254 : index
    %c0_374 = arith.constant 0 : index
    %306 = tpu.strided_load %arg9[%c254_373, %c0_374] {strides = array<i32: 2, 1>} : memref<328x8xf32, #tpu.memory_space<vmem>>, vector<8x8xf32>
    %c56_375 = arith.constant 56 : index
    %c16_376 = arith.constant 16 : index
    %307 = vector.load %arg11[%c56_375, %c16_376] : memref<64x72xf32, #tpu.memory_space<vmem>>, vector<8x8xf32>
    tpu.vector_store %arg11[%c56_375, %c16_376], %306 {strides = array<i32>} : memref<64x72xf32, #tpu.memory_space<vmem>>, vector<8x8xf32>,
    %c270 = arith.constant 270 : index
    %c0_377 = arith.constant 0 : index
    %308 = tpu.strided_load %arg9[%c270, %c0_377] {strides = array<i32: 2, 1>} : memref<328x8xf32, #tpu.memory_space<vmem>>, vector<8x8xf32>
    %c56_378 = arith.constant 56 : index
    %c24_379 = arith.constant 24 : index
    %309 = vector.load %arg11[%c56_378, %c24_379] : memref<64x72xf32, #tpu.memory_space<vmem>>, vector<8x8xf32>
    tpu.vector_store %arg11[%c56_378, %c24_379], %308 {strides = array<i32>} : memref<64x72xf32, #tpu.memory_space<vmem>>, vector<8x8xf32>,
    %c271_380 = arith.constant 271 : index
    %c0_381 = arith.constant 0 : index
    %310 = tpu.strided_load %arg9[%c271_380, %c0_381] {strides = array<i32: 2, 1>} : memref<328x8xf32, #tpu.memory_space<vmem>>, vector<8x8xf32>
    %c56_382 = arith.constant 56 : index
    %c32_383 = arith.constant 32 : index
    %311 = vector.load %arg11[%c56_382, %c32_383] : memref<64x72xf32, #tpu.memory_space<vmem>>, vector<8x8xf32>
    tpu.vector_store %arg11[%c56_382, %c32_383], %310 {strides = array<i32>} : memref<64x72xf32, #tpu.memory_space<vmem>>, vector<8x8xf32>,
    %c272_384 = arith.constant 272 : index
    %c0_385 = arith.constant 0 : index
    %312 = tpu.strided_load %arg9[%c272_384, %c0_385] {strides = array<i32: 2, 1>} : memref<328x8xf32, #tpu.memory_space<vmem>>, vector<8x8xf32>
    %c56_386 = arith.constant 56 : index
    %c40_387 = arith.constant 40 : index
    %313 = vector.load %arg11[%c56_386, %c40_387] : memref<64x72xf32, #tpu.memory_space<vmem>>, vector<8x8xf32>
    tpu.vector_store %arg11[%c56_386, %c40_387], %312 {strides = array<i32>} : memref<64x72xf32, #tpu.memory_space<vmem>>, vector<8x8xf32>,
    %c288 = arith.constant 288 : index
    %c0_388 = arith.constant 0 : index
    %314 = tpu.strided_load %arg9[%c288, %c0_388] {strides = array<i32: 2, 1>} : memref<328x8xf32, #tpu.memory_space<vmem>>, vector<8x8xf32>
    %c56_389 = arith.constant 56 : index
    %c48_390 = arith.constant 48 : index
    %315 = vector.load %arg11[%c56_389, %c48_390] : memref<64x72xf32, #tpu.memory_space<vmem>>, vector<8x8xf32>
    tpu.vector_store %arg11[%c56_389, %c48_390], %314 {strides = array<i32>} : memref<64x72xf32, #tpu.memory_space<vmem>>, vector<8x8xf32>,
    %c289_391 = arith.constant 289 : index
    %c0_392 = arith.constant 0 : index
    %316 = tpu.strided_load %arg9[%c289_391, %c0_392] {strides = array<i32: 2, 1>} : memref<328x8xf32, #tpu.memory_space<vmem>>, vector<8x8xf32>
    %c56_393 = arith.constant 56 : index
    %c56_394 = arith.constant 56 : index
    %317 = vector.load %arg11[%c56_393, %c56_394] : memref<64x72xf32, #tpu.memory_space<vmem>>, vector<8x8xf32>
    tpu.vector_store %arg11[%c56_393, %c56_394], %316 {strides = array<i32>} : memref<64x72xf32, #tpu.memory_space<vmem>>, vector<8x8xf32>,
    %c290_395 = arith.constant 290 : index
    %c0_396 = arith.constant 0 : index
    %318 = tpu.strided_load %arg9[%c290_395, %c0_396] {strides = array<i32: 2, 1>} : memref<328x8xf32, #tpu.memory_space<vmem>>, vector<8x8xf32>
    %c56_397 = arith.constant 56 : index
    %c64_398 = arith.constant 64 : index
    %319 = vector.load %arg11[%c56_397, %c64_398] : memref<64x72xf32, #tpu.memory_space<vmem>>, vector<8x8xf32>
    tpu.vector_store %arg11[%c56_397, %c64_398], %318 {strides = array<i32>} : memref<64x72xf32, #tpu.memory_space<vmem>>, vector<8x8xf32>,
    %cst_399 = arith.constant 0.000000e+00 : f32
    %320 = vector.broadcast %cst_399 : f32 to vector<8x4xf32>
    %c0_400 = arith.constant 0 : index
    %c307 = arith.constant 307 : index
    %c0_401 = arith.constant 0 : index
    %321 = tpu.strided_load %arg1[%c0_400, %c307, %c0_401] {strides = array<i32: 1, 2, 1>} : memref<1x396x4xf32, #tpu.memory_space<vmem>>, vector<1x8x4xf32>
    %322 = vector.shape_cast %321 : vector<1x8x4xf32> to vector<8x4xf32>
    %323 = arith.addf %320, %322 : vector<8x4xf32>
    %c0_402 = arith.constant 0 : index
    %c308 = arith.constant 308 : index
    %c0_403 = arith.constant 0 : index
    %324 = tpu.strided_load %arg1[%c0_402, %c308, %c0_403] {strides = array<i32: 1, 2, 1>} : memref<1x396x4xf32, #tpu.memory_space<vmem>>, vector<1x8x4xf32>
    %325 = vector.shape_cast %324 : vector<1x8x4xf32> to vector<8x4xf32>
    %326 = arith.addf %323, %325 : vector<8x4xf32>
    %c0_404 = arith.constant 0 : index
    %c325 = arith.constant 325 : index
    %c0_405 = arith.constant 0 : index
    %327 = tpu.strided_load %arg1[%c0_404, %c325, %c0_405] {strides = array<i32: 1, 2, 1>} : memref<1x396x4xf32, #tpu.memory_space<vmem>>, vector<1x8x4xf32>
    %328 = vector.shape_cast %327 : vector<1x8x4xf32> to vector<8x4xf32>
    %329 = arith.addf %326, %328 : vector<8x4xf32>
    %c0_406 = arith.constant 0 : index
    %c326 = arith.constant 326 : index
    %c0_407 = arith.constant 0 : index
    %330 = tpu.strided_load %arg1[%c0_406, %c326, %c0_407] {strides = array<i32: 1, 2, 1>} : memref<1x396x4xf32, #tpu.memory_space<vmem>>, vector<1x8x4xf32>
    %331 = vector.shape_cast %330 : vector<1x8x4xf32> to vector<8x4xf32>
    %332 = arith.addf %329, %331 : vector<8x4xf32>
    %cst_408 = arith.constant 2.500000e-01 : f32
    %333 = vector.broadcast %cst_408 : f32 to vector<8x4xf32>
    %334 = arith.mulf %332, %333 : vector<8x4xf32>
    %c56_409 = arith.constant 56 : index
    %c0_410 = arith.constant 0 : index
    %335 = vector.load %arg12[%c56_409, %c0_410] : memref<64x4xf32, #tpu.memory_space<vmem>>, vector<8x4xf32>
    tpu.vector_store %arg12[%c56_409, %c0_410], %334 {strides = array<i32>} : memref<64x4xf32, #tpu.memory_space<vmem>>, vector<8x4xf32>,
    %c0_411 = arith.constant 0 : index
    %c0_412 = arith.constant 0 : index
    %336 = vector.load %arg11[%c0_411, %c0_412] : memref<64x72xf32, #tpu.memory_space<vmem>>, vector<64x72xf32>
    %c0_413 = arith.constant 0 : index
    %c0_414 = arith.constant 0 : index
    %337 = vector.load %arg4[%c0_413, %c0_414] : memref<72x8xf32, #tpu.memory_space<vmem>>, vector<72x8xf32>
    %cst_415 = arith.constant dense<0.000000e+00> : vector<64x8xf32>
    %338 = tpu.matmul %336, %337, %cst_415 {dimension_numbers = #tpu.dot_dimension_numbers<[1], [0], [0], [1], [0, 0, 1, 1], [], []>} : vector<64x72xf32>, vector<72x8xf32>, vector<64x8xf32> -> vector<64x8xf32>
    %c0_416 = arith.constant 0 : index
    %c0_417 = arith.constant 0 : index
    %339 = vector.load %arg5[%c0_416, %c0_417] : memref<1x8xf32, #tpu.memory_space<vmem>>, vector<1x8xf32>
    %340 = vector.broadcast %339 : vector<1x8xf32> to vector<64x8xf32>
    %341 = arith.addf %338, %340 : vector<64x8xf32>
    %cst_418 = arith.constant 0.000000e+00 : f32
    %342 = vector.broadcast %cst_418 : f32 to vector<64x8xf32>
    %343 = arith.maximumf %341, %342 : vector<64x8xf32>
    %c0_419 = arith.constant 0 : index
    %c0_420 = arith.constant 0 : index
    %344 = vector.load %arg12[%c0_419, %c0_420] : memref<64x4xf32, #tpu.memory_space<vmem>>, vector<64x4xf32>
    %c0_421 = arith.constant 0 : index
    %c0_422 = arith.constant 0 : index
    %345 = vector.load %arg6[%c0_421, %c0_422] : memref<4x8xf32, #tpu.memory_space<vmem>>, vector<4x8xf32>
    %cst_423 = arith.constant dense<0.000000e+00> : vector<64x8xf32>
    %346 = tpu.matmul %344, %345, %cst_423 {dimension_numbers = #tpu.dot_dimension_numbers<[1], [0], [0], [1], [0, 0, 1, 1], [], []>} : vector<64x4xf32>, vector<4x8xf32>, vector<64x8xf32> -> vector<64x8xf32>
    %c0_424 = arith.constant 0 : index
    %c0_425 = arith.constant 0 : index
    %347 = vector.load %arg7[%c0_424, %c0_425] : memref<1x8xf32, #tpu.memory_space<vmem>>, vector<1x8xf32>
    %348 = vector.broadcast %347 : vector<1x8xf32> to vector<64x8xf32>
    %349 = arith.addf %346, %348 : vector<64x8xf32>
    %350 = arith.addf %343, %349 : vector<64x8xf32>
    %cst_426 = arith.constant 0.000000e+00 : f32
    %351 = vector.broadcast %cst_426 : f32 to vector<64x8xf32>
    %352 = arith.maximumf %350, %351 : vector<64x8xf32>
    %c0_427 = arith.constant 0 : index
    %c0_428 = arith.constant 0 : index
    %c0_429 = arith.constant 0 : index
    %353 = vector.load %arg8[%c0_427, %c0_428, %c0_429] : memref<1x64x8xf32, #tpu.memory_space<vmem>>, vector<1x64x8xf32>
    %354 = vector.shape_cast %353 : vector<1x64x8xf32> to vector<64x8xf32>
    %355 = vector.shape_cast %352 : vector<64x8xf32> to vector<1x64x8xf32>
    tpu.vector_store %arg8[%c0_427, %c0_428, %c0_429], %355 {strides = array<i32>} : memref<1x64x8xf32, #tpu.memory_space<vmem>>, vector<1x64x8xf32>,
    return
  }
  func.func @transform_0(%arg0: i32) -> (i32, i32, i32) {
    %c0_i32 = arith.constant 0 : i32
    %c0_i32_0 = arith.constant 0 : i32
    %c0_i32_1 = arith.constant 0 : i32
    return %arg0, %c0_i32, %c0_i32_0 : i32, i32, i32
  }
  func.func @transform_1(%arg0: i32) -> (i32, i32) {
    %c0_i32 = arith.constant 0 : i32
    %c0_i32_0 = arith.constant 0 : i32
    %c0_i32_1 = arith.constant 0 : i32
    return %c0_i32, %c0_i32_0 : i32, i32
  }
  func.func @transform_2(%arg0: i32) -> (i32, i32) {
    %c0_i32 = arith.constant 0 : i32
    %c0_i32_0 = arith.constant 0 : i32
    %c0_i32_1 = arith.constant 0 : i32
    return %c0_i32, %c0_i32_0 : i32, i32
  }
  func.func @transform_3(%arg0: i32) -> (i32, i32) {
    %c0_i32 = arith.constant 0 : i32
    %c0_i32_0 = arith.constant 0 : i32
    %c0_i32_1 = arith.constant 0 : i32
    return %c0_i32, %c0_i32_0 : i32, i32
  }
  func.func @transform_4(%arg0: i32) -> (i32, i32) {
    %c0_i32 = arith.constant 0 : i32
    %c0_i32_0 = arith.constant 0 : i32
    %c0_i32_1 = arith.constant 0 : i32
    return %c0_i32, %c0_i32_0 : i32, i32
  }
  func.func @transform_5(%arg0: i32) -> (i32, i32) {
    %c0_i32 = arith.constant 0 : i32
    %c0_i32_0 = arith.constant 0 : i32
    %c0_i32_1 = arith.constant 0 : i32
    return %c0_i32, %c0_i32_0 : i32, i32
  }
  func.func @transform_6(%arg0: i32) -> (i32, i32) {
    %c0_i32 = arith.constant 0 : i32
    %c0_i32_0 = arith.constant 0 : i32
    %c0_i32_1 = arith.constant 0 : i32
    return %c0_i32, %c0_i32_0 : i32, i32
  }
  func.func @transform_7(%arg0: i32) -> (i32, i32, i32) {
    %c0_i32 = arith.constant 0 : i32
    %c0_i32_0 = arith.constant 0 : i32
    %c0_i32_1 = arith.constant 0 : i32
    return %arg0, %c0_i32, %c0_i32_0 : i32, i32, i32
  }
}

</mosaic_0001>

<llo_original>
// kernel: _lambda_.1
$region0: #{_lambda_.1}
  #allocation0 [shape = 'u32[]', space=smem, size = 0x4, offset = 0x4, fixed_abs, tag = 'smem constant byte address 0x4 - core index']
  #allocation1 [shape = 'u32[72,128]{1,0:T(1,128)}', space=vmem, size = 0x9000, scoped, tag = 'internal scratch']
  #allocation2 [shape = 'f32[328,8]{1,0:T(8,128)}', space=vmem, size = 0x29000, scoped, tag = 'scratch operand']
  #allocation3 [shape = 'f32[328,36]{1,0:T(8,128)}', space=vmem, size = 0x29000, scoped, tag = 'scratch operand']
  #allocation4 [shape = 'f32[64,72]{1,0:T(8,128)}', space=vmem, size = 0x8000, scoped, tag = 'scratch operand']
  #allocation5 [shape = 'f32[64,4]{1,0:T(8,128)}', space=vmem, size = 0x8000, scoped, tag = 'scratch operand']
  %s0 = inlined_call_operand.vmem [shape: f32[2,396,4], index: 0, kind: input, shape index: {}]
  %s1 = inlined_call_operand.vmem [shape: f32[36,8], index: 1, kind: input, shape index: {}]
  %s2 = inlined_call_operand.vmem [shape: f32[1,8], index: 2, kind: input, shape index: {}]
  %s3 = inlined_call_operand.vmem [shape: f32[72,8], index: 3, kind: input, shape index: {}]
  %s4 = inlined_call_operand.vmem [shape: f32[1,8], index: 4, kind: input, shape index: {}]
  %s5 = inlined_call_operand.vmem [shape: f32[4,8], index: 5, kind: input, shape index: {}]
  %s6 = inlined_call_operand.vmem [shape: f32[1,8], index: 6, kind: input, shape index: {}]
  %s7 = inlined_call_operand.vmem [shape: f32[2,64,8], index: 7, kind: output, shape index: {}]
  %s8 = sld [smem:[#allocation0]]
  $region61: #{_lambda_.1} parent=0
    _
  %s10 = ssub.s32 1, %s8
  %s11 = scalar_select 0, %s10, %s8
  loop: start=0, step=1, limit=4
  $region2: #{_lambda_.1} parent=0 // loop_pre_header
    _
  $region3: #{_lambda_.1} parent=0 // loop_header
    %s13 = sphi 0, %s17
    %p14 = scmp.ge.s32.totalorder %s13, 4
    %s23 = sphi 0, %s25
    %s26 = sphi 0, %s23
    %s27 = sphi 0, %s26
    %s43 = sphi 0, %s27
    %s47 = sphi 0, %s47
    %s49 = sphi 0, %s47
    %s50 = sphi 0, %s49
    %s64 = sphi 0, %s50
    %s68 = sphi 0, %s68
    %s70 = sphi 0, %s68
    %s71 = sphi 0, %s70
    %s85 = sphi 0, %s71
    %s89 = sphi 0, %s89
    %s91 = sphi 0, %s89
    %s92 = sphi 0, %s91
    %s106 = sphi 0, %s92
    %s110 = sphi 0, %s110
    %s112 = sphi 0, %s110
    %s113 = sphi 0, %s112
    %s127 = sphi 0, %s113
    %s131 = sphi 0, %s131
    %s133 = sphi 0, %s131
    %s134 = sphi 0, %s133
    %s148 = sphi 0, %s134
    %s152 = sphi 0, %s152
    %s154 = sphi 0, %s152
    %s155 = sphi 0, %s154
    %s169 = sphi 0, %s155
    %s175 = sphi 0, %s177
    %s178 = sphi 0, %s175
    %s179 = sphi 0, %s178
    %s195 = sphi 0, %s179
  $region4: #{_lambda_.1} parent=0 // loop_header_branch
    %16 = sbr.rel (%p14) target = $region8
  $region5: #{_lambda_.1} parent=0 // loop_body
    %s18 = ssub.s32 %s13, 1
    %s19 = ssub.s32 %s13, 2
    %s20 = sadd.s32 %s13, 1
    %s21 = ssub.s32 %s13, %s20
    %p22 = scmp.eq.s32.totalorder %s21, 0
    %s24 = sadd.s32 %s23, 1
    %s25 = scalar_select %p22, %s23, %s24
    %p28 = pneg %p22
    %p29 = scmp.eq.s32.totalorder %s13, 1
    %p30 = por %p28, %p29
    %p31 = scmp.ne.s32.totalorder %s23, %s26
    %p32 = scmp.eq.s32.totalorder %s13, 0
    %p33 = por %p31, %p32
    %p34 = scmp.ne.s32.totalorder %s23, %s26
    %p35 = scmp.eq.s32.totalorder %s18, 1
    %p36 = por %p34, %p35
    %p37 = scmp.ne.s32.totalorder %s26, %s27
    %p38 = scmp.eq.s32.totalorder %s18, 0
    %p39 = por %p37, %p38
    %p40 = scmp.ne.s32.totalorder %s26, %s27
    %p41 = scmp.eq.s32.totalorder %s19, 1
    %p42 = por %p40, %p41
    %p44 = scmp.ne.s32.totalorder %s27, %s43
    %p45 = scmp.eq.s32.totalorder %s19, 0
    %p46 = por %p44, %p45
    %s48 = sadd.s32 %s47, 1
    %p51 = scmp.eq.s32.totalorder %s13, 1
    %p52 = scmp.ne.s32.totalorder %s47, %s49
    %p53 = scmp.eq.s32.totalorder %s13, 0
    %p54 = por %p52, %p53
    %p55 = scmp.ne.s32.totalorder %s47, %s49
    %p56 = scmp.eq.s32.totalorder %s18, 1
    %p57 = por %p55, %p56
    %p58 = scmp.ne.s32.totalorder %s49, %s50
    %p59 = scmp.eq.s32.totalorder %s18, 0
    %p60 = por %p58, %p59
    %p61 = scmp.ne.s32.totalorder %s49, %s50
    %p62 = scmp.eq.s32.totalorder %s19, 1
    %p63 = por %p61, %p62
    %p65 = scmp.ne.s32.totalorder %s50, %s64
    %p66 = scmp.eq.s32.totalorder %s19, 0
    %p67 = por %p65, %p66
    %s69 = sadd.s32 %s68, 1
    %p72 = scmp.eq.s32.totalorder %s13, 1
    %p73 = scmp.ne.s32.totalorder %s68, %s70
    %p74 = scmp.eq.s32.totalorder %s13, 0
    %p75 = por %p73, %p74
    %p76 = scmp.ne.s32.totalorder %s68, %s70
    %p77 = scmp.eq.s32.totalorder %s18, 1
    %p78 = por %p76, %p77
    %p79 = scmp.ne.s32.totalorder %s70, %s71
    %p80 = scmp.eq.s32.totalorder %s18, 0
    %p81 = por %p79, %p80
    %p82 = scmp.ne.s32.totalorder %s70, %s71
    %p83 = scmp.eq.s32.totalorder %s19, 1
    %p84 = por %p82, %p83
    %p86 = scmp.ne.s32.totalorder %s71, %s85
    %p87 = scmp.eq.s32.totalorder %s19, 0
    %p88 = por %p86, %p87
    %s90 = sadd.s32 %s89, 1
    %p93 = scmp.eq.s32.totalorder %s13, 1
    %p94 = scmp.ne.s32.totalorder %s89, %s91
    %p95 = scmp.eq.s32.totalorder %s13, 0
    %p96 = por %p94, %p95
    %p97 = scmp.ne.s32.totalorder %s89, %s91
    %p98 = scmp.eq.s32.totalorder %s18, 1
    %p99 = por %p97, %p98
    %p100 = scmp.ne.s32.totalorder %s91, %s92
    %p101 = scmp.eq.s32.totalorder %s18, 0
    %p102 = por %p100, %p101
    %p103 = scmp.ne.s32.totalorder %s91, %s92
    %p104 = scmp.eq.s32.totalorder %s19, 1
    %p105 = por %p103, %p104
    %p107 = scmp.ne.s32.totalorder %s92, %s106
    %p108 = scmp.eq.s32.totalorder %s19, 0
    %p109 = por %p107, %p108
    %s111 = sadd.s32 %s110, 1
    %p114 = scmp.eq.s32.totalorder %s13, 1
    %p115 = scmp.ne.s32.totalorder %s110, %s112
    %p116 = scmp.eq.s32.totalorder %s13, 0
    %p117 = por %p115, %p116
    %p118 = scmp.ne.s32.totalorder %s110, %s112
    %p119 = scmp.eq.s32.totalorder %s18, 1
    %p120 = por %p118, %p119
    %p121 = scmp.ne.s32.totalorder %s112, %s113
    %p122 = scmp.eq.s32.totalorder %s18, 0
    %p123 = por %p121, %p122
    %p124 = scmp.ne.s32.totalorder %s112, %s113
    %p125 = scmp.eq.s32.totalorder %s19, 1
    %p126 = por %p124, %p125
    %p128 = scmp.ne.s32.totalorder %s113, %s127
    %p129 = scmp.eq.s32.totalorder %s19, 0
    %p130 = por %p128, %p129
    %s132 = sadd.s32 %s131, 1
    %p135 = scmp.eq.s32.totalorder %s13, 1
    %p136 = scmp.ne.s32.totalorder %s131, %s133
    %p137 = scmp.eq.s32.totalorder %s13, 0
    %p138 = por %p136, %p137
    %p139 = scmp.ne.s32.totalorder %s131, %s133
    %p140 = scmp.eq.s32.totalorder %s18, 1
    %p141 = por %p139, %p140
    %p142 = scmp.ne.s32.totalorder %s133, %s134
    %p143 = scmp.eq.s32.totalorder %s18, 0
    %p144 = por %p142, %p143
    %p145 = scmp.ne.s32.totalorder %s133, %s134
    %p146 = scmp.eq.s32.totalorder %s19, 1
    %p147 = por %p145, %p146
    %p149 = scmp.ne.s32.totalorder %s134, %s148
    %p150 = scmp.eq.s32.totalorder %s19, 0
    %p151 = por %p149, %p150
    %s153 = sadd.s32 %s152, 1
    %p156 = scmp.eq.s32.totalorder %s13, 1
    %p157 = scmp.ne.s32.totalorder %s152, %s154
    %p158 = scmp.eq.s32.totalorder %s13, 0
    %p159 = por %p157, %p158
    %p160 = scmp.ne.s32.totalorder %s152, %s154
    %p161 = scmp.eq.s32.totalorder %s18, 1
    %p162 = por %p160, %p161
    %p163 = scmp.ne.s32.totalorder %s154, %s155
    %p164 = scmp.eq.s32.totalorder %s18, 0
    %p165 = por %p163, %p164
    %p166 = scmp.ne.s32.totalorder %s154, %s155
    %p167 = scmp.eq.s32.totalorder %s19, 1
    %p168 = por %p166, %p167
    %p170 = scmp.ne.s32.totalorder %s155, %s169
    %p171 = scmp.eq.s32.totalorder %s19, 0
    %p172 = por %p170, %p171
    %s173 = ssub.s32 %s13, %s20
    %p174 = scmp.eq.s32.totalorder %s173, 0
    %s176 = sadd.s32 %s175, 1
    %s177 = scalar_select %p174, %s175, %s176
    %p180 = pneg %p174
    %p181 = scmp.eq.s32.totalorder %s13, 1
    %p182 = por %p180, %p181
    %p183 = scmp.ne.s32.totalorder %s175, %s178
    %p184 = scmp.eq.s32.totalorder %s13, 0
    %p185 = por %p183, %p184
    %p186 = scmp.ne.s32.totalorder %s175, %s178
    %p187 = scmp.eq.s32.totalorder %s18, 1
    %p188 = por %p186, %p187
    %p189 = scmp.ne.s32.totalorder %s178, %s179
    %p190 = scmp.eq.s32.totalorder %s18, 0
    %p191 = por %p189, %p190
    %p192 = scmp.ne.s32.totalorder %s178, %s179
    %p193 = scmp.eq.s32.totalorder %s19, 1
    %p194 = por %p192, %p193
    %p196 = scmp.ne.s32.totalorder %s179, %s195
    %p197 = scmp.eq.s32.totalorder %s19, 0
    %p198 = por %p196, %p197
    %p199 = scmp.le.s32.totalorder 1, %s13
    %p200 = scmp.lt.s32.totalorder %s13, 3
    %p201 = pnand %p199, %p200
    %p202 = pneg %p201
    // Predicated region
    $region9: #{_lambda_.1} parent=5 // pred_check
      _
    $region10: #{_lambda_.1} parent=5 // pred_check_branch
      %204 = sbr.rel (%p201) target = $region12
    $region11: #{_lambda_.1} parent=5 // pred_region
      %s205 = ssub.s32 %s13, 1
      // Predicated region
      $region13: #{_lambda_.1} parent=11 // pred_check
        %p206 = pneg %p60
      $region14: #{_lambda_.1} parent=11 // pred_check_branch
        %208 = sbr.rel (%p206) target = $region16
      $region15: #{_lambda_.1} parent=11 // pred_region
        _
      $region16: #{_lambda_.1} parent=11 // pred_fallthru
        _
      // Predicated region
      $region17: #{_lambda_.1} parent=11 // pred_check
        %p209 = pneg %p81
      $region18: #{_lambda_.1} parent=11 // pred_check_branch
        %211 = sbr.rel (%p209) target = $region20
      $region19: #{_lambda_.1} parent=11 // pred_region
        _
      $region20: #{_lambda_.1} parent=11 // pred_fallthru
        _
      // Predicated region
      $region21: #{_lambda_.1} parent=11 // pred_check
        %p212 = pneg %p102
      $region22: #{_lambda_.1} parent=11 // pred_check_branch
        %214 = sbr.rel (%p212) target = $region24
      $region23: #{_lambda_.1} parent=11 // pred_region
        _
      $region24: #{_lambda_.1} parent=11 // pred_fallthru
        _
      // Predicated region
      $region25: #{_lambda_.1} parent=11 // pred_check
        %p215 = pneg %p123
      $region26: #{_lambda_.1} parent=11 // pred_check_branch
        %217 = sbr.rel (%p215) target = $region28
      $region27: #{_lambda_.1} parent=11 // pred_region
        _
      $region28: #{_lambda_.1} parent=11 // pred_fallthru
        _
      // Predicated region
      $region29: #{_lambda_.1} parent=11 // pred_check
        %p218 = pneg %p144
      $region30: #{_lambda_.1} parent=11 // pred_check_branch
        %220 = sbr.rel (%p218) target = $region32
      $region31: #{_lambda_.1} parent=11 // pred_region
        _
      $region32: #{_lambda_.1} parent=11 // pred_fallthru
        _
      // Predicated region
      $region33: #{_lambda_.1} parent=11 // pred_check
        %p221 = pneg %p165
      $region34: #{_lambda_.1} parent=11 // pred_check_branch
        %223 = sbr.rel (%p221) target = $region36
      $region35: #{_lambda_.1} parent=11 // pred_region
        _
      $region36: #{_lambda_.1} parent=11 // pred_fallthru
        _
    $region12: #{_lambda_.1} parent=5 // pred_fallthru
      _
    %p224 = scmp.lt.s32.totalorder %s13, 2
    // Predicated region
    $region37: #{_lambda_.1} parent=5 // pred_check
      %p225 = pneg %p224
    $region38: #{_lambda_.1} parent=5 // pred_check_branch
      %227 = sbr.rel (%p225) target = $region40
    $region39: #{_lambda_.1} parent=5 // pred_region
      // Predicated region
      $region41: #{_lambda_.1} parent=39 // pred_check
        %p228 = pneg %p33
      $region42: #{_lambda_.1} parent=39 // pred_check_branch
        %230 = sbr.rel (%p228) target = $region44
      $region43: #{_lambda_.1} parent=39 // pred_region
        %p231 = scmp.lt.s32.totalorder %s13, 1
        %s232 = scalar_select %p231, %s13, 1
        %s233 = smul.addr %s232, 50
        %s234 = smul.addr %s233, 8
        %s235 = scalar_lea.vmem %s0, %s234
      $region44: #{_lambda_.1} parent=39 // pred_fallthru
        _
    $region40: #{_lambda_.1} parent=5 // pred_fallthru
      _
    %p236 = scmp.le.s32.totalorder 1, %s13
    %p237 = scmp.lt.s32.totalorder %s13, 3
    %p238 = pnand %p236, %p237
    %p239 = pneg %p238
    // Predicated region
    $region45: #{_lambda_.1} parent=5 // pred_check
      _
    $region46: #{_lambda_.1} parent=5 // pred_check_branch
      %241 = sbr.rel (%p238) target = $region48
    $region47: #{_lambda_.1} parent=5 // pred_region
      %s242 = ssub.s32 %s13, 1
      %p243 = scmp.lt.s32.totalorder %s18, 1
      %s244 = scalar_select %p243, %s18, 1
      %s245 = smul.addr %s244, 50
      %s246 = smul.addr %s245, 8
      %s247 = scalar_lea.vmem %s0, %s246
      %p248 = pneg %p39
      %p249 = pneg %p36
      %p250 = pneg %p60
      %p251 = pneg %p57
      %p252 = pneg %p81
      %p253 = pneg %p78
      %p254 = pneg %p102
      %p255 = pneg %p99
      %p256 = pneg %p123
      %p257 = pneg %p120
      %p258 = pneg %p144
      %p259 = pneg %p141
      %p260 = pneg %p165
      %p261 = pneg %p162
      %p262 = pneg %p191
      %p263 = pneg %p188
      %p264 = scmp.lt.s32.totalorder %s18, 1
      %s265 = scalar_select %p264, %s18, 1
      %s266 = smul.addr %s265, 8
      %s267 = smul.addr %s266, 8
      %s268 = scalar_lea.vmem %s7, %s267
      %p269 = scmp.lt.s32.totalorder %s18, 1
      %s270 = scalar_select %p269, %s18, 1
      %s271 = smul.addr %s270, 50
      %s272 = smul.addr %s271, 8
      %s273 = scalar_lea.vmem %s0, %s272
      %p274 = scmp.lt.s32.totalorder %s18, 1
      %s275 = scalar_select %p274, %s18, 1
      %s276 = smul.addr %s275, 8
      %s277 = smul.addr %s276, 8
      %s278 = scalar_lea.vmem %s7, %s277
      %v279 = vld [vmem:[%s273 + $0x11] sm:$0xff]
      %v280 = vld [vmem:[%s273 + $0x19] sm:$0xff]
      %v281 = vld [vmem:[%s273 + $0x21] sm:$0xff]
      %v282 = vld [vmem:[%s273 + $0x29] sm:$0xff]
      %v283 = vld [vmem:[%s273 + $0x31] sm:$0xff]
      %v284 = vld [vmem:[%s273 + $0x39] sm:$0xff]
      %v285 = vld [vmem:[%s273 + $0x41] sm:$0xff]
      %v286 = vld [vmem:[%s273 + $0x49] sm:$0xff]
      %v287 = vld [vmem:[%s273 + $0x51] sm:$0xff]
      %v288 = vld [vmem:[%s273 + $0x59] sm:$0xff]
      %v289 = vld [vmem:[%s273 + $0x61] sm:$0xff]
      %v290 = vld [vmem:[%s273 + $0x69] sm:$0xff]
      %v291 = vld [vmem:[%s273 + $0x71] sm:$0xff]
      %v292 = vld [vmem:[%s273 + $0x79] sm:$0xff]
      %v293 = vld [vmem:[%s273 + $0x81] sm:$0xff]
      %v294 = vld [vmem:[%s273 + $0x89] sm:$0xff]
      %v295 = vld [vmem:[%s273 + $0x91] sm:$0xff]
      %v296 = vld [vmem:[%s273 + $0x99] sm:$0xff]
      %v297 = vld [vmem:[%s273 + $0xa1] sm:$0xff]
      %v298 = vld [vmem:[%s273 + $0xa9] sm:$0xff]
      %v299 = vld [vmem:[%s273 + $0xb1] sm:$0xff]
      %v300 = vld [vmem:[%s273 + $0xb9] sm:$0xff]
      %v301 = vld [vmem:[%s273 + $0xc1] sm:$0xff]
      %v302 = vld [vmem:[%s273 + $0xc9] sm:$0xff]
      %v303 = vld [vmem:[%s273 + $0xd1] sm:$0xff]
      %v304 = vld [vmem:[%s273 + $0xd9] sm:$0xff]
      %v305 = vld [vmem:[%s273 + $0xe1] sm:$0xff]
      %v306 = vld [vmem:[%s273 + $0xe9] sm:$0xff]
      %v307 = vld [vmem:[%s273 + $0xf1] sm:$0xff]
      %v308 = vld [vmem:[%s273 + $0xf9] sm:$0xff]
      %v309 = vld [vmem:[%s273 + $0x101] sm:$0xff]
      %v310 = vld [vmem:[%s273 + $0x109] sm:$0xff]
      %v311 = vld [vmem:[%s273 + $0x111] sm:$0xff]
      %v312 = vld [vmem:[%s273 + $0x119] sm:$0xff]
      %v313 = vld [vmem:[%s273 + $0x121] sm:$0xff]
      %v314 = vld [vmem:[%s273 + $0x129] sm:$0xff]
      %v315 = vld [vmem:[%s273 + $0x131] sm:$0xff]
      %v316 = vld [vmem:[%s273 + $0x139] sm:$0xff]
      %v317 = vld [vmem:[%s273 + $0x141] sm:$0xff]
      %v318 = vld [vmem:[%s273 + $0x149] sm:$0xff]
      %v319 = vld [vmem:[%s273 + $0x151] sm:$0xff]
      %vm320 = vcmask 31744
      %321 = vst.msk [vmem:[#allocation3] sm:$0xff] %vm320, %v279
      %322 = vst.msk [vmem:[#allocation3 + $0x8] sm:$0xff] %vm320, %v280
      %323 = vst.msk [vmem:[#allocation3 + $0x10] sm:$0xff] %vm320, %v281
      %324 = vst.msk [vmem:[#allocation3 + $0x18] sm:$0xff] %vm320, %v282
      %325 = vst.msk [vmem:[#allocation3 + $0x20] sm:$0xff] %vm320, %v283
      %326 = vst.msk [vmem:[#allocation3 + $0x28] sm:$0xff] %vm320, %v284
      %327 = vst.msk [vmem:[#allocation3 + $0x30] sm:$0xff] %vm320, %v285
      %328 = vst.msk [vmem:[#allocation3 + $0x38] sm:$0xff] %vm320, %v286
      %329 = vst.msk [vmem:[#allocation3 + $0x40] sm:$0xff] %vm320, %v287
      %330 = vst.msk [vmem:[#allocation3 + $0x48] sm:$0xff] %vm320, %v288
      %331 = vst.msk [vmem:[#allocation3 + $0x50] sm:$0xff] %vm320, %v289
      %332 = vst.msk [vmem:[#allocation3 + $0x58] sm:$0xff] %vm320, %v290
      %333 = vst.msk [vmem:[#allocation3 + $0x60] sm:$0xff] %vm320, %v291
      %334 = vst.msk [vmem:[#allocation3 + $0x68] sm:$0xff] %vm320, %v292
      %335 = vst.msk [vmem:[#allocation3 + $0x70] sm:$0xff] %vm320, %v293
      %336 = vst.msk [vmem:[#allocation3 + $0x78] sm:$0xff] %vm320, %v294
      %337 = vst.msk [vmem:[#allocation3 + $0x80] sm:$0xff] %vm320, %v295
      %338 = vst.msk [vmem:[#allocation3 + $0x88] sm:$0xff] %vm320, %v296
      %339 = vst.msk [vmem:[#allocation3 + $0x90] sm:$0xff] %vm320, %v297
      %340 = vst.msk [vmem:[#allocation3 + $0x98] sm:$0xff] %vm320, %v298
      %341 = vst.msk [vmem:[#allocation3 + $0xa0] sm:$0xff] %vm320, %v299
      %342 = vst.msk [vmem:[#allocation3 + $0xa8] sm:$0xff] %vm320, %v300
      %343 = vst.msk [vmem:[#allocation3 + $0xb0] sm:$0xff] %vm320, %v301
      %344 = vst.msk [vmem:[#allocation3 + $0xb8] sm:$0xff] %vm320, %v302
      %345 = vst.msk [vmem:[#allocation3 + $0xc0] sm:$0xff] %vm320, %v303
      %346 = vst.msk [vmem:[#allocation3 + $0xc8] sm:$0xff] %vm320, %v304
      %347 = vst.msk [vmem:[#allocation3 + $0xd0] sm:$0xff] %vm320, %v305
      %348 = vst.msk [vmem:[#allocation3 + $0xd8] sm:$0xff] %vm320, %v306
      %349 = vst.msk [vmem:[#allocation3 + $0xe0] sm:$0xff] %vm320, %v307
      %350 = vst.msk [vmem:[#allocation3 + $0xe8] sm:$0xff] %vm320, %v308
      %351 = vst.msk [vmem:[#allocation3 + $0xf0] sm:$0xff] %vm320, %v309
      %352 = vst.msk [vmem:[#allocation3 + $0xf8] sm:$0xff] %vm320, %v310
      %353 = vst.msk [vmem:[#allocation3 + $0x100] sm:$0xff] %vm320, %v311
      %354 = vst.msk [vmem:[#allocation3 + $0x108] sm:$0xff] %vm320, %v312
      %355 = vst.msk [vmem:[#allocation3 + $0x110] sm:$0xff] %vm320, %v313
      %356 = vst.msk [vmem:[#allocation3 + $0x118] sm:$0xff] %vm320, %v314
      %357 = vst.msk [vmem:[#allocation3 + $0x120] sm:$0xff] %vm320, %v315
      %358 = vst.msk [vmem:[#allocation3 + $0x128] sm:$0xff] %vm320, %v316
      %359 = vst.msk [vmem:[#allocation3 + $0x130] sm:$0xff] %vm320, %v317
      %360 = vst.msk [vmem:[#allocation3 + $0x138] sm:$0xff] %vm320, %v318
      %361 = vst.msk [vmem:[#allocation3 + $0x140] sm:$0xff] %vm320, %v319
      %v362 = vld [vmem:[%s273 + $0x12] sm:$0xff]
      %v363 = vld [vmem:[%s273 + $0x1a] sm:$0xff]
      %v364 = vld [vmem:[%s273 + $0x22] sm:$0xff]
      %v365 = vld [vmem:[%s273 + $0x2a] sm:$0xff]
      %v366 = vld [vmem:[%s273 + $0x32] sm:$0xff]
      %v367 = vld [vmem:[%s273 + $0x3a] sm:$0xff]
      %v368 = vld [vmem:[%s273 + $0x42] sm:$0xff]
      %v369 = vld [vmem:[%s273 + $0x4a] sm:$0xff]
      %v370 = vld [vmem:[%s273 + $0x52] sm:$0xff]
      %v371 = vld [vmem:[%s273 + $0x5a] sm:$0xff]
      %v372 = vld [vmem:[%s273 + $0x62] sm:$0xff]
      %v373 = vld [vmem:[%s273 + $0x6a] sm:$0xff]
      %v374 = vld [vmem:[%s273 + $0x72] sm:$0xff]
      %v375 = vld [vmem:[%s273 + $0x7a] sm:$0xff]
      %v376 = vld [vmem:[%s273 + $0x82] sm:$0xff]
      %v377 = vld [vmem:[%s273 + $0x8a] sm:$0xff]
      %v378 = vld [vmem:[%s273 + $0x92] sm:$0xff]
      %v379 = vld [vmem:[%s273 + $0x9a] sm:$0xff]
      %v380 = vld [vmem:[%s273 + $0xa2] sm:$0xff]
      %v381 = vld [vmem:[%s273 + $0xaa] sm:$0xff]
      %v382 = vld [vmem:[%s273 + $0xb2] sm:$0xff]
      %v383 = vld [vmem:[%s273 + $0xba] sm:$0xff]
      %v384 = vld [vmem:[%s273 + $0xc2] sm:$0xff]
      %v385 = vld [vmem:[%s273 + $0xca] sm:$0xff]
      %v386 = vld [vmem:[%s273 + $0xd2] sm:$0xff]
      %v387 = vld [vmem:[%s273 + $0xda] sm:$0xff]
      %v388 = vld [vmem:[%s273 + $0xe2] sm:$0xff]
      %v389 = vld [vmem:[%s273 + $0xea] sm:$0xff]
      %v390 = vld [vmem:[%s273 + $0xf2] sm:$0xff]
      %v391 = vld [vmem:[%s273 + $0xfa] sm:$0xff]
      %v392 = vld [vmem:[%s273 + $0x102] sm:$0xff]
      %v393 = vld [vmem:[%s273 + $0x10a] sm:$0xff]
      %v394 = vld [vmem:[%s273 + $0x112] sm:$0xff]
      %v395 = vld [vmem:[%s273 + $0x11a] sm:$0xff]
      %v396 = vld [vmem:[%s273 + $0x122] sm:$0xff]
      %v397 = vld [vmem:[%s273 + $0x12a] sm:$0xff]
      %v398 = vld [vmem:[%s273 + $0x132] sm:$0xff]
      %v399 = vld [vmem:[%s273 + $0x13a] sm:$0xff]
      %v400 = vld [vmem:[%s273 + $0x142] sm:$0xff]
      %v401 = vld [vmem:[%s273 + $0x14a] sm:$0xff]
      %v402 = vld [vmem:[%s273 + $0x152] sm:$0xff]
      %444 = vrot.lane.b32.xlu0 %v362, 4
      %v445 = vpop.permute.xlu0 %444
      %446 = vrot.lane.b32.xlu0 %v363, 4
      %v447 = vpop.permute.xlu0 %446
      %448 = vrot.lane.b32.xlu0 %v364, 4
      %v449 = vpop.permute.xlu0 %448
      %450 = vrot.lane.b32.xlu0 %v365, 4
      %v451 = vpop.permute.xlu0 %450
      %452 = vrot.lane.b32.xlu0 %v366, 4
      %v453 = vpop.permute.xlu0 %452
      %454 = vrot.lane.b32.xlu0 %v367, 4
      %v455 = vpop.permute.xlu0 %454
      %456 = vrot.lane.b32.xlu0 %v368, 4
      %v457 = vpop.permute.xlu0 %456
      %458 = vrot.lane.b32.xlu0 %v369, 4
      %v459 = vpop.permute.xlu0 %458
      %460 = vrot.lane.b32.xlu0 %v370, 4
      %v461 = vpop.permute.xlu0 %460
      %462 = vrot.lane.b32.xlu0 %v371, 4
      %v463 = vpop.permute.xlu0 %462
      %464 = vrot.lane.b32.xlu0 %v372, 4
      %v465 = vpop.permute.xlu0 %464
      %466 = vrot.lane.b32.xlu0 %v373, 4
      %v467 = vpop.permute.xlu0 %466
      %468 = vrot.lane.b32.xlu0 %v374, 4
      %v469 = vpop.permute.xlu0 %468
      %470 = vrot.lane.b32.xlu0 %v375, 4
      %v471 = vpop.permute.xlu0 %470
      %472 = vrot.lane.b32.xlu0 %v376, 4
      %v473 = vpop.permute.xlu0 %472
      %474 = vrot.lane.b32.xlu0 %v377, 4
      %v475 = vpop.permute.xlu0 %474
      %476 = vrot.lane.b32.xlu0 %v378, 4
      %v477 = vpop.permute.xlu0 %476
      %478 = vrot.lane.b32.xlu0 %v379, 4
      %v479 = vpop.permute.xlu0 %478
      %480 = vrot.lane.b32.xlu0 %v380, 4
      %v481 = vpop.permute.xlu0 %480
      %482 = vrot.lane.b32.xlu0 %v381, 4
      %v483 = vpop.permute.xlu0 %482
      %484 = vrot.lane.b32.xlu0 %v382, 4
      %v485 = vpop.permute.xlu0 %484
      %486 = vrot.lane.b32.xlu0 %v383, 4
      %v487 = vpop.permute.xlu0 %486
      %488 = vrot.lane.b32.xlu0 %v384, 4
      %v489 = vpop.permute.xlu0 %488
      %490 = vrot.lane.b32.xlu0 %v385, 4
      %v491 = vpop.permute.xlu0 %490
      %492 = vrot.lane.b32.xlu0 %v386, 4
      %v493 = vpop.permute.xlu0 %492
      %494 = vrot.lane.b32.xlu0 %v387, 4
      %v495 = vpop.permute.xlu0 %494
      %496 = vrot.lane.b32.xlu0 %v388, 4
      %v497 = vpop.permute.xlu0 %496
      %498 = vrot.lane.b32.xlu0 %v389, 4
      %v499 = vpop.permute.xlu0 %498
      %500 = vrot.lane.b32.xlu0 %v390, 4
      %v501 = vpop.permute.xlu0 %500
      %502 = vrot.lane.b32.xlu0 %v391, 4
      %v503 = vpop.permute.xlu0 %502
      %504 = vrot.lane.b32.xlu0 %v392, 4
      %v505 = vpop.permute.xlu0 %504
      %506 = vrot.lane.b32.xlu0 %v393, 4
      %v507 = vpop.permute.xlu0 %506
      %508 = vrot.lane.b32.xlu0 %v394, 4
      %v509 = vpop.permute.xlu0 %508
      %510 = vrot.lane.b32.xlu0 %v395, 4
      %v511 = vpop.permute.xlu0 %510
      %512 = vrot.lane.b32.xlu0 %v396, 4
      %v513 = vpop.permute.xlu0 %512
      %514 = vrot.lane.b32.xlu0 %v397, 4
      %v515 = vpop.permute.xlu0 %514
      %516 = vrot.lane.b32.xlu0 %v398, 4
      %v517 = vpop.permute.xlu0 %516
      %518 = vrot.lane.b32.xlu0 %v399, 4
      %v519 = vpop.permute.xlu0 %518
      %520 = vrot.lane.b32.xlu0 %v400, 4
      %v521 = vpop.permute.xlu0 %520
      %522 = vrot.lane.b32.xlu0 %v401, 4
      %v523 = vpop.permute.xlu0 %522
      %524 = vrot.lane.b32.xlu0 %v402, 4
      %v525 = vpop.permute.xlu0 %524
      %vm567 = vcmask 64544
      %568 = vst.msk [vmem:[#allocation3] sm:$0xff] %vm567, %v445
      %569 = vst.msk [vmem:[#allocation3 + $0x8] sm:$0xff] %vm567, %v447
      %570 = vst.msk [vmem:[#allocation3 + $0x10] sm:$0xff] %vm567, %v449
      %571 = vst.msk [vmem:[#allocation3 + $0x18] sm:$0xff] %vm567, %v451
      %572 = vst.msk [vmem:[#allocation3 + $0x20] sm:$0xff] %vm567, %v453
      %573 = vst.msk [vmem:[#allocation3 + $0x28] sm:$0xff] %vm567, %v455
      %574 = vst.msk [vmem:[#allocation3 + $0x30] sm:$0xff] %vm567, %v457
      %575 = vst.msk [vmem:[#allocation3 + $0x38] sm:$0xff] %vm567, %v459
      %576 = vst.msk [vmem:[#allocation3 + $0x40] sm:$0xff] %vm567, %v461
      %577 = vst.msk [vmem:[#allocation3 + $0x48] sm:$0xff] %vm567, %v463
      %578 = vst.msk [vmem:[#allocation3 + $0x50] sm:$0xff] %vm567, %v465
      %579 = vst.msk [vmem:[#allocation3 + $0x58] sm:$0xff] %vm567, %v467
      %580 = vst.msk [vmem:[#allocation3 + $0x60] sm:$0xff] %vm567, %v469
      %581 = vst.msk [vmem:[#allocation3 + $0x68] sm:$0xff] %vm567, %v471
      %582 = vst.msk [vmem:[#allocation3 + $0x70] sm:$0xff] %vm567, %v473
      %583 = vst.msk [vmem:[#allocation3 + $0x78] sm:$0xff] %vm567, %v475
      %584 = vst.msk [vmem:[#allocation3 + $0x80] sm:$0xff] %vm567, %v477
      %585 = vst.msk [vmem:[#allocation3 + $0x88] sm:$0xff] %vm567, %v479
      %586 = vst.msk [vmem:[#allocation3 + $0x90] sm:$0xff] %vm567, %v481
      %587 = vst.msk [vmem:[#allocation3 + $0x98] sm:$0xff] %vm567, %v483
      %588 = vst.msk [vmem:[#allocation3 + $0xa0] sm:$0xff] %vm567, %v485
      %589 = vst.msk [vmem:[#allocation3 + $0xa8] sm:$0xff] %vm567, %v487
      %590 = vst.msk [vmem:[#allocation3 + $0xb0] sm:$0xff] %vm567, %v489
      %591 = vst.msk [vmem:[#allocation3 + $0xb8] sm:$0xff] %vm567, %v491
      %592 = vst.msk [vmem:[#allocation3 + $0xc0] sm:$0xff] %vm567, %v493
      %593 = vst.msk [vmem:[#allocation3 + $0xc8] sm:$0xff] %vm567, %v495
      %594 = vst.msk [vmem:[#allocation3 + $0xd0] sm:$0xff] %vm567, %v497
      %595 = vst.msk [vmem:[#allocation3 + $0xd8] sm:$0xff] %vm567, %v499
      %596 = vst.msk [vmem:[#allocation3 + $0xe0] sm:$0xff] %vm567, %v501
      %597 = vst.msk [vmem:[#allocation3 + $0xe8] sm:$0xff] %vm567, %v503
      %598 = vst.msk [vmem:[#allocation3 + $0xf0] sm:$0xff] %vm567, %v505
      %599 = vst.msk [vmem:[#allocation3 + $0xf8] sm:$0xff] %vm567, %v507
      %600 = vst.msk [vmem:[#allocation3 + $0x100] sm:$0xff] %vm567, %v509
      %601 = vst.msk [vmem:[#allocation3 + $0x108] sm:$0xff] %vm567, %v511
      %602 = vst.msk [vmem:[#allocation3 + $0x110] sm:$0xff] %vm567, %v513
      %603 = vst.msk [vmem:[#allocation3 + $0x118] sm:$0xff] %vm567, %v515
      %604 = vst.msk [vmem:[#allocation3 + $0x120] sm:$0xff] %vm567, %v517
      %605 = vst.msk [vmem:[#allocation3 + $0x128] sm:$0xff] %vm567, %v519
      %606 = vst.msk [vmem:[#allocation3 + $0x130] sm:$0xff] %vm567, %v521
      %607 = vst.msk [vmem:[#allocation3 + $0x138] sm:$0xff] %vm567, %v523
      %608 = vst.msk [vmem:[#allocation3 + $0x140] sm:$0xff] %vm567, %v525
      %v609 = vld [vmem:[%s273 + $0x13] sm:$0xff]
      %v610 = vld [vmem:[%s273 + $0x1b] sm:$0xff]
      %v611 = vld [vmem:[%s273 + $0x23] sm:$0xff]
      %v612 = vld [vmem:[%s273 + $0x2b] sm:$0xff]
      %v613 = vld [vmem:[%s273 + $0x33] sm:$0xff]
      %v614 = vld [vmem:[%s273 + $0x3b] sm:$0xff]
      %v615 = vld [vmem:[%s273 + $0x43] sm:$0xff]
      %v616 = vld [vmem:[%s273 + $0x4b] sm:$0xff]
      %v617 = vld [vmem:[%s273 + $0x53] sm:$0xff]
      %v618 = vld [vmem:[%s273 + $0x5b] sm:$0xff]
      %v619 = vld [vmem:[%s273 + $0x63] sm:$0xff]
      %v620 = vld [vmem:[%s273 + $0x6b] sm:$0xff]
      %v621 = vld [vmem:[%s273 + $0x73] sm:$0xff]
      %v622 = vld [vmem:[%s273 + $0x7b] sm:$0xff]
      %v623 = vld [vmem:[%s273 + $0x83] sm:$0xff]
      %v624 = vld [vmem:[%s273 + $0x8b] sm:$0xff]
      %v625 = vld [vmem:[%s273 + $0x93] sm:$0xff]
      %v626 = vld [vmem:[%s273 + $0x9b] sm:$0xff]
      %v627 = vld [vmem:[%s273 + $0xa3] sm:$0xff]
      %v628 = vld [vmem:[%s273 + $0xab] sm:$0xff]
      %v629 = vld [vmem:[%s273 + $0xb3] sm:$0xff]
      %v630 = vld [vmem:[%s273 + $0xbb] sm:$0xff]
      %v631 = vld [vmem:[%s273 + $0xc3] sm:$0xff]
      %v632 = vld [vmem:[%s273 + $0xcb] sm:$0xff]
      %v633 = vld [vmem:[%s273 + $0xd3] sm:$0xff]
      %v634 = vld [vmem:[%s273 + $0xdb] sm:$0xff]
      %v635 = vld [vmem:[%s273 + $0xe3] sm:$0xff]
      %v636 = vld [vmem:[%s273 + $0xeb] sm:$0xff]
      %v637 = vld [vmem:[%s273 + $0xf3] sm:$0xff]
      %v638 = vld [vmem:[%s273 + $0xfb] sm:$0xff]
      %v639 = vld [vmem:[%s273 + $0x103] sm:$0xff]
      %v640 = vld [vmem:[%s273 + $0x10b] sm:$0xff]
      %v641 = vld [vmem:[%s273 + $0x113] sm:$0xff]
      %v642 = vld [vmem:[%s273 + $0x11b] sm:$0xff]
      %v643 = vld [vmem:[%s273 + $0x123] sm:$0xff]
      %v644 = vld [vmem:[%s273 + $0x12b] sm:$0xff]
      %v645 = vld [vmem:[%s273 + $0x133] sm:$0xff]
      %v646 = vld [vmem:[%s273 + $0x13b] sm:$0xff]
      %v647 = vld [vmem:[%s273 + $0x143] sm:$0xff]
      %v648 = vld [vmem:[%s273 + $0x14b] sm:$0xff]
      %v649 = vld [vmem:[%s273 + $0x153] sm:$0xff]
      %691 = vrot.lane.b32.xlu0 %v609, 8
      %v692 = vpop.permute.xlu0 %691
      %693 = vrot.lane.b32.xlu0 %v610, 8
      %v694 = vpop.permute.xlu0 %693
      %695 = vrot.lane.b32.xlu0 %v611, 8
      %v696 = vpop.permute.xlu0 %695
      %697 = vrot.lane.b32.xlu0 %v612, 8
      %v698 = vpop.permute.xlu0 %697
      %699 = vrot.lane.b32.xlu0 %v613, 8
      %v700 = vpop.permute.xlu0 %699
      %701 = vrot.lane.b32.xlu0 %v614, 8
      %v702 = vpop.permute.xlu0 %701
      %703 = vrot.lane.b32.xlu0 %v615, 8
      %v704 = vpop.permute.xlu0 %703
      %705 = vrot.lane.b32.xlu0 %v616, 8
      %v706 = vpop.permute.xlu0 %705
      %707 = vrot.lane.b32.xlu0 %v617, 8
      %v708 = vpop.permute.xlu0 %707
      %709 = vrot.lane.b32.xlu0 %v618, 8
      %v710 = vpop.permute.xlu0 %709
      %711 = vrot.lane.b32.xlu0 %v619, 8
      %v712 = vpop.permute.xlu0 %711
      %713 = vrot.lane.b32.xlu0 %v620, 8
      %v714 = vpop.permute.xlu0 %713
      %715 = vrot.lane.b32.xlu0 %v621, 8
      %v716 = vpop.permute.xlu0 %715
      %717 = vrot.lane.b32.xlu0 %v622, 8
      %v718 = vpop.permute.xlu0 %717
      %719 = vrot.lane.b32.xlu0 %v623, 8
      %v720 = vpop.permute.xlu0 %719
      %721 = vrot.lane.b32.xlu0 %v624, 8
      %v722 = vpop.permute.xlu0 %721
      %723 = vrot.lane.b32.xlu0 %v625, 8
      %v724 = vpop.permute.xlu0 %723
      %725 = vrot.lane.b32.xlu0 %v626, 8
      %v726 = vpop.permute.xlu0 %725
      %727 = vrot.lane.b32.xlu0 %v627, 8
      %v728 = vpop.permute.xlu0 %727
      %729 = vrot.lane.b32.xlu0 %v628, 8
      %v730 = vpop.permute.xlu0 %729
      %731 = vrot.lane.b32.xlu0 %v629, 8
      %v732 = vpop.permute.xlu0 %731
      %733 = vrot.lane.b32.xlu0 %v630, 8
      %v734 = vpop.permute.xlu0 %733
      %735 = vrot.lane.b32.xlu0 %v631, 8
      %v736 = vpop.permute.xlu0 %735
      %737 = vrot.lane.b32.xlu0 %v632, 8
      %v738 = vpop.permute.xlu0 %737
      %739 = vrot.lane.b32.xlu0 %v633, 8
      %v740 = vpop.permute.xlu0 %739
      %741 = vrot.lane.b32.xlu0 %v634, 8
      %v742 = vpop.permute.xlu0 %741
      %743 = vrot.lane.b32.xlu0 %v635, 8
      %v744 = vpop.permute.xlu0 %743
      %745 = vrot.lane.b32.xlu0 %v636, 8
      %v746 = vpop.permute.xlu0 %745
      %747 = vrot.lane.b32.xlu0 %v637, 8
      %v748 = vpop.permute.xlu0 %747
      %749 = vrot.lane.b32.xlu0 %v638, 8
      %v750 = vpop.permute.xlu0 %749
      %751 = vrot.lane.b32.xlu0 %v639, 8
      %v752 = vpop.permute.xlu0 %751
      %753 = vrot.lane.b32.xlu0 %v640, 8
      %v754 = vpop.permute.xlu0 %753
      %755 = vrot.lane.b32.xlu0 %v641, 8
      %v756 = vpop.permute.xlu0 %755
      %757 = vrot.lane.b32.xlu0 %v642, 8
      %v758 = vpop.permute.xlu0 %757
      %759 = vrot.lane.b32.xlu0 %v643, 8
      %v760 = vpop.permute.xlu0 %759
      %761 = vrot.lane.b32.xlu0 %v644, 8
      %v762 = vpop.permute.xlu0 %761
      %763 = vrot.lane.b32.xlu0 %v645, 8
      %v764 = vpop.permute.xlu0 %763
      %765 = vrot.lane.b32.xlu0 %v646, 8
      %v766 = vpop.permute.xlu0 %765
      %767 = vrot.lane.b32.xlu0 %v647, 8
      %v768 = vpop.permute.xlu0 %767
      %769 = vrot.lane.b32.xlu0 %v648, 8
      %v770 = vpop.permute.xlu0 %769
      %771 = vrot.lane.b32.xlu0 %v649, 8
      %v772 = vpop.permute.xlu0 %771
      %vm814 = vcmask 97344
      %815 = vst.msk [vmem:[#allocation3] sm:$0xff] %vm814, %v692
      %816 = vst.msk [vmem:[#allocation3 + $0x8] sm:$0xff] %vm814, %v694
      %817 = vst.msk [vmem:[#allocation3 + $0x10] sm:$0xff] %vm814, %v696
      %818 = vst.msk [vmem:[#allocation3 + $0x18] sm:$0xff] %vm814, %v698
      %819 = vst.msk [vmem:[#allocation3 + $0x20] sm:$0xff] %vm814, %v700
      %820 = vst.msk [vmem:[#allocation3 + $0x28] sm:$0xff] %vm814, %v702
      %821 = vst.msk [vmem:[#allocation3 + $0x30] sm:$0xff] %vm814, %v704
      %822 = vst.msk [vmem:[#allocation3 + $0x38] sm:$0xff] %vm814, %v706
      %823 = vst.msk [vmem:[#allocation3 + $0x40] sm:$0xff] %vm814, %v708
      %824 = vst.msk [vmem:[#allocation3 + $0x48] sm:$0xff] %vm814, %v710
      %825 = vst.msk [vmem:[#allocation3 + $0x50] sm:$0xff] %vm814, %v712
      %826 = vst.msk [vmem:[#allocation3 + $0x58] sm:$0xff] %vm814, %v714
      %827 = vst.msk [vmem:[#allocation3 + $0x60] sm:$0xff] %vm814, %v716
      %828 = vst.msk [vmem:[#allocation3 + $0x68] sm:$0xff] %vm814, %v718
      %829 = vst.msk [vmem:[#allocation3 + $0x70] sm:$0xff] %vm814, %v720
      %830 = vst.msk [vmem:[#allocation3 + $0x78] sm:$0xff] %vm814, %v722
      %831 = vst.msk [vmem:[#allocation3 + $0x80] sm:$0xff] %vm814, %v724
      %832 = vst.msk [vmem:[#allocation3 + $0x88] sm:$0xff] %vm814, %v726
      %833 = vst.msk [vmem:[#allocation3 + $0x90] sm:$0xff] %vm814, %v728
      %834 = vst.msk [vmem:[#allocation3 + $0x98] sm:$0xff] %vm814, %v730
      %835 = vst.msk [vmem:[#allocation3 + $0xa0] sm:$0xff] %vm814, %v732
      %836 = vst.msk [vmem:[#allocation3 + $0xa8] sm:$0xff] %vm814, %v734
      %837 = vst.msk [vmem:[#allocation3 + $0xb0] sm:$0xff] %vm814, %v736
      %838 = vst.msk [vmem:[#allocation3 + $0xb8] sm:$0xff] %vm814, %v738
      %839 = vst.msk [vmem:[#allocation3 + $0xc0] sm:$0xff] %vm814, %v740
      %840 = vst.msk [vmem:[#allocation3 + $0xc8] sm:$0xff] %vm814, %v742
      %841 = vst.msk [vmem:[#allocation3 + $0xd0] sm:$0xff] %vm814, %v744
      %842 = vst.msk [vmem:[#allocation3 + $0xd8] sm:$0xff] %vm814, %v746
      %843 = vst.msk [vmem:[#allocation3 + $0xe0] sm:$0xff] %vm814, %v748
      %844 = vst.msk [vmem:[#allocation3 + $0xe8] sm:$0xff] %vm814, %v750
      %845 = vst.msk [vmem:[#allocation3 + $0xf0] sm:$0xff] %vm814, %v752
      %846 = vst.msk [vmem:[#allocation3 + $0xf8] sm:$0xff] %vm814, %v754
      %847 = vst.msk [vmem:[#allocation3 + $0x100] sm:$0xff] %vm814, %v756
      %848 = vst.msk [vmem:[#allocation3 + $0x108] sm:$0xff] %vm814, %v758
      %849 = vst.msk [vmem:[#allocation3 + $0x110] sm:$0xff] %vm814, %v760
      %850 = vst.msk [vmem:[#allocation3 + $0x118] sm:$0xff] %vm814, %v762
      %851 = vst.msk [vmem:[#allocation3 + $0x120] sm:$0xff] %vm814, %v764
      %852 = vst.msk [vmem:[#allocation3 + $0x128] sm:$0xff] %vm814, %v766
      %853 = vst.msk [vmem:[#allocation3 + $0x130] sm:$0xff] %vm814, %v768
      %854 = vst.msk [vmem:[#allocation3 + $0x138] sm:$0xff] %vm814, %v770
      %855 = vst.msk [vmem:[#allocation3 + $0x140] sm:$0xff] %vm814, %v772
      %v856 = vld [vmem:[%s273 + $0x23] sm:$0xff]
      %v857 = vld [vmem:[%s273 + $0x2b] sm:$0xff]
      %v858 = vld [vmem:[%s273 + $0x33] sm:$0xff]
      %v859 = vld [vmem:[%s273 + $0x3b] sm:$0xff]
      %v860 = vld [vmem:[%s273 + $0x43] sm:$0xff]
      %v861 = vld [vmem:[%s273 + $0x4b] sm:$0xff]
      %v862 = vld [vmem:[%s273 + $0x53] sm:$0xff]
      %v863 = vld [vmem:[%s273 + $0x5b] sm:$0xff]
      %v864 = vld [vmem:[%s273 + $0x63] sm:$0xff]
      %v865 = vld [vmem:[%s273 + $0x6b] sm:$0xff]
      %v866 = vld [vmem:[%s273 + $0x73] sm:$0xff]
      %v867 = vld [vmem:[%s273 + $0x7b] sm:$0xff]
      %v868 = vld [vmem:[%s273 + $0x83] sm:$0xff]
      %v869 = vld [vmem:[%s273 + $0x8b] sm:$0xff]
      %v870 = vld [vmem:[%s273 + $0x93] sm:$0xff]
      %v871 = vld [vmem:[%s273 + $0x9b] sm:$0xff]
      %v872 = vld [vmem:[%s273 + $0xa3] sm:$0xff]
      %v873 = vld [vmem:[%s273 + $0xab] sm:$0xff]
      %v874 = vld [vmem:[%s273 + $0xb3] sm:$0xff]
      %v875 = vld [vmem:[%s273 + $0xbb] sm:$0xff]
      %v876 = vld [vmem:[%s273 + $0xc3] sm:$0xff]
      %v877 = vld [vmem:[%s273 + $0xcb] sm:$0xff]
      %v878 = vld [vmem:[%s273 + $0xd3] sm:$0xff]
      %v879 = vld [vmem:[%s273 + $0xdb] sm:$0xff]
      %v880 = vld [vmem:[%s273 + $0xe3] sm:$0xff]
      %v881 = vld [vmem:[%s273 + $0xeb] sm:$0xff]
      %v882 = vld [vmem:[%s273 + $0xf3] sm:$0xff]
      %v883 = vld [vmem:[%s273 + $0xfb] sm:$0xff]
      %v884 = vld [vmem:[%s273 + $0x103] sm:$0xff]
      %v885 = vld [vmem:[%s273 + $0x10b] sm:$0xff]
      %v886 = vld [vmem:[%s273 + $0x113] sm:$0xff]
      %v887 = vld [vmem:[%s273 + $0x11b] sm:$0xff]
      %v888 = vld [vmem:[%s273 + $0x123] sm:$0xff]
      %v889 = vld [vmem:[%s273 + $0x12b] sm:$0xff]
      %v890 = vld [vmem:[%s273 + $0x133] sm:$0xff]
      %v891 = vld [vmem:[%s273 + $0x13b] sm:$0xff]
      %v892 = vld [vmem:[%s273 + $0x143] sm:$0xff]
      %v893 = vld [vmem:[%s273 + $0x14b] sm:$0xff]
      %v894 = vld [vmem:[%s273 + $0x153] sm:$0xff]
      %v895 = vld [vmem:[%s273 + $0x15b] sm:$0xff]
      %v896 = vld [vmem:[%s273 + $0x163] sm:$0xff]
      %938 = vrot.lane.b32.xlu0 %v856, 12
      %v939 = vpop.permute.xlu0 %938
      %940 = vrot.lane.b32.xlu0 %v857, 12
      %v941 = vpop.permute.xlu0 %940
      %942 = vrot.lane.b32.xlu0 %v858, 12
      %v943 = vpop.permute.xlu0 %942
      %944 = vrot.lane.b32.xlu0 %v859, 12
      %v945 = vpop.permute.xlu0 %944
      %946 = vrot.lane.b32.xlu0 %v860, 12
      %v947 = vpop.permute.xlu0 %946
      %948 = vrot.lane.b32.xlu0 %v861, 12
      %v949 = vpop.permute.xlu0 %948
      %950 = vrot.lane.b32.xlu0 %v862, 12
      %v951 = vpop.permute.xlu0 %950
      %952 = vrot.lane.b32.xlu0 %v863, 12
      %v953 = vpop.permute.xlu0 %952
      %954 = vrot.lane.b32.xlu0 %v864, 12
      %v955 = vpop.permute.xlu0 %954
      %956 = vrot.lane.b32.xlu0 %v865, 12
      %v957 = vpop.permute.xlu0 %956
      %958 = vrot.lane.b32.xlu0 %v866, 12
      %v959 = vpop.permute.xlu0 %958
      %960 = vrot.lane.b32.xlu0 %v867, 12
      %v961 = vpop.permute.xlu0 %960
      %962 = vrot.lane.b32.xlu0 %v868, 12
      %v963 = vpop.permute.xlu0 %962
      %964 = vrot.lane.b32.xlu0 %v869, 12
      %v965 = vpop.permute.xlu0 %964
      %966 = vrot.lane.b32.xlu0 %v870, 12
      %v967 = vpop.permute.xlu0 %966
      %968 = vrot.lane.b32.xlu0 %v871, 12
      %v969 = vpop.permute.xlu0 %968
      %970 = vrot.lane.b32.xlu0 %v872, 12
      %v971 = vpop.permute.xlu0 %970
      %972 = vrot.lane.b32.xlu0 %v873, 12
      %v973 = vpop.permute.xlu0 %972
      %974 = vrot.lane.b32.xlu0 %v874, 12
      %v975 = vpop.permute.xlu0 %974
      %976 = vrot.lane.b32.xlu0 %v875, 12
      %v977 = vpop.permute.xlu0 %976
      %978 = vrot.lane.b32.xlu0 %v876, 12
      %v979 = vpop.permute.xlu0 %978
      %980 = vrot.lane.b32.xlu0 %v877, 12
      %v981 = vpop.permute.xlu0 %980
      %982 = vrot.lane.b32.xlu0 %v878, 12
      %v983 = vpop.permute.xlu0 %982
      %984 = vrot.lane.b32.xlu0 %v879, 12
      %v985 = vpop.permute.xlu0 %984
      %986 = vrot.lane.b32.xlu0 %v880, 12
      %v987 = vpop.permute.xlu0 %986
      %988 = vrot.lane.b32.xlu0 %v881, 12
      %v989 = vpop.permute.xlu0 %988
      %990 = vrot.lane.b32.xlu0 %v882, 12
      %v991 = vpop.permute.xlu0 %990
      %992 = vrot.lane.b32.xlu0 %v883, 12
      %v993 = vpop.permute.xlu0 %992
      %994 = vrot.lane.b32.xlu0 %v884, 12
      %v995 = vpop.permute.xlu0 %994
      %996 = vrot.lane.b32.xlu0 %v885, 12
      %v997 = vpop.permute.xlu0 %996
      %998 = vrot.lane.b32.xlu0 %v886, 12
      %v999 = vpop.permute.xlu0 %998
      %1000 = vrot.lane.b32.xlu0 %v887, 12
      %v1001 = vpop.permute.xlu0 %1000
      %1002 = vrot.lane.b32.xlu0 %v888, 12
      %v1003 = vpop.permute.xlu0 %1002
      %1004 = vrot.lane.b32.xlu0 %v889, 12
      %v1005 = vpop.permute.xlu0 %1004
      %1006 = vrot.lane.b32.xlu0 %v890, 12
      %v1007 = vpop.permute.xlu0 %1006
      %1008 = vrot.lane.b32.xlu0 %v891, 12
      %v1009 = vpop.permute.xlu0 %1008
      %1010 = vrot.lane.b32.xlu0 %v892, 12
      %v1011 = vpop.permute.xlu0 %1010
      %1012 = vrot.lane.b32.xlu0 %v893, 12
      %v1013 = vpop.permute.xlu0 %1012
      %1014 = vrot.lane.b32.xlu0 %v894, 12
      %v1015 = vpop.permute.xlu0 %1014
      %1016 = vrot.lane.b32.xlu0 %v895, 12
      %v1017 = vpop.permute.xlu0 %1016
      %1018 = vrot.lane.b32.xlu0 %v896, 12
      %v1019 = vpop.permute.xlu0 %1018
      %vm1061 = vcmask 130144
      %1062 = vst.msk [vmem:[#allocation3] sm:$0xff] %vm1061, %v939
      %1063 = vst.msk [vmem:[#allocation3 + $0x8] sm:$0xff] %vm1061, %v941
      %1064 = vst.msk [vmem:[#allocation3 + $0x10] sm:$0xff] %vm1061, %v943
      %1065 = vst.msk [vmem:[#allocation3 + $0x18] sm:$0xff] %vm1061, %v945
      %1066 = vst.msk [vmem:[#allocation3 + $0x20] sm:$0xff] %vm1061, %v947
      %1067 = vst.msk [vmem:[#allocation3 + $0x28] sm:$0xff] %vm1061, %v949
      %1068 = vst.msk [vmem:[#allocation3 + $0x30] sm:$0xff] %vm1061, %v951
      %1069 = vst.msk [vmem:[#allocation3 + $0x38] sm:$0xff] %vm1061, %v953
      %1070 = vst.msk [vmem:[#allocation3 + $0x40] sm:$0xff] %vm1061, %v955
      %1071 = vst.msk [vmem:[#allocation3 + $0x48] sm:$0xff] %vm1061, %v957
      %1072 = vst.msk [vmem:[#allocation3 + $0x50] sm:$0xff] %vm1061, %v959
      %1073 = vst.msk [vmem:[#allocation3 + $0x58] sm:$0xff] %vm1061, %v961
      %1074 = vst.msk [vmem:[#allocation3 + $0x60] sm:$0xff] %vm1061, %v963
      %1075 = vst.msk [vmem:[#allocation3 + $0x68] sm:$0xff] %vm1061, %v965
      %1076 = vst.msk [vmem:[#allocation3 + $0x70] sm:$0xff] %vm1061, %v967
      %1077 = vst.msk [vmem:[#allocation3 + $0x78] sm:$0xff] %vm1061, %v969
      %1078 = vst.msk [vmem:[#allocation3 + $0x80] sm:$0xff] %vm1061, %v971
      %1079 = vst.msk [vmem:[#allocation3 + $0x88] sm:$0xff] %vm1061, %v973
      %1080 = vst.msk [vmem:[#allocation3 + $0x90] sm:$0xff] %vm1061, %v975
      %1081 = vst.msk [vmem:[#allocation3 + $0x98] sm:$0xff] %vm1061, %v977
      %1082 = vst.msk [vmem:[#allocation3 + $0xa0] sm:$0xff] %vm1061, %v979
      %1083 = vst.msk [vmem:[#allocation3 + $0xa8] sm:$0xff] %vm1061, %v981
      %1084 = vst.msk [vmem:[#allocation3 + $0xb0] sm:$0xff] %vm1061, %v983
      %1085 = vst.msk [vmem:[#allocation3 + $0xb8] sm:$0xff] %vm1061, %v985
      %1086 = vst.msk [vmem:[#allocation3 + $0xc0] sm:$0xff] %vm1061, %v987
      %1087 = vst.msk [vmem:[#allocation3 + $0xc8] sm:$0xff] %vm1061, %v989
      %1088 = vst.msk [vmem:[#allocation3 + $0xd0] sm:$0xff] %vm1061, %v991
      %1089 = vst.msk [vmem:[#allocation3 + $0xd8] sm:$0xff] %vm1061, %v993
      %1090 = vst.msk [vmem:[#allocation3 + $0xe0] sm:$0xff] %vm1061, %v995
      %1091 = vst.msk [vmem:[#allocation3 + $0xe8] sm:$0xff] %vm1061, %v997
      %1092 = vst.msk [vmem:[#allocation3 + $0xf0] sm:$0xff] %vm1061, %v999
      %1093 = vst.msk [vmem:[#allocation3 + $0xf8] sm:$0xff] %vm1061, %v1001
      %1094 = vst.msk [vmem:[#allocation3 + $0x100] sm:$0xff] %vm1061, %v1003
      %1095 = vst.msk [vmem:[#allocation3 + $0x108] sm:$0xff] %vm1061, %v1005
      %1096 = vst.msk [vmem:[#allocation3 + $0x110] sm:$0xff] %vm1061, %v1007
      %1097 = vst.msk [vmem:[#allocation3 + $0x118] sm:$0xff] %vm1061, %v1009
      %1098 = vst.msk [vmem:[#allocation3 + $0x120] sm:$0xff] %vm1061, %v1011
      %1099 = vst.msk [vmem:[#allocation3 + $0x128] sm:$0xff] %vm1061, %v1013
      %1100 = vst.msk [vmem:[#allocation3 + $0x130] sm:$0xff] %vm1061, %v1015
      %1101 = vst.msk [vmem:[#allocation3 + $0x138] sm:$0xff] %vm1061, %v1017
      %1102 = vst.msk [vmem:[#allocation3 + $0x140] sm:$0xff] %vm1061, %v1019
      %v1103 = vld [vmem:[%s273 + $0x24] sm:$0xff]
      %v1104 = vld [vmem:[%s273 + $0x2c] sm:$0xff]
      %v1105 = vld [vmem:[%s273 + $0x34] sm:$0xff]
      %v1106 = vld [vmem:[%s273 + $0x3c] sm:$0xff]
      %v1107 = vld [vmem:[%s273 + $0x44] sm:$0xff]
      %v1108 = vld [vmem:[%s273 + $0x4c] sm:$0xff]
      %v1109 = vld [vmem:[%s273 + $0x54] sm:$0xff]
      %v1110 = vld [vmem:[%s273 + $0x5c] sm:$0xff]
      %v1111 = vld [vmem:[%s273 + $0x64] sm:$0xff]
      %v1112 = vld [vmem:[%s273 + $0x6c] sm:$0xff]
      %v1113 = vld [vmem:[%s273 + $0x74] sm:$0xff]
      %v1114 = vld [vmem:[%s273 + $0x7c] sm:$0xff]
      %v1115 = vld [vmem:[%s273 + $0x84] sm:$0xff]
      %v1116 = vld [vmem:[%s273 + $0x8c] sm:$0xff]
      %v1117 = vld [vmem:[%s273 + $0x94] sm:$0xff]
      %v1118 = vld [vmem:[%s273 + $0x9c] sm:$0xff]
      %v1119 = vld [vmem:[%s273 + $0xa4] sm:$0xff]
      %v1120 = vld [vmem:[%s273 + $0xac] sm:$0xff]
      %v1121 = vld [vmem:[%s273 + $0xb4] sm:$0xff]
      %v1122 = vld [vmem:[%s273 + $0xbc] sm:$0xff]
      %v1123 = vld [vmem:[%s273 + $0xc4] sm:$0xff]
      %v1124 = vld [vmem:[%s273 + $0xcc] sm:$0xff]
      %v1125 = vld [vmem:[%s273 + $0xd4] sm:$0xff]
      %v1126 = vld [vmem:[%s273 + $0xdc] sm:$0xff]
      %v1127 = vld [vmem:[%s273 + $0xe4] sm:$0xff]
      %v1128 = vld [vmem:[%s273 + $0xec] sm:$0xff]
      %v1129 = vld [vmem:[%s273 + $0xf4] sm:$0xff]
      %v1130 = vld [vmem:[%s273 + $0xfc] sm:$0xff]
      %v1131 = vld [vmem:[%s273 + $0x104] sm:$0xff]
      %v1132 = vld [vmem:[%s273 + $0x10c] sm:$0xff]
      %v1133 = vld [vmem:[%s273 + $0x114] sm:$0xff]
      %v1134 = vld [vmem:[%s273 + $0x11c] sm:$0xff]
      %v1135 = vld [vmem:[%s273 + $0x124] sm:$0xff]
      %v1136 = vld [vmem:[%s273 + $0x12c] sm:$0xff]
      %v1137 = vld [vmem:[%s273 + $0x134] sm:$0xff]
      %v1138 = vld [vmem:[%s273 + $0x13c] sm:$0xff]
      %v1139 = vld [vmem:[%s273 + $0x144] sm:$0xff]
      %v1140 = vld [vmem:[%s273 + $0x14c] sm:$0xff]
      %v1141 = vld [vmem:[%s273 + $0x154] sm:$0xff]
      %v1142 = vld [vmem:[%s273 + $0x15c] sm:$0xff]
      %v1143 = vld [vmem:[%s273 + $0x164] sm:$0xff]
      %1185 = vrot.lane.b32.xlu0 %v1103, 16
      %v1186 = vpop.permute.xlu0 %1185
      %1187 = vrot.lane.b32.xlu0 %v1104, 16
      %v1188 = vpop.permute.xlu0 %1187
      %1189 = vrot.lane.b32.xlu0 %v1105, 16
      %v1190 = vpop.permute.xlu0 %1189
      %1191 = vrot.lane.b32.xlu0 %v1106, 16
      %v1192 = vpop.permute.xlu0 %1191
      %1193 = vrot.lane.b32.xlu0 %v1107, 16
      %v1194 = vpop.permute.xlu0 %1193
      %1195 = vrot.lane.b32.xlu0 %v1108, 16
      %v1196 = vpop.permute.xlu0 %1195
      %1197 = vrot.lane.b32.xlu0 %v1109, 16
      %v1198 = vpop.permute.xlu0 %1197
      %1199 = vrot.lane.b32.xlu0 %v1110, 16
      %v1200 = vpop.permute.xlu0 %1199
      %1201 = vrot.lane.b32.xlu0 %v1111, 16
      %v1202 = vpop.permute.xlu0 %1201
      %1203 = vrot.lane.b32.xlu0 %v1112, 16
      %v1204 = vpop.permute.xlu0 %1203
      %1205 = vrot.lane.b32.xlu0 %v1113, 16
      %v1206 = vpop.permute.xlu0 %1205
      %1207 = vrot.lane.b32.xlu0 %v1114, 16
      %v1208 = vpop.permute.xlu0 %1207
      %1209 = vrot.lane.b32.xlu0 %v1115, 16
      %v1210 = vpop.permute.xlu0 %1209
      %1211 = vrot.lane.b32.xlu0 %v1116, 16
      %v1212 = vpop.permute.xlu0 %1211
      %1213 = vrot.lane.b32.xlu0 %v1117, 16
      %v1214 = vpop.permute.xlu0 %1213
      %1215 = vrot.lane.b32.xlu0 %v1118, 16
      %v1216 = vpop.permute.xlu0 %1215
      %1217 = vrot.lane.b32.xlu0 %v1119, 16
      %v1218 = vpop.permute.xlu0 %1217
      %1219 = vrot.lane.b32.xlu0 %v1120, 16
      %v1220 = vpop.permute.xlu0 %1219
      %1221 = vrot.lane.b32.xlu0 %v1121, 16
      %v1222 = vpop.permute.xlu0 %1221
      %1223 = vrot.lane.b32.xlu0 %v1122, 16
      %v1224 = vpop.permute.xlu0 %1223
      %1225 = vrot.lane.b32.xlu0 %v1123, 16
      %v1226 = vpop.permute.xlu0 %1225
      %1227 = vrot.lane.b32.xlu0 %v1124, 16
      %v1228 = vpop.permute.xlu0 %1227
      %1229 = vrot.lane.b32.xlu0 %v1125, 16
      %v1230 = vpop.permute.xlu0 %1229
      %1231 = vrot.lane.b32.xlu0 %v1126, 16
      %v1232 = vpop.permute.xlu0 %1231
      %1233 = vrot.lane.b32.xlu0 %v1127, 16
      %v1234 = vpop.permute.xlu0 %1233
      %1235 = vrot.lane.b32.xlu0 %v1128, 16
      %v1236 = vpop.permute.xlu0 %1235
      %1237 = vrot.lane.b32.xlu0 %v1129, 16
      %v1238 = vpop.permute.xlu0 %1237
      %1239 = vrot.lane.b32.xlu0 %v1130, 16
      %v1240 = vpop.permute.xlu0 %1239
      %1241 = vrot.lane.b32.xlu0 %v1131, 16
      %v1242 = vpop.permute.xlu0 %1241
      %1243 = vrot.lane.b32.xlu0 %v1132, 16
      %v1244 = vpop.permute.xlu0 %1243
      %1245 = vrot.lane.b32.xlu0 %v1133, 16
      %v1246 = vpop.permute.xlu0 %1245
      %1247 = vrot.lane.b32.xlu0 %v1134, 16
      %v1248 = vpop.permute.xlu0 %1247
      %1249 = vrot.lane.b32.xlu0 %v1135, 16
      %v1250 = vpop.permute.xlu0 %1249
      %1251 = vrot.lane.b32.xlu0 %v1136, 16
      %v1252 = vpop.permute.xlu0 %1251
      %1253 = vrot.lane.b32.xlu0 %v1137, 16
      %v1254 = vpop.permute.xlu0 %1253
      %1255 = vrot.lane.b32.xlu0 %v1138, 16
      %v1256 = vpop.permute.xlu0 %1255
      %1257 = vrot.lane.b32.xlu0 %v1139, 16
      %v1258 = vpop.permute.xlu0 %1257
      %1259 = vrot.lane.b32.xlu0 %v1140, 16
      %v1260 = vpop.permute.xlu0 %1259
      %1261 = vrot.lane.b32.xlu0 %v1141, 16
      %v1262 = vpop.permute.xlu0 %1261
      %1263 = vrot.lane.b32.xlu0 %v1142, 16
      %v1264 = vpop.permute.xlu0 %1263
      %1265 = vrot.lane.b32.xlu0 %v1143, 16
      %v1266 = vpop.permute.xlu0 %1265
      %vm1308 = vcmask 162944
      %1309 = vst.msk [vmem:[#allocation3] sm:$0xff] %vm1308, %v1186
      %1310 = vst.msk [vmem:[#allocation3 + $0x8] sm:$0xff] %vm1308, %v1188
      %1311 = vst.msk [vmem:[#allocation3 + $0x10] sm:$0xff] %vm1308, %v1190
      %1312 = vst.msk [vmem:[#allocation3 + $0x18] sm:$0xff] %vm1308, %v1192
      %1313 = vst.msk [vmem:[#allocation3 + $0x20] sm:$0xff] %vm1308, %v1194
      %1314 = vst.msk [vmem:[#allocation3 + $0x28] sm:$0xff] %vm1308, %v1196
      %1315 = vst.msk [vmem:[#allocation3 + $0x30] sm:$0xff] %vm1308, %v1198
      %1316 = vst.msk [vmem:[#allocation3 + $0x38] sm:$0xff] %vm1308, %v1200
      %1317 = vst.msk [vmem:[#allocation3 + $0x40] sm:$0xff] %vm1308, %v1202
      %1318 = vst.msk [vmem:[#allocation3 + $0x48] sm:$0xff] %vm1308, %v1204
      %1319 = vst.msk [vmem:[#allocation3 + $0x50] sm:$0xff] %vm1308, %v1206
      %1320 = vst.msk [vmem:[#allocation3 + $0x58] sm:$0xff] %vm1308, %v1208
      %1321 = vst.msk [vmem:[#allocation3 + $0x60] sm:$0xff] %vm1308, %v1210
      %1322 = vst.msk [vmem:[#allocation3 + $0x68] sm:$0xff] %vm1308, %v1212
      %1323 = vst.msk [vmem:[#allocation3 + $0x70] sm:$0xff] %vm1308, %v1214
      %1324 = vst.msk [vmem:[#allocation3 + $0x78] sm:$0xff] %vm1308, %v1216
      %1325 = vst.msk [vmem:[#allocation3 + $0x80] sm:$0xff] %vm1308, %v1218
      %1326 = vst.msk [vmem:[#allocation3 + $0x88] sm:$0xff] %vm1308, %v1220
      %1327 = vst.msk [vmem:[#allocation3 + $0x90] sm:$0xff] %vm1308, %v1222
      %1328 = vst.msk [vmem:[#allocation3 + $0x98] sm:$0xff] %vm1308, %v1224
      %1329 = vst.msk [vmem:[#allocation3 + $0xa0] sm:$0xff] %vm1308, %v1226
      %1330 = vst.msk [vmem:[#allocation3 + $0xa8] sm:$0xff] %vm1308, %v1228
      %1331 = vst.msk [vmem:[#allocation3 + $0xb0] sm:$0xff] %vm1308, %v1230
      %1332 = vst.msk [vmem:[#allocation3 + $0xb8] sm:$0xff] %vm1308, %v1232
      %1333 = vst.msk [vmem:[#allocation3 + $0xc0] sm:$0xff] %vm1308, %v1234
      %1334 = vst.msk [vmem:[#allocation3 + $0xc8] sm:$0xff] %vm1308, %v1236
      %1335 = vst.msk [vmem:[#allocation3 + $0xd0] sm:$0xff] %vm1308, %v1238
      %1336 = vst.msk [vmem:[#allocation3 + $0xd8] sm:$0xff] %vm1308, %v1240
      %1337 = vst.msk [vmem:[#allocation3 + $0xe0] sm:$0xff] %vm1308, %v1242
      %1338 = vst.msk [vmem:[#allocation3 + $0xe8] sm:$0xff] %vm1308, %v1244
      %1339 = vst.msk [vmem:[#allocation3 + $0xf0] sm:$0xff] %vm1308, %v1246
      %1340 = vst.msk [vmem:[#allocation3 + $0xf8] sm:$0xff] %vm1308, %v1248
      %1341 = vst.msk [vmem:[#allocation3 + $0x100] sm:$0xff] %vm1308, %v1250
      %1342 = vst.msk [vmem:[#allocation3 + $0x108] sm:$0xff] %vm1308, %v1252
      %1343 = vst.msk [vmem:[#allocation3 + $0x110] sm:$0xff] %vm1308, %v1254
      %1344 = vst.msk [vmem:[#allocation3 + $0x118] sm:$0xff] %vm1308, %v1256
      %1345 = vst.msk [vmem:[#allocation3 + $0x120] sm:$0xff] %vm1308, %v1258
      %1346 = vst.msk [vmem:[#allocation3 + $0x128] sm:$0xff] %vm1308, %v1260
      %1347 = vst.msk [vmem:[#allocation3 + $0x130] sm:$0xff] %vm1308, %v1262
      %1348 = vst.msk [vmem:[#allocation3 + $0x138] sm:$0xff] %vm1308, %v1264
      %1349 = vst.msk [vmem:[#allocation3 + $0x140] sm:$0xff] %vm1308, %v1266
      %v1350 = vld [vmem:[%s273 + $0x25] sm:$0xff]
      %v1351 = vld [vmem:[%s273 + $0x2d] sm:$0xff]
      %v1352 = vld [vmem:[%s273 + $0x35] sm:$0xff]
      %v1353 = vld [vmem:[%s273 + $0x3d] sm:$0xff]
      %v1354 = vld [vmem:[%s273 + $0x45] sm:$0xff]
      %v1355 = vld [vmem:[%s273 + $0x4d] sm:$0xff]
      %v1356 = vld [vmem:[%s273 + $0x55] sm:$0xff]
      %v1357 = vld [vmem:[%s273 + $0x5d] sm:$0xff]
      %v1358 = vld [vmem:[%s273 + $0x65] sm:$0xff]
      %v1359 = vld [vmem:[%s273 + $0x6d] sm:$0xff]
      %v1360 = vld [vmem:[%s273 + $0x75] sm:$0xff]
      %v1361 = vld [vmem:[%s273 + $0x7d] sm:$0xff]
      %v1362 = vld [vmem:[%s273 + $0x85] sm:$0xff]
      %v1363 = vld [vmem:[%s273 + $0x8d] sm:$0xff]
      %v1364 = vld [vmem:[%s273 + $0x95] sm:$0xff]
      %v1365 = vld [vmem:[%s273 + $0x9d] sm:$0xff]
      %v1366 = vld [vmem:[%s273 + $0xa5] sm:$0xff]
      %v1367 = vld [vmem:[%s273 + $0xad] sm:$0xff]
      %v1368 = vld [vmem:[%s273 + $0xb5] sm:$0xff]
      %v1369 = vld [vmem:[%s273 + $0xbd] sm:$0xff]
      %v1370 = vld [vmem:[%s273 + $0xc5] sm:$0xff]
      %v1371 = vld [vmem:[%s273 + $0xcd] sm:$0xff]
      %v1372 = vld [vmem:[%s273 + $0xd5] sm:$0xff]
      %v1373 = vld [vmem:[%s273 + $0xdd] sm:$0xff]
      %v1374 = vld [vmem:[%s273 + $0xe5] sm:$0xff]
      %v1375 = vld [vmem:[%s273 + $0xed] sm:$0xff]
      %v1376 = vld [vmem:[%s273 + $0xf5] sm:$0xff]
      %v1377 = vld [vmem:[%s273 + $0xfd] sm:$0xff]
      %v1378 = vld [vmem:[%s273 + $0x105] sm:$0xff]
      %v1379 = vld [vmem:[%s273 + $0x10d] sm:$0xff]
      %v1380 = vld [vmem:[%s273 + $0x115] sm:$0xff]
      %v1381 = vld [vmem:[%s273 + $0x11d] sm:$0xff]
      %v1382 = vld [vmem:[%s273 + $0x125] sm:$0xff]
      %v1383 = vld [vmem:[%s273 + $0x12d] sm:$0xff]
      %v1384 = vld [vmem:[%s273 + $0x135] sm:$0xff]
      %v1385 = vld [vmem:[%s273 + $0x13d] sm:$0xff]
      %v1386 = vld [vmem:[%s273 + $0x145] sm:$0xff]
      %v1387 = vld [vmem:[%s273 + $0x14d] sm:$0xff]
      %v1388 = vld [vmem:[%s273 + $0x155] sm:$0xff]
      %v1389 = vld [vmem:[%s273 + $0x15d] sm:$0xff]
      %v1390 = vld [vmem:[%s273 + $0x165] sm:$0xff]
      %1432 = vrot.lane.b32.xlu0 %v1350, 20
      %v1433 = vpop.permute.xlu0 %1432
      %1434 = vrot.lane.b32.xlu0 %v1351, 20
      %v1435 = vpop.permute.xlu0 %1434
      %1436 = vrot.lane.b32.xlu0 %v1352, 20
      %v1437 = vpop.permute.xlu0 %1436
      %1438 = vrot.lane.b32.xlu0 %v1353, 20
      %v1439 = vpop.permute.xlu0 %1438
      %1440 = vrot.lane.b32.xlu0 %v1354, 20
      %v1441 = vpop.permute.xlu0 %1440
      %1442 = vrot.lane.b32.xlu0 %v1355, 20
      %v1443 = vpop.permute.xlu0 %1442
      %1444 = vrot.lane.b32.xlu0 %v1356, 20
      %v1445 = vpop.permute.xlu0 %1444
      %1446 = vrot.lane.b32.xlu0 %v1357, 20
      %v1447 = vpop.permute.xlu0 %1446
      %1448 = vrot.lane.b32.xlu0 %v1358, 20
      %v1449 = vpop.permute.xlu0 %1448
      %1450 = vrot.lane.b32.xlu0 %v1359, 20
      %v1451 = vpop.permute.xlu0 %1450
      %1452 = vrot.lane.b32.xlu0 %v1360, 20
      %v1453 = vpop.permute.xlu0 %1452
      %1454 = vrot.lane.b32.xlu0 %v1361, 20
      %v1455 = vpop.permute.xlu0 %1454
      %1456 = vrot.lane.b32.xlu0 %v1362, 20
      %v1457 = vpop.permute.xlu0 %1456
      %1458 = vrot.lane.b32.xlu0 %v1363, 20
      %v1459 = vpop.permute.xlu0 %1458
      %1460 = vrot.lane.b32.xlu0 %v1364, 20
      %v1461 = vpop.permute.xlu0 %1460
      %1462 = vrot.lane.b32.xlu0 %v1365, 20
      %v1463 = vpop.permute.xlu0 %1462
      %1464 = vrot.lane.b32.xlu0 %v1366, 20
      %v1465 = vpop.permute.xlu0 %1464
      %1466 = vrot.lane.b32.xlu0 %v1367, 20
      %v1467 = vpop.permute.xlu0 %1466
      %1468 = vrot.lane.b32.xlu0 %v1368, 20
      %v1469 = vpop.permute.xlu0 %1468
      %1470 = vrot.lane.b32.xlu0 %v1369, 20
      %v1471 = vpop.permute.xlu0 %1470
      %1472 = vrot.lane.b32.xlu0 %v1370, 20
      %v1473 = vpop.permute.xlu0 %1472
      %1474 = vrot.lane.b32.xlu0 %v1371, 20
      %v1475 = vpop.permute.xlu0 %1474
      %1476 = vrot.lane.b32.xlu0 %v1372, 20
      %v1477 = vpop.permute.xlu0 %1476
      %1478 = vrot.lane.b32.xlu0 %v1373, 20
      %v1479 = vpop.permute.xlu0 %1478
      %1480 = vrot.lane.b32.xlu0 %v1374, 20
      %v1481 = vpop.permute.xlu0 %1480
      %1482 = vrot.lane.b32.xlu0 %v1375, 20
      %v1483 = vpop.permute.xlu0 %1482
      %1484 = vrot.lane.b32.xlu0 %v1376, 20
      %v1485 = vpop.permute.xlu0 %1484
      %1486 = vrot.lane.b32.xlu0 %v1377, 20
      %v1487 = vpop.permute.xlu0 %1486
      %1488 = vrot.lane.b32.xlu0 %v1378, 20
      %v1489 = vpop.permute.xlu0 %1488
      %1490 = vrot.lane.b32.xlu0 %v1379, 20
      %v1491 = vpop.permute.xlu0 %1490
      %1492 = vrot.lane.b32.xlu0 %v1380, 20
      %v1493 = vpop.permute.xlu0 %1492
      %1494 = vrot.lane.b32.xlu0 %v1381, 20
      %v1495 = vpop.permute.xlu0 %1494
      %1496 = vrot.lane.b32.xlu0 %v1382, 20
      %v1497 = vpop.permute.xlu0 %1496
      %1498 = vrot.lane.b32.xlu0 %v1383, 20
      %v1499 = vpop.permute.xlu0 %1498
      %1500 = vrot.lane.b32.xlu0 %v1384, 20
      %v1501 = vpop.permute.xlu0 %1500
      %1502 = vrot.lane.b32.xlu0 %v1385, 20
      %v1503 = vpop.permute.xlu0 %1502
      %1504 = vrot.lane.b32.xlu0 %v1386, 20
      %v1505 = vpop.permute.xlu0 %1504
      %1506 = vrot.lane.b32.xlu0 %v1387, 20
      %v1507 = vpop.permute.xlu0 %1506
      %1508 = vrot.lane.b32.xlu0 %v1388, 20
      %v1509 = vpop.permute.xlu0 %1508
      %1510 = vrot.lane.b32.xlu0 %v1389, 20
      %v1511 = vpop.permute.xlu0 %1510
      %1512 = vrot.lane.b32.xlu0 %v1390, 20
      %v1513 = vpop.permute.xlu0 %1512
      %vm1555 = vcmask 195744
      %1556 = vst.msk [vmem:[#allocation3] sm:$0xff] %vm1555, %v1433
      %1557 = vst.msk [vmem:[#allocation3 + $0x8] sm:$0xff] %vm1555, %v1435
      %1558 = vst.msk [vmem:[#allocation3 + $0x10] sm:$0xff] %vm1555, %v1437
      %1559 = vst.msk [vmem:[#allocation3 + $0x18] sm:$0xff] %vm1555, %v1439
      %1560 = vst.msk [vmem:[#allocation3 + $0x20] sm:$0xff] %vm1555, %v1441
      %1561 = vst.msk [vmem:[#allocation3 + $0x28] sm:$0xff] %vm1555, %v1443
      %1562 = vst.msk [vmem:[#allocation3 + $0x30] sm:$0xff] %vm1555, %v1445
      %1563 = vst.msk [vmem:[#allocation3 + $0x38] sm:$0xff] %vm1555, %v1447
      %1564 = vst.msk [vmem:[#allocation3 + $0x40] sm:$0xff] %vm1555, %v1449
      %1565 = vst.msk [vmem:[#allocation3 + $0x48] sm:$0xff] %vm1555, %v1451
      %1566 = vst.msk [vmem:[#allocation3 + $0x50] sm:$0xff] %vm1555, %v1453
      %1567 = vst.msk [vmem:[#allocation3 + $0x58] sm:$0xff] %vm1555, %v1455
      %1568 = vst.msk [vmem:[#allocation3 + $0x60] sm:$0xff] %vm1555, %v1457
      %1569 = vst.msk [vmem:[#allocation3 + $0x68] sm:$0xff] %vm1555, %v1459
      %1570 = vst.msk [vmem:[#allocation3 + $0x70] sm:$0xff] %vm1555, %v1461
      %1571 = vst.msk [vmem:[#allocation3 + $0x78] sm:$0xff] %vm1555, %v1463
      %1572 = vst.msk [vmem:[#allocation3 + $0x80] sm:$0xff] %vm1555, %v1465
      %1573 = vst.msk [vmem:[#allocation3 + $0x88] sm:$0xff] %vm1555, %v1467
      %1574 = vst.msk [vmem:[#allocation3 + $0x90] sm:$0xff] %vm1555, %v1469
      %1575 = vst.msk [vmem:[#allocation3 + $0x98] sm:$0xff] %vm1555, %v1471
      %1576 = vst.msk [vmem:[#allocation3 + $0xa0] sm:$0xff] %vm1555, %v1473
      %1577 = vst.msk [vmem:[#allocation3 + $0xa8] sm:$0xff] %vm1555, %v1475
      %1578 = vst.msk [vmem:[#allocation3 + $0xb0] sm:$0xff] %vm1555, %v1477
      %1579 = vst.msk [vmem:[#allocation3 + $0xb8] sm:$0xff] %vm1555, %v1479
      %1580 = vst.msk [vmem:[#allocation3 + $0xc0] sm:$0xff] %vm1555, %v1481
      %1581 = vst.msk [vmem:[#allocation3 + $0xc8] sm:$0xff] %vm1555, %v1483
      %1582 = vst.msk [vmem:[#allocation3 + $0xd0] sm:$0xff] %vm1555, %v1485
      %1583 = vst.msk [vmem:[#allocation3 + $0xd8] sm:$0xff] %vm1555, %v1487
      %1584 = vst.msk [vmem:[#allocation3 + $0xe0] sm:$0xff] %vm1555, %v1489
      %1585 = vst.msk [vmem:[#allocation3 + $0xe8] sm:$0xff] %vm1555, %v1491
      %1586 = vst.msk [vmem:[#allocation3 + $0xf0] sm:$0xff] %vm1555, %v1493
      %1587 = vst.msk [vmem:[#allocation3 + $0xf8] sm:$0xff] %vm1555, %v1495
      %1588 = vst.msk [vmem:[#allocation3 + $0x100] sm:$0xff] %vm1555, %v1497
      %1589 = vst.msk [vmem:[#allocation3 + $0x108] sm:$0xff] %vm1555, %v1499
      %1590 = vst.msk [vmem:[#allocation3 + $0x110] sm:$0xff] %vm1555, %v1501
      %1591 = vst.msk [vmem:[#allocation3 + $0x118] sm:$0xff] %vm1555, %v1503
      %1592 = vst.msk [vmem:[#allocation3 + $0x120] sm:$0xff] %vm1555, %v1505
      %1593 = vst.msk [vmem:[#allocation3 + $0x128] sm:$0xff] %vm1555, %v1507
      %1594 = vst.msk [vmem:[#allocation3 + $0x130] sm:$0xff] %vm1555, %v1509
      %1595 = vst.msk [vmem:[#allocation3 + $0x138] sm:$0xff] %vm1555, %v1511
      %1596 = vst.msk [vmem:[#allocation3 + $0x140] sm:$0xff] %vm1555, %v1513
      %v1597 = vld [vmem:[%s273 + $0x35] sm:$0xff]
      %v1598 = vld [vmem:[%s273 + $0x3d] sm:$0xff]
      %v1599 = vld [vmem:[%s273 + $0x45] sm:$0xff]
      %v1600 = vld [vmem:[%s273 + $0x4d] sm:$0xff]
      %v1601 = vld [vmem:[%s273 + $0x55] sm:$0xff]
      %v1602 = vld [vmem:[%s273 + $0x5d] sm:$0xff]
      %v1603 = vld [vmem:[%s273 + $0x65] sm:$0xff]
      %v1604 = vld [vmem:[%s273 + $0x6d] sm:$0xff]
      %v1605 = vld [vmem:[%s273 + $0x75] sm:$0xff]
      %v1606 = vld [vmem:[%s273 + $0x7d] sm:$0xff]
      %v1607 = vld [vmem:[%s273 + $0x85] sm:$0xff]
      %v1608 = vld [vmem:[%s273 + $0x8d] sm:$0xff]
      %v1609 = vld [vmem:[%s273 + $0x95] sm:$0xff]
      %v1610 = vld [vmem:[%s273 + $0x9d] sm:$0xff]
      %v1611 = vld [vmem:[%s273 + $0xa5] sm:$0xff]
      %v1612 = vld [vmem:[%s273 + $0xad] sm:$0xff]
      %v1613 = vld [vmem:[%s273 + $0xb5] sm:$0xff]
      %v1614 = vld [vmem:[%s273 + $0xbd] sm:$0xff]
      %v1615 = vld [vmem:[%s273 + $0xc5] sm:$0xff]
      %v1616 = vld [vmem:[%s273 + $0xcd] sm:$0xff]
      %v1617 = vld [vmem:[%s273 + $0xd5] sm:$0xff]
      %v1618 = vld [vmem:[%s273 + $0xdd] sm:$0xff]
      %v1619 = vld [vmem:[%s273 + $0xe5] sm:$0xff]
      %v1620 = vld [vmem:[%s273 + $0xed] sm:$0xff]
      %v1621 = vld [vmem:[%s273 + $0xf5] sm:$0xff]
      %v1622 = vld [vmem:[%s273 + $0xfd] sm:$0xff]
      %v1623 = vld [vmem:[%s273 + $0x105] sm:$0xff]
      %v1624 = vld [vmem:[%s273 + $0x10d] sm:$0xff]
      %v1625 = vld [vmem:[%s273 + $0x115] sm:$0xff]
      %v1626 = vld [vmem:[%s273 + $0x11d] sm:$0xff]
      %v1627 = vld [vmem:[%s273 + $0x125] sm:$0xff]
      %v1628 = vld [vmem:[%s273 + $0x12d] sm:$0xff]
      %v1629 = vld [vmem:[%s273 + $0x135] sm:$0xff]
      %v1630 = vld [vmem:[%s273 + $0x13d] sm:$0xff]
      %v1631 = vld [vmem:[%s273 + $0x145] sm:$0xff]
      %v1632 = vld [vmem:[%s273 + $0x14d] sm:$0xff]
      %v1633 = vld [vmem:[%s273 + $0x155] sm:$0xff]
      %v1634 = vld [vmem:[%s273 + $0x15d] sm:$0xff]
      %v1635 = vld [vmem:[%s273 + $0x165] sm:$0xff]
      %v1636 = vld [vmem:[%s273 + $0x16d] sm:$0xff]
      %v1637 = vld [vmem:[%s273 + $0x175] sm:$0xff]
      %1679 = vrot.lane.b32.xlu0 %v1597, 24
      %v1680 = vpop.permute.xlu0 %1679
      %1681 = vrot.lane.b32.xlu0 %v1598, 24
      %v1682 = vpop.permute.xlu0 %1681
      %1683 = vrot.lane.b32.xlu0 %v1599, 24
      %v1684 = vpop.permute.xlu0 %1683
      %1685 = vrot.lane.b32.xlu0 %v1600, 24
      %v1686 = vpop.permute.xlu0 %1685
      %1687 = vrot.lane.b32.xlu0 %v1601, 24
      %v1688 = vpop.permute.xlu0 %1687
      %1689 = vrot.lane.b32.xlu0 %v1602, 24
      %v1690 = vpop.permute.xlu0 %1689
      %1691 = vrot.lane.b32.xlu0 %v1603, 24
      %v1692 = vpop.permute.xlu0 %1691
      %1693 = vrot.lane.b32.xlu0 %v1604, 24
      %v1694 = vpop.permute.xlu0 %1693
      %1695 = vrot.lane.b32.xlu0 %v1605, 24
      %v1696 = vpop.permute.xlu0 %1695
      %1697 = vrot.lane.b32.xlu0 %v1606, 24
      %v1698 = vpop.permute.xlu0 %1697
      %1699 = vrot.lane.b32.xlu0 %v1607, 24
      %v1700 = vpop.permute.xlu0 %1699
      %1701 = vrot.lane.b32.xlu0 %v1608, 24
      %v1702 = vpop.permute.xlu0 %1701
      %1703 = vrot.lane.b32.xlu0 %v1609, 24
      %v1704 = vpop.permute.xlu0 %1703
      %1705 = vrot.lane.b32.xlu0 %v1610, 24
      %v1706 = vpop.permute.xlu0 %1705
      %1707 = vrot.lane.b32.xlu0 %v1611, 24
      %v1708 = vpop.permute.xlu0 %1707
      %1709 = vrot.lane.b32.xlu0 %v1612, 24
      %v1710 = vpop.permute.xlu0 %1709
      %1711 = vrot.lane.b32.xlu0 %v1613, 24
      %v1712 = vpop.permute.xlu0 %1711
      %1713 = vrot.lane.b32.xlu0 %v1614, 24
      %v1714 = vpop.permute.xlu0 %1713
      %1715 = vrot.lane.b32.xlu0 %v1615, 24
      %v1716 = vpop.permute.xlu0 %1715
      %1717 = vrot.lane.b32.xlu0 %v1616, 24
      %v1718 = vpop.permute.xlu0 %1717
      %1719 = vrot.lane.b32.xlu0 %v1617, 24
      %v1720 = vpop.permute.xlu0 %1719
      %1721 = vrot.lane.b32.xlu0 %v1618, 24
      %v1722 = vpop.permute.xlu0 %1721
      %1723 = vrot.lane.b32.xlu0 %v1619, 24
      %v1724 = vpop.permute.xlu0 %1723
      %1725 = vrot.lane.b32.xlu0 %v1620, 24
      %v1726 = vpop.permute.xlu0 %1725
      %1727 = vrot.lane.b32.xlu0 %v1621, 24
      %v1728 = vpop.permute.xlu0 %1727
      %1729 = vrot.lane.b32.xlu0 %v1622, 24
      %v1730 = vpop.permute.xlu0 %1729
      %1731 = vrot.lane.b32.xlu0 %v1623, 24
      %v1732 = vpop.permute.xlu0 %1731
      %1733 = vrot.lane.b32.xlu0 %v1624, 24
      %v1734 = vpop.permute.xlu0 %1733
      %1735 = vrot.lane.b32.xlu0 %v1625, 24
      %v1736 = vpop.permute.xlu0 %1735
      %1737 = vrot.lane.b32.xlu0 %v1626, 24
      %v1738 = vpop.permute.xlu0 %1737
      %1739 = vrot.lane.b32.xlu0 %v1627, 24
      %v1740 = vpop.permute.xlu0 %1739
      %1741 = vrot.lane.b32.xlu0 %v1628, 24
      %v1742 = vpop.permute.xlu0 %1741
      %1743 = vrot.lane.b32.xlu0 %v1629, 24
      %v1744 = vpop.permute.xlu0 %1743
      %1745 = vrot.lane.b32.xlu0 %v1630, 24
      %v1746 = vpop.permute.xlu0 %1745
      %1747 = vrot.lane.b32.xlu0 %v1631, 24
      %v1748 = vpop.permute.xlu0 %1747
      %1749 = vrot.lane.b32.xlu0 %v1632, 24
      %v1750 = vpop.permute.xlu0 %1749
      %1751 = vrot.lane.b32.xlu0 %v1633, 24
      %v1752 = vpop.permute.xlu0 %1751
      %1753 = vrot.lane.b32.xlu0 %v1634, 24
      %v1754 = vpop.permute.xlu0 %1753
      %1755 = vrot.lane.b32.xlu0 %v1635, 24
      %v1756 = vpop.permute.xlu0 %1755
      %1757 = vrot.lane.b32.xlu0 %v1636, 24
      %v1758 = vpop.permute.xlu0 %1757
      %1759 = vrot.lane.b32.xlu0 %v1637, 24
      %v1760 = vpop.permute.xlu0 %1759
      %vm1802 = vcmask 228544
      %1803 = vst.msk [vmem:[#allocation3] sm:$0xff] %vm1802, %v1680
      %1804 = vst.msk [vmem:[#allocation3 + $0x8] sm:$0xff] %vm1802, %v1682
      %1805 = vst.msk [vmem:[#allocation3 + $0x10] sm:$0xff] %vm1802, %v1684
      %1806 = vst.msk [vmem:[#allocation3 + $0x18] sm:$0xff] %vm1802, %v1686
      %1807 = vst.msk [vmem:[#allocation3 + $0x20] sm:$0xff] %vm1802, %v1688
      %1808 = vst.msk [vmem:[#allocation3 + $0x28] sm:$0xff] %vm1802, %v1690
      %1809 = vst.msk [vmem:[#allocation3 + $0x30] sm:$0xff] %vm1802, %v1692
      %1810 = vst.msk [vmem:[#allocation3 + $0x38] sm:$0xff] %vm1802, %v1694
      %1811 = vst.msk [vmem:[#allocation3 + $0x40] sm:$0xff] %vm1802, %v1696
      %1812 = vst.msk [vmem:[#allocation3 + $0x48] sm:$0xff] %vm1802, %v1698
      %1813 = vst.msk [vmem:[#allocation3 + $0x50] sm:$0xff] %vm1802, %v1700
      %1814 = vst.msk [vmem:[#allocation3 + $0x58] sm:$0xff] %vm1802, %v1702
      %1815 = vst.msk [vmem:[#allocation3 + $0x60] sm:$0xff] %vm1802, %v1704
      %1816 = vst.msk [vmem:[#allocation3 + $0x68] sm:$0xff] %vm1802, %v1706
      %1817 = vst.msk [vmem:[#allocation3 + $0x70] sm:$0xff] %vm1802, %v1708
      %1818 = vst.msk [vmem:[#allocation3 + $0x78] sm:$0xff] %vm1802, %v1710
      %1819 = vst.msk [vmem:[#allocation3 + $0x80] sm:$0xff] %vm1802, %v1712
      %1820 = vst.msk [vmem:[#allocation3 + $0x88] sm:$0xff] %vm1802, %v1714
      %1821 = vst.msk [vmem:[#allocation3 + $0x90] sm:$0xff] %vm1802, %v1716
      %1822 = vst.msk [vmem:[#allocation3 + $0x98] sm:$0xff] %vm1802, %v1718
      %1823 = vst.msk [vmem:[#allocation3 + $0xa0] sm:$0xff] %vm1802, %v1720
      %1824 = vst.msk [vmem:[#allocation3 + $0xa8] sm:$0xff] %vm1802, %v1722
      %1825 = vst.msk [vmem:[#allocation3 + $0xb0] sm:$0xff] %vm1802, %v1724
      %1826 = vst.msk [vmem:[#allocation3 + $0xb8] sm:$0xff] %vm1802, %v1726
      %1827 = vst.msk [vmem:[#allocation3 + $0xc0] sm:$0xff] %vm1802, %v1728
      %1828 = vst.msk [vmem:[#allocation3 + $0xc8] sm:$0xff] %vm1802, %v1730
      %1829 = vst.msk [vmem:[#allocation3 + $0xd0] sm:$0xff] %vm1802, %v1732
      %1830 = vst.msk [vmem:[#allocation3 + $0xd8] sm:$0xff] %vm1802, %v1734
      %1831 = vst.msk [vmem:[#allocation3 + $0xe0] sm:$0xff] %vm1802, %v1736
      %1832 = vst.msk [vmem:[#allocation3 + $0xe8] sm:$0xff] %vm1802, %v1738
      %1833 = vst.msk [vmem:[#allocation3 + $0xf0] sm:$0xff] %vm1802, %v1740
      %1834 = vst.msk [vmem:[#allocation3 + $0xf8] sm:$0xff] %vm1802, %v1742
      %1835 = vst.msk [vmem:[#allocation3 + $0x100] sm:$0xff] %vm1802, %v1744
      %1836 = vst.msk [vmem:[#allocation3 + $0x108] sm:$0xff] %vm1802, %v1746
      %1837 = vst.msk [vmem:[#allocation3 + $0x110] sm:$0xff] %vm1802, %v1748
      %1838 = vst.msk [vmem:[#allocation3 + $0x118] sm:$0xff] %vm1802, %v1750
      %1839 = vst.msk [vmem:[#allocation3 + $0x120] sm:$0xff] %vm1802, %v1752
      %1840 = vst.msk [vmem:[#allocation3 + $0x128] sm:$0xff] %vm1802, %v1754
      %1841 = vst.msk [vmem:[#allocation3 + $0x130] sm:$0xff] %vm1802, %v1756
      %1842 = vst.msk [vmem:[#allocation3 + $0x138] sm:$0xff] %vm1802, %v1758
      %1843 = vst.msk [vmem:[#allocation3 + $0x140] sm:$0xff] %vm1802, %v1760
      %v1844 = vld [vmem:[%s273 + $0x36] sm:$0xff]
      %v1845 = vld [vmem:[%s273 + $0x3e] sm:$0xff]
      %v1846 = vld [vmem:[%s273 + $0x46] sm:$0xff]
      %v1847 = vld [vmem:[%s273 + $0x4e] sm:$0xff]
      %v1848 = vld [vmem:[%s273 + $0x56] sm:$0xff]
      %v1849 = vld [vmem:[%s273 + $0x5e] sm:$0xff]
      %v1850 = vld [vmem:[%s273 + $0x66] sm:$0xff]
      %v1851 = vld [vmem:[%s273 + $0x6e] sm:$0xff]
      %v1852 = vld [vmem:[%s273 + $0x76] sm:$0xff]
      %v1853 = vld [vmem:[%s273 + $0x7e] sm:$0xff]
      %v1854 = vld [vmem:[%s273 + $0x86] sm:$0xff]
      %v1855 = vld [vmem:[%s273 + $0x8e] sm:$0xff]
      %v1856 = vld [vmem:[%s273 + $0x96] sm:$0xff]
      %v1857 = vld [vmem:[%s273 + $0x9e] sm:$0xff]
      %v1858 = vld [vmem:[%s273 + $0xa6] sm:$0xff]
      %v1859 = vld [vmem:[%s273 + $0xae] sm:$0xff]
      %v1860 = vld [vmem:[%s273 + $0xb6] sm:$0xff]
      %v1861 = vld [vmem:[%s273 + $0xbe] sm:$0xff]
      %v1862 = vld [vmem:[%s273 + $0xc6] sm:$0xff]
      %v1863 = vld [vmem:[%s273 + $0xce] sm:$0xff]
      %v1864 = vld [vmem:[%s273 + $0xd6] sm:$0xff]
      %v1865 = vld [vmem:[%s273 + $0xde] sm:$0xff]
      %v1866 = vld [vmem:[%s273 + $0xe6] sm:$0xff]
      %v1867 = vld [vmem:[%s273 + $0xee] sm:$0xff]
      %v1868 = vld [vmem:[%s273 + $0xf6] sm:$0xff]
      %v1869 = vld [vmem:[%s273 + $0xfe] sm:$0xff]
      %v1870 = vld [vmem:[%s273 + $0x106] sm:$0xff]
      %v1871 = vld [vmem:[%s273 + $0x10e] sm:$0xff]
      %v1872 = vld [vmem:[%s273 + $0x116] sm:$0xff]
      %v1873 = vld [vmem:[%s273 + $0x11e] sm:$0xff]
      %v1874 = vld [vmem:[%s273 + $0x126] sm:$0xff]
      %v1875 = vld [vmem:[%s273 + $0x12e] sm:$0xff]
      %v1876 = vld [vmem:[%s273 + $0x136] sm:$0xff]
      %v1877 = vld [vmem:[%s273 + $0x13e] sm:$0xff]
      %v1878 = vld [vmem:[%s273 + $0x146] sm:$0xff]
      %v1879 = vld [vmem:[%s273 + $0x14e] sm:$0xff]
      %v1880 = vld [vmem:[%s273 + $0x156] sm:$0xff]
      %v1881 = vld [vmem:[%s273 + $0x15e] sm:$0xff]
      %v1882 = vld [vmem:[%s273 + $0x166] sm:$0xff]
      %v1883 = vld [vmem:[%s273 + $0x16e] sm:$0xff]
      %v1884 = vld [vmem:[%s273 + $0x176] sm:$0xff]
      %1926 = vrot.lane.b32.xlu0 %v1844, 28
      %v1927 = vpop.permute.xlu0 %1926
      %1928 = vrot.lane.b32.xlu0 %v1845, 28
      %v1929 = vpop.permute.xlu0 %1928
      %1930 = vrot.lane.b32.xlu0 %v1846, 28
      %v1931 = vpop.permute.xlu0 %1930
      %1932 = vrot.lane.b32.xlu0 %v1847, 28
      %v1933 = vpop.permute.xlu0 %1932
      %1934 = vrot.lane.b32.xlu0 %v1848, 28
      %v1935 = vpop.permute.xlu0 %1934
      %1936 = vrot.lane.b32.xlu0 %v1849, 28
      %v1937 = vpop.permute.xlu0 %1936
      %1938 = vrot.lane.b32.xlu0 %v1850, 28
      %v1939 = vpop.permute.xlu0 %1938
      %1940 = vrot.lane.b32.xlu0 %v1851, 28
      %v1941 = vpop.permute.xlu0 %1940
      %1942 = vrot.lane.b32.xlu0 %v1852, 28
      %v1943 = vpop.permute.xlu0 %1942
      %1944 = vrot.lane.b32.xlu0 %v1853, 28
      %v1945 = vpop.permute.xlu0 %1944
      %1946 = vrot.lane.b32.xlu0 %v1854, 28
      %v1947 = vpop.permute.xlu0 %1946
      %1948 = vrot.lane.b32.xlu0 %v1855, 28
      %v1949 = vpop.permute.xlu0 %1948
      %1950 = vrot.lane.b32.xlu0 %v1856, 28
      %v1951 = vpop.permute.xlu0 %1950
      %1952 = vrot.lane.b32.xlu0 %v1857, 28
      %v1953 = vpop.permute.xlu0 %1952
      %1954 = vrot.lane.b32.xlu0 %v1858, 28
      %v1955 = vpop.permute.xlu0 %1954
      %1956 = vrot.lane.b32.xlu0 %v1859, 28
      %v1957 = vpop.permute.xlu0 %1956
      %1958 = vrot.lane.b32.xlu0 %v1860, 28
      %v1959 = vpop.permute.xlu0 %1958
      %1960 = vrot.lane.b32.xlu0 %v1861, 28
      %v1961 = vpop.permute.xlu0 %1960
      %1962 = vrot.lane.b32.xlu0 %v1862, 28
      %v1963 = vpop.permute.xlu0 %1962
      %1964 = vrot.lane.b32.xlu0 %v1863, 28
      %v1965 = vpop.permute.xlu0 %1964
      %1966 = vrot.lane.b32.xlu0 %v1864, 28
      %v1967 = vpop.permute.xlu0 %1966
      %1968 = vrot.lane.b32.xlu0 %v1865, 28
      %v1969 = vpop.permute.xlu0 %1968
      %1970 = vrot.lane.b32.xlu0 %v1866, 28
      %v1971 = vpop.permute.xlu0 %1970
      %1972 = vrot.lane.b32.xlu0 %v1867, 28
      %v1973 = vpop.permute.xlu0 %1972
      %1974 = vrot.lane.b32.xlu0 %v1868, 28
      %v1975 = vpop.permute.xlu0 %1974
      %1976 = vrot.lane.b32.xlu0 %v1869, 28
      %v1977 = vpop.permute.xlu0 %1976
      %1978 = vrot.lane.b32.xlu0 %v1870, 28
      %v1979 = vpop.permute.xlu0 %1978
      %1980 = vrot.lane.b32.xlu0 %v1871, 28
      %v1981 = vpop.permute.xlu0 %1980
      %1982 = vrot.lane.b32.xlu0 %v1872, 28
      %v1983 = vpop.permute.xlu0 %1982
      %1984 = vrot.lane.b32.xlu0 %v1873, 28
      %v1985 = vpop.permute.xlu0 %1984
      %1986 = vrot.lane.b32.xlu0 %v1874, 28
      %v1987 = vpop.permute.xlu0 %1986
      %1988 = vrot.lane.b32.xlu0 %v1875, 28
      %v1989 = vpop.permute.xlu0 %1988
      %1990 = vrot.lane.b32.xlu0 %v1876, 28
      %v1991 = vpop.permute.xlu0 %1990
      %1992 = vrot.lane.b32.xlu0 %v1877, 28
      %v1993 = vpop.permute.xlu0 %1992
      %1994 = vrot.lane.b32.xlu0 %v1878, 28
      %v1995 = vpop.permute.xlu0 %1994
      %1996 = vrot.lane.b32.xlu0 %v1879, 28
      %v1997 = vpop.permute.xlu0 %1996
      %1998 = vrot.lane.b32.xlu0 %v1880, 28
      %v1999 = vpop.permute.xlu0 %1998
      %2000 = vrot.lane.b32.xlu0 %v1881, 28
      %v2001 = vpop.permute.xlu0 %2000
      %2002 = vrot.lane.b32.xlu0 %v1882, 28
      %v2003 = vpop.permute.xlu0 %2002
      %2004 = vrot.lane.b32.xlu0 %v1883, 28
      %v2005 = vpop.permute.xlu0 %2004
      %2006 = vrot.lane.b32.xlu0 %v1884, 28
      %v2007 = vpop.permute.xlu0 %2006
      %vm2049 = vcmask 261344
      %2050 = vst.msk [vmem:[#allocation3] sm:$0xff] %vm2049, %v1927
      %2051 = vst.msk [vmem:[#allocation3 + $0x8] sm:$0xff] %vm2049, %v1929
      %2052 = vst.msk [vmem:[#allocation3 + $0x10] sm:$0xff] %vm2049, %v1931
      %2053 = vst.msk [vmem:[#allocation3 + $0x18] sm:$0xff] %vm2049, %v1933
      %2054 = vst.msk [vmem:[#allocation3 + $0x20] sm:$0xff] %vm2049, %v1935
      %2055 = vst.msk [vmem:[#allocation3 + $0x28] sm:$0xff] %vm2049, %v1937
      %2056 = vst.msk [vmem:[#allocation3 + $0x30] sm:$0xff] %vm2049, %v1939
      %2057 = vst.msk [vmem:[#allocation3 + $0x38] sm:$0xff] %vm2049, %v1941
      %2058 = vst.msk [vmem:[#allocation3 + $0x40] sm:$0xff] %vm2049, %v1943
      %2059 = vst.msk [vmem:[#allocation3 + $0x48] sm:$0xff] %vm2049, %v1945
      %2060 = vst.msk [vmem:[#allocation3 + $0x50] sm:$0xff] %vm2049, %v1947
      %2061 = vst.msk [vmem:[#allocation3 + $0x58] sm:$0xff] %vm2049, %v1949
      %2062 = vst.msk [vmem:[#allocation3 + $0x60] sm:$0xff] %vm2049, %v1951
      %2063 = vst.msk [vmem:[#allocation3 + $0x68] sm:$0xff] %vm2049, %v1953
      %2064 = vst.msk [vmem:[#allocation3 + $0x70] sm:$0xff] %vm2049, %v1955
      %2065 = vst.msk [vmem:[#allocation3 + $0x78] sm:$0xff] %vm2049, %v1957
      %2066 = vst.msk [vmem:[#allocation3 + $0x80] sm:$0xff] %vm2049, %v1959
      %2067 = vst.msk [vmem:[#allocation3 + $0x88] sm:$0xff] %vm2049, %v1961
      %2068 = vst.msk [vmem:[#allocation3 + $0x90] sm:$0xff] %vm2049, %v1963
      %2069 = vst.msk [vmem:[#allocation3 + $0x98] sm:$0xff] %vm2049, %v1965
      %2070 = vst.msk [vmem:[#allocation3 + $0xa0] sm:$0xff] %vm2049, %v1967
      %2071 = vst.msk [vmem:[#allocation3 + $0xa8] sm:$0xff] %vm2049, %v1969
      %2072 = vst.msk [vmem:[#allocation3 + $0xb0] sm:$0xff] %vm2049, %v1971
      %2073 = vst.msk [vmem:[#allocation3 + $0xb8] sm:$0xff] %vm2049, %v1973
      %2074 = vst.msk [vmem:[#allocation3 + $0xc0] sm:$0xff] %vm2049, %v1975
      %2075 = vst.msk [vmem:[#allocation3 + $0xc8] sm:$0xff] %vm2049, %v1977
      %2076 = vst.msk [vmem:[#allocation3 + $0xd0] sm:$0xff] %vm2049, %v1979
      %2077 = vst.msk [vmem:[#allocation3 + $0xd8] sm:$0xff] %vm2049, %v1981
      %2078 = vst.msk [vmem:[#allocation3 + $0xe0] sm:$0xff] %vm2049, %v1983
      %2079 = vst.msk [vmem:[#allocation3 + $0xe8] sm:$0xff] %vm2049, %v1985
      %2080 = vst.msk [vmem:[#allocation3 + $0xf0] sm:$0xff] %vm2049, %v1987
      %2081 = vst.msk [vmem:[#allocation3 + $0xf8] sm:$0xff] %vm2049, %v1989
      %2082 = vst.msk [vmem:[#allocation3 + $0x100] sm:$0xff] %vm2049, %v1991
      %2083 = vst.msk [vmem:[#allocation3 + $0x108] sm:$0xff] %vm2049, %v1993
      %2084 = vst.msk [vmem:[#allocation3 + $0x110] sm:$0xff] %vm2049, %v1995
      %2085 = vst.msk [vmem:[#allocation3 + $0x118] sm:$0xff] %vm2049, %v1997
      %2086 = vst.msk [vmem:[#allocation3 + $0x120] sm:$0xff] %vm2049, %v1999
      %2087 = vst.msk [vmem:[#allocation3 + $0x128] sm:$0xff] %vm2049, %v2001
      %2088 = vst.msk [vmem:[#allocation3 + $0x130] sm:$0xff] %vm2049, %v2003
      %2089 = vst.msk [vmem:[#allocation3 + $0x138] sm:$0xff] %vm2049, %v2005
      %2090 = vst.msk [vmem:[#allocation3 + $0x140] sm:$0xff] %vm2049, %v2007
      %v2091 = vld [vmem:[%s273 + $0x37] sm:$0xff]
      %v2092 = vld [vmem:[%s273 + $0x3f] sm:$0xff]
      %v2093 = vld [vmem:[%s273 + $0x47] sm:$0xff]
      %v2094 = vld [vmem:[%s273 + $0x4f] sm:$0xff]
      %v2095 = vld [vmem:[%s273 + $0x57] sm:$0xff]
      %v2096 = vld [vmem:[%s273 + $0x5f] sm:$0xff]
      %v2097 = vld [vmem:[%s273 + $0x67] sm:$0xff]
      %v2098 = vld [vmem:[%s273 + $0x6f] sm:$0xff]
      %v2099 = vld [vmem:[%s273 + $0x77] sm:$0xff]
      %v2100 = vld [vmem:[%s273 + $0x7f] sm:$0xff]
      %v2101 = vld [vmem:[%s273 + $0x87] sm:$0xff]
      %v2102 = vld [vmem:[%s273 + $0x8f] sm:$0xff]
      %v2103 = vld [vmem:[%s273 + $0x97] sm:$0xff]
      %v2104 = vld [vmem:[%s273 + $0x9f] sm:$0xff]
      %v2105 = vld [vmem:[%s273 + $0xa7] sm:$0xff]
      %v2106 = vld [vmem:[%s273 + $0xaf] sm:$0xff]
      %v2107 = vld [vmem:[%s273 + $0xb7] sm:$0xff]
      %v2108 = vld [vmem:[%s273 + $0xbf] sm:$0xff]
      %v2109 = vld [vmem:[%s273 + $0xc7] sm:$0xff]
      %v2110 = vld [vmem:[%s273 + $0xcf] sm:$0xff]
      %v2111 = vld [vmem:[%s273 + $0xd7] sm:$0xff]
      %v2112 = vld [vmem:[%s273 + $0xdf] sm:$0xff]
      %v2113 = vld [vmem:[%s273 + $0xe7] sm:$0xff]
      %v2114 = vld [vmem:[%s273 + $0xef] sm:$0xff]
      %v2115 = vld [vmem:[%s273 + $0xf7] sm:$0xff]
      %v2116 = vld [vmem:[%s273 + $0xff] sm:$0xff]
      %v2117 = vld [vmem:[%s273 + $0x107] sm:$0xff]
      %v2118 = vld [vmem:[%s273 + $0x10f] sm:$0xff]
      %v2119 = vld [vmem:[%s273 + $0x117] sm:$0xff]
      %v2120 = vld [vmem:[%s273 + $0x11f] sm:$0xff]
      %v2121 = vld [vmem:[%s273 + $0x127] sm:$0xff]
      %v2122 = vld [vmem:[%s273 + $0x12f] sm:$0xff]
      %v2123 = vld [vmem:[%s273 + $0x137] sm:$0xff]
      %v2124 = vld [vmem:[%s273 + $0x13f] sm:$0xff]
      %v2125 = vld [vmem:[%s273 + $0x147] sm:$0xff]
      %v2126 = vld [vmem:[%s273 + $0x14f] sm:$0xff]
      %v2127 = vld [vmem:[%s273 + $0x157] sm:$0xff]
      %v2128 = vld [vmem:[%s273 + $0x15f] sm:$0xff]
      %v2129 = vld [vmem:[%s273 + $0x167] sm:$0xff]
      %v2130 = vld [vmem:[%s273 + $0x16f] sm:$0xff]
      %v2131 = vld [vmem:[%s273 + $0x177] sm:$0xff]
      %2173 = vrot.lane.b32.xlu0 %v2091, 32
      %v2174 = vpop.permute.xlu0 %2173
      %2175 = vrot.lane.b32.xlu0 %v2092, 32
      %v2176 = vpop.permute.xlu0 %2175
      %2177 = vrot.lane.b32.xlu0 %v2093, 32
      %v2178 = vpop.permute.xlu0 %2177
      %2179 = vrot.lane.b32.xlu0 %v2094, 32
      %v2180 = vpop.permute.xlu0 %2179
      %2181 = vrot.lane.b32.xlu0 %v2095, 32
      %v2182 = vpop.permute.xlu0 %2181
      %2183 = vrot.lane.b32.xlu0 %v2096, 32
      %v2184 = vpop.permute.xlu0 %2183
      %2185 = vrot.lane.b32.xlu0 %v2097, 32
      %v2186 = vpop.permute.xlu0 %2185
      %2187 = vrot.lane.b32.xlu0 %v2098, 32
      %v2188 = vpop.permute.xlu0 %2187
      %2189 = vrot.lane.b32.xlu0 %v2099, 32
      %v2190 = vpop.permute.xlu0 %2189
      %2191 = vrot.lane.b32.xlu0 %v2100, 32
      %v2192 = vpop.permute.xlu0 %2191
      %2193 = vrot.lane.b32.xlu0 %v2101, 32
      %v2194 = vpop.permute.xlu0 %2193
      %2195 = vrot.lane.b32.xlu0 %v2102, 32
      %v2196 = vpop.permute.xlu0 %2195
      %2197 = vrot.lane.b32.xlu0 %v2103, 32
      %v2198 = vpop.permute.xlu0 %2197
      %2199 = vrot.lane.b32.xlu0 %v2104, 32
      %v2200 = vpop.permute.xlu0 %2199
      %2201 = vrot.lane.b32.xlu0 %v2105, 32
      %v2202 = vpop.permute.xlu0 %2201
      %2203 = vrot.lane.b32.xlu0 %v2106, 32
      %v2204 = vpop.permute.xlu0 %2203
      %2205 = vrot.lane.b32.xlu0 %v2107, 32
      %v2206 = vpop.permute.xlu0 %2205
      %2207 = vrot.lane.b32.xlu0 %v2108, 32
      %v2208 = vpop.permute.xlu0 %2207
      %2209 = vrot.lane.b32.xlu0 %v2109, 32
      %v2210 = vpop.permute.xlu0 %2209
      %2211 = vrot.lane.b32.xlu0 %v2110, 32
      %v2212 = vpop.permute.xlu0 %2211
      %2213 = vrot.lane.b32.xlu0 %v2111, 32
      %v2214 = vpop.permute.xlu0 %2213
      %2215 = vrot.lane.b32.xlu0 %v2112, 32
      %v2216 = vpop.permute.xlu0 %2215
      %2217 = vrot.lane.b32.xlu0 %v2113, 32
      %v2218 = vpop.permute.xlu0 %2217
      %2219 = vrot.lane.b32.xlu0 %v2114, 32
      %v2220 = vpop.permute.xlu0 %2219
      %2221 = vrot.lane.b32.xlu0 %v2115, 32
      %v2222 = vpop.permute.xlu0 %2221
      %2223 = vrot.lane.b32.xlu0 %v2116, 32
      %v2224 = vpop.permute.xlu0 %2223
      %2225 = vrot.lane.b32.xlu0 %v2117, 32
      %v2226 = vpop.permute.xlu0 %2225
      %2227 = vrot.lane.b32.xlu0 %v2118, 32
      %v2228 = vpop.permute.xlu0 %2227
      %2229 = vrot.lane.b32.xlu0 %v2119, 32
      %v2230 = vpop.permute.xlu0 %2229
      %2231 = vrot.lane.b32.xlu0 %v2120, 32
      %v2232 = vpop.permute.xlu0 %2231
      %2233 = vrot.lane.b32.xlu0 %v2121, 32
      %v2234 = vpop.permute.xlu0 %2233
      %2235 = vrot.lane.b32.xlu0 %v2122, 32
      %v2236 = vpop.permute.xlu0 %2235
      %2237 = vrot.lane.b32.xlu0 %v2123, 32
      %v2238 = vpop.permute.xlu0 %2237
      %2239 = vrot.lane.b32.xlu0 %v2124, 32
      %v2240 = vpop.permute.xlu0 %2239
      %2241 = vrot.lane.b32.xlu0 %v2125, 32
      %v2242 = vpop.permute.xlu0 %2241
      %2243 = vrot.lane.b32.xlu0 %v2126, 32
      %v2244 = vpop.permute.xlu0 %2243
      %2245 = vrot.lane.b32.xlu0 %v2127, 32
      %v2246 = vpop.permute.xlu0 %2245
      %2247 = vrot.lane.b32.xlu0 %v2128, 32
      %v2248 = vpop.permute.xlu0 %2247
      %2249 = vrot.lane.b32.xlu0 %v2129, 32
      %v2250 = vpop.permute.xlu0 %2249
      %2251 = vrot.lane.b32.xlu0 %v2130, 32
      %v2252 = vpop.permute.xlu0 %2251
      %2253 = vrot.lane.b32.xlu0 %v2131, 32
      %v2254 = vpop.permute.xlu0 %2253
      %vm2296 = vcmask 294144
      %2297 = vst.msk [vmem:[#allocation3] sm:$0xff] %vm2296, %v2174
      %2298 = vst.msk [vmem:[#allocation3 + $0x8] sm:$0xff] %vm2296, %v2176
      %2299 = vst.msk [vmem:[#allocation3 + $0x10] sm:$0xff] %vm2296, %v2178
      %2300 = vst.msk [vmem:[#allocation3 + $0x18] sm:$0xff] %vm2296, %v2180
      %2301 = vst.msk [vmem:[#allocation3 + $0x20] sm:$0xff] %vm2296, %v2182
      %2302 = vst.msk [vmem:[#allocation3 + $0x28] sm:$0xff] %vm2296, %v2184
      %2303 = vst.msk [vmem:[#allocation3 + $0x30] sm:$0xff] %vm2296, %v2186
      %2304 = vst.msk [vmem:[#allocation3 + $0x38] sm:$0xff] %vm2296, %v2188
      %2305 = vst.msk [vmem:[#allocation3 + $0x40] sm:$0xff] %vm2296, %v2190
      %2306 = vst.msk [vmem:[#allocation3 + $0x48] sm:$0xff] %vm2296, %v2192
      %2307 = vst.msk [vmem:[#allocation3 + $0x50] sm:$0xff] %vm2296, %v2194
      %2308 = vst.msk [vmem:[#allocation3 + $0x58] sm:$0xff] %vm2296, %v2196
      %2309 = vst.msk [vmem:[#allocation3 + $0x60] sm:$0xff] %vm2296, %v2198
      %2310 = vst.msk [vmem:[#allocation3 + $0x68] sm:$0xff] %vm2296, %v2200
      %2311 = vst.msk [vmem:[#allocation3 + $0x70] sm:$0xff] %vm2296, %v2202
      %2312 = vst.msk [vmem:[#allocation3 + $0x78] sm:$0xff] %vm2296, %v2204
      %2313 = vst.msk [vmem:[#allocation3 + $0x80] sm:$0xff] %vm2296, %v2206
      %2314 = vst.msk [vmem:[#allocation3 + $0x88] sm:$0xff] %vm2296, %v2208
      %2315 = vst.msk [vmem:[#allocation3 + $0x90] sm:$0xff] %vm2296, %v2210
      %2316 = vst.msk [vmem:[#allocation3 + $0x98] sm:$0xff] %vm2296, %v2212
      %2317 = vst.msk [vmem:[#allocation3 + $0xa0] sm:$0xff] %vm2296, %v2214
      %2318 = vst.msk [vmem:[#allocation3 + $0xa8] sm:$0xff] %vm2296, %v2216
      %2319 = vst.msk [vmem:[#allocation3 + $0xb0] sm:$0xff] %vm2296, %v2218
      %2320 = vst.msk [vmem:[#allocation3 + $0xb8] sm:$0xff] %vm2296, %v2220
      %2321 = vst.msk [vmem:[#allocation3 + $0xc0] sm:$0xff] %vm2296, %v2222
      %2322 = vst.msk [vmem:[#allocation3 + $0xc8] sm:$0xff] %vm2296, %v2224
      %2323 = vst.msk [vmem:[#allocation3 + $0xd0] sm:$0xff] %vm2296, %v2226
      %2324 = vst.msk [vmem:[#allocation3 + $0xd8] sm:$0xff] %vm2296, %v2228
      %2325 = vst.msk [vmem:[#allocation3 + $0xe0] sm:$0xff] %vm2296, %v2230
      %2326 = vst.msk [vmem:[#allocation3 + $0xe8] sm:$0xff] %vm2296, %v2232
      %2327 = vst.msk [vmem:[#allocation3 + $0xf0] sm:$0xff] %vm2296, %v2234
      %2328 = vst.msk [vmem:[#allocation3 + $0xf8] sm:$0xff] %vm2296, %v2236
      %2329 = vst.msk [vmem:[#allocation3 + $0x100] sm:$0xff] %vm2296, %v2238
      %2330 = vst.msk [vmem:[#allocation3 + $0x108] sm:$0xff] %vm2296, %v2240
      %2331 = vst.msk [vmem:[#allocation3 + $0x110] sm:$0xff] %vm2296, %v2242
      %2332 = vst.msk [vmem:[#allocation3 + $0x118] sm:$0xff] %vm2296, %v2244
      %2333 = vst.msk [vmem:[#allocation3 + $0x120] sm:$0xff] %vm2296, %v2246
      %2334 = vst.msk [vmem:[#allocation3 + $0x128] sm:$0xff] %vm2296, %v2248
      %2335 = vst.msk [vmem:[#allocation3 + $0x130] sm:$0xff] %vm2296, %v2250
      %2336 = vst.msk [vmem:[#allocation3 + $0x138] sm:$0xff] %vm2296, %v2252
      %2337 = vst.msk [vmem:[#allocation3 + $0x140] sm:$0xff] %vm2296, %v2254
      %v2338 = vld [vmem:[#allocation3] sm:$0xff]
      %v2339 = vld [vmem:[#allocation3 + $0x8] sm:$0xff]
      %v2340 = vld [vmem:[#allocation3 + $0x10] sm:$0xff]
      %v2341 = vld [vmem:[#allocation3 + $0x18] sm:$0xff]
      %v2342 = vld [vmem:[#allocation3 + $0x20] sm:$0xff]
      %v2343 = vld [vmem:[#allocation3 + $0x28] sm:$0xff]
      %v2344 = vld [vmem:[#allocation3 + $0x30] sm:$0xff]
      %v2345 = vld [vmem:[#allocation3 + $0x38] sm:$0xff]
      %v2346 = vld [vmem:[#allocation3 + $0x40] sm:$0xff]
      %v2347 = vld [vmem:[#allocation3 + $0x48] sm:$0xff]
      %v2348 = vld [vmem:[#allocation3 + $0x50] sm:$0xff]
      %v2349 = vld [vmem:[#allocation3 + $0x58] sm:$0xff]
      %v2350 = vld [vmem:[#allocation3 + $0x60] sm:$0xff]
      %v2351 = vld [vmem:[#allocation3 + $0x68] sm:$0xff]
      %v2352 = vld [vmem:[#allocation3 + $0x70] sm:$0xff]
      %v2353 = vld [vmem:[#allocation3 + $0x78] sm:$0xff]
      %v2354 = vld [vmem:[#allocation3 + $0x80] sm:$0xff]
      %v2355 = vld [vmem:[#allocation3 + $0x88] sm:$0xff]
      %v2356 = vld [vmem:[#allocation3 + $0x90] sm:$0xff]
      %v2357 = vld [vmem:[#allocation3 + $0x98] sm:$0xff]
      %v2358 = vld [vmem:[#allocation3 + $0xa0] sm:$0xff]
      %v2359 = vld [vmem:[#allocation3 + $0xa8] sm:$0xff]
      %v2360 = vld [vmem:[#allocation3 + $0xb0] sm:$0xff]
      %v2361 = vld [vmem:[#allocation3 + $0xb8] sm:$0xff]
      %v2362 = vld [vmem:[#allocation3 + $0xc0] sm:$0xff]
      %v2363 = vld [vmem:[#allocation3 + $0xc8] sm:$0xff]
      %v2364 = vld [vmem:[#allocation3 + $0xd0] sm:$0xff]
      %v2365 = vld [vmem:[#allocation3 + $0xd8] sm:$0xff]
      %v2366 = vld [vmem:[#allocation3 + $0xe0] sm:$0xff]
      %v2367 = vld [vmem:[#allocation3 + $0xe8] sm:$0xff]
      %v2368 = vld [vmem:[#allocation3 + $0xf0] sm:$0xff]
      %v2369 = vld [vmem:[#allocation3 + $0xf8] sm:$0xff]
      %v2370 = vld [vmem:[#allocation3 + $0x100] sm:$0xff]
      %v2371 = vld [vmem:[#allocation3 + $0x108] sm:$0xff]
      %v2372 = vld [vmem:[#allocation3 + $0x110] sm:$0xff]
      %v2373 = vld [vmem:[#allocation3 + $0x118] sm:$0xff]
      %v2374 = vld [vmem:[#allocation3 + $0x120] sm:$0xff]
      %v2375 = vld [vmem:[#allocation3 + $0x128] sm:$0xff]
      %v2376 = vld [vmem:[#allocation3 + $0x130] sm:$0xff]
      %v2377 = vld [vmem:[#allocation3 + $0x138] sm:$0xff]
      %v2378 = vld [vmem:[#allocation3 + $0x140] sm:$0xff]
      %v2379 = vld [vmem:[%s1] sm:$0xff]
      %v2380 = vld [vmem:[%s1 + $0x8] sm:$0xff]
      %v2381 = vld [vmem:[%s1 + $0x10] sm:$0xff]
      %v2382 = vld [vmem:[%s1 + $0x18] sm:$0xff]
      %v2383 = vld [vmem:[%s1 + $0x20] sm:$0xf]
      %v2384 = vld [vmem:[%s2] sm:$0x1]
      %v2386 = vperm.slane %v2384, 0
      %vm2388 = vcmask 293888
      %v2390 = vsel %vm2388, %v2338, 0
      %v2393 = vsel %vm2388, %v2339, 0
      %v2396 = vsel %vm2388, %v2340, 0
      %v2399 = vsel %vm2388, %v2341, 0
      %v2402 = vsel %vm2388, %v2342, 0
      %v2405 = vsel %vm2388, %v2343, 0
      %v2408 = vsel %vm2388, %v2344, 0
      %v2411 = vsel %vm2388, %v2345, 0
      %v2414 = vsel %vm2388, %v2346, 0
      %v2417 = vsel %vm2388, %v2347, 0
      %v2420 = vsel %vm2388, %v2348, 0
      %v2423 = vsel %vm2388, %v2349, 0
      %v2426 = vsel %vm2388, %v2350, 0
      %v2429 = vsel %vm2388, %v2351, 0
      %v2432 = vsel %vm2388, %v2352, 0
      %v2435 = vsel %vm2388, %v2353, 0
      %v2438 = vsel %vm2388, %v2354, 0
      %v2441 = vsel %vm2388, %v2355, 0
      %v2444 = vsel %vm2388, %v2356, 0
      %v2447 = vsel %vm2388, %v2357, 0
      %v2450 = vsel %vm2388, %v2358, 0
      %v2453 = vsel %vm2388, %v2359, 0
      %v2456 = vsel %vm2388, %v2360, 0
      %v2459 = vsel %vm2388, %v2361, 0
      %v2462 = vsel %vm2388, %v2362, 0
      %v2465 = vsel %vm2388, %v2363, 0
      %v2468 = vsel %vm2388, %v2364, 0
      %v2471 = vsel %vm2388, %v2365, 0
      %v2474 = vsel %vm2388, %v2366, 0
      %v2477 = vsel %vm2388, %v2367, 0
      %v2480 = vsel %vm2388, %v2368, 0
      %v2483 = vsel %vm2388, %v2369, 0
      %v2486 = vsel %vm2388, %v2370, 0
      %v2489 = vsel %vm2388, %v2371, 0
      %v2492 = vsel %vm2388, %v2372, 0
      %v2495 = vsel %vm2388, %v2373, 0
      %v2498 = vsel %vm2388, %v2374, 0
      %v2501 = vsel %vm2388, %v2375, 0
      %v2504 = vsel %vm2388, %v2376, 0
      %v2507 = vsel %vm2388, %v2377, 0
      %v2510 = vsel %vm2388, %v2378, 0
      %vm2512 = vcmask 1043456
      %v2514 = vsel %vm2512, %v2383, 0
      %2516 = vmatpush.msra.mxu0 0.0
      %2517 = vmatpush.msra.mxu0 0.0
      %2518 = vmatpush.msra.mxu0 0.0
      %2519 = vmatpush.msra.mxu0 0.0
      %2520 = vmatpush.msra.mxu0 0.0
      %2521 = vmatpush.msra.mxu0 0.0
      %2522 = vmatpush.msra.mxu0 0.0
      %2523 = vmatpush.msra.mxu0 0.0
      %2524 = vmatpush.msra.mxu0 0.0
      %2525 = vmatpush.msra.mxu0 0.0
      %2526 = vmatpush.msra.mxu0 0.0
      %2527 = vmatpush.msra.mxu0 %v2514
      %2528 = vmatpush.msra.mxu0 %v2382
      %2529 = vmatpush.msra.mxu0 %v2381
      %2530 = vmatpush.msra.mxu0 %v2380
      %2531 = vmatpush.msra.mxu0 %v2379
      %2532 = vmatmul.f32.gmra.mxu0 %v2390
      %v2533 = vpop.f32.mrf.mxu0
      %v2534 = vadd.f32 %v2386, %v2533
      %2535 = vmatmul.f32.gmra.mxu0 %v2393
      %v2536 = vpop.f32.mrf.mxu0
      %v2537 = vadd.f32 %v2386, %v2536
      %2538 = vmatmul.f32.gmra.mxu0 %v2396
      %v2539 = vpop.f32.mrf.mxu0
      %v2540 = vadd.f32 %v2386, %v2539
      %2541 = vmatmul.f32.gmra.mxu0 %v2399
      %v2542 = vpop.f32.mrf.mxu0
      %v2543 = vadd.f32 %v2386, %v2542
      %2544 = vmatmul.f32.gmra.mxu0 %v2402
      %v2545 = vpop.f32.mrf.mxu0
      %v2546 = vadd.f32 %v2386, %v2545
      %2547 = vmatmul.f32.gmra.mxu0 %v2405
      %v2548 = vpop.f32.mrf.mxu0
      %v2549 = vadd.f32 %v2386, %v2548
      %2550 = vmatmul.f32.gmra.mxu0 %v2408
      %v2551 = vpop.f32.mrf.mxu0
      %v2552 = vadd.f32 %v2386, %v2551
      %2553 = vmatmul.f32.gmra.mxu0 %v2411
      %v2554 = vpop.f32.mrf.mxu0
      %v2555 = vadd.f32 %v2386, %v2554
      %2556 = vmatmul.f32.gmra.mxu0 %v2414
      %v2557 = vpop.f32.mrf.mxu0
      %v2558 = vadd.f32 %v2386, %v2557
      %2559 = vmatmul.f32.gmra.mxu0 %v2417
      %v2560 = vpop.f32.mrf.mxu0
      %v2561 = vadd.f32 %v2386, %v2560
      %2562 = vmatmul.f32.gmra.mxu0 %v2420
      %v2563 = vpop.f32.mrf.mxu0
      %v2564 = vadd.f32 %v2386, %v2563
      %2565 = vmatmul.f32.gmra.mxu0 %v2423
      %v2566 = vpop.f32.mrf.mxu0
      %v2567 = vadd.f32 %v2386, %v2566
      %2568 = vmatmul.f32.gmra.mxu0 %v2426
      %v2569 = vpop.f32.mrf.mxu0
      %v2570 = vadd.f32 %v2386, %v2569
      %2571 = vmatmul.f32.gmra.mxu0 %v2429
      %v2572 = vpop.f32.mrf.mxu0
      %v2573 = vadd.f32 %v2386, %v2572
      %2574 = vmatmul.f32.gmra.mxu0 %v2432
      %v2575 = vpop.f32.mrf.mxu0
      %v2576 = vadd.f32 %v2386, %v2575
      %2577 = vmatmul.f32.gmra.mxu0 %v2435
      %v2578 = vpop.f32.mrf.mxu0
      %v2579 = vadd.f32 %v2386, %v2578
      %2580 = vmatmul.f32.gmra.mxu0 %v2438
      %v2581 = vpop.f32.mrf.mxu0
      %v2582 = vadd.f32 %v2386, %v2581
      %2583 = vmatmul.f32.gmra.mxu0 %v2441
      %v2584 = vpop.f32.mrf.mxu0
      %v2585 = vadd.f32 %v2386, %v2584
      %2586 = vmatmul.f32.gmra.mxu0 %v2444
      %v2587 = vpop.f32.mrf.mxu0
      %v2588 = vadd.f32 %v2386, %v2587
      %2589 = vmatmul.f32.gmra.mxu0 %v2447
      %v2590 = vpop.f32.mrf.mxu0
      %v2591 = vadd.f32 %v2386, %v2590
      %2592 = vmatmul.f32.gmra.mxu0 %v2450
      %v2593 = vpop.f32.mrf.mxu0
      %v2594 = vadd.f32 %v2386, %v2593
      %2595 = vmatmul.f32.gmra.mxu0 %v2453
      %v2596 = vpop.f32.mrf.mxu0
      %v2597 = vadd.f32 %v2386, %v2596
      %2598 = vmatmul.f32.gmra.mxu0 %v2456
      %v2599 = vpop.f32.mrf.mxu0
      %v2600 = vadd.f32 %v2386, %v2599
      %2601 = vmatmul.f32.gmra.mxu0 %v2459
      %v2602 = vpop.f32.mrf.mxu0
      %v2603 = vadd.f32 %v2386, %v2602
      %2604 = vmatmul.f32.gmra.mxu0 %v2462
      %v2605 = vpop.f32.mrf.mxu0
      %v2606 = vadd.f32 %v2386, %v2605
      %2607 = vmatmul.f32.gmra.mxu0 %v2465
      %v2608 = vpop.f32.mrf.mxu0
      %v2609 = vadd.f32 %v2386, %v2608
      %2610 = vmatmul.f32.gmra.mxu0 %v2468
      %v2611 = vpop.f32.mrf.mxu0
      %v2612 = vadd.f32 %v2386, %v2611
      %2613 = vmatmul.f32.gmra.mxu0 %v2471
      %v2614 = vpop.f32.mrf.mxu0
      %v2615 = vadd.f32 %v2386, %v2614
      %2616 = vmatmul.f32.gmra.mxu0 %v2474
      %v2617 = vpop.f32.mrf.mxu0
      %v2618 = vadd.f32 %v2386, %v2617
      %2619 = vmatmul.f32.gmra.mxu0 %v2477
      %v2620 = vpop.f32.mrf.mxu0
      %v2621 = vadd.f32 %v2386, %v2620
      %2622 = vmatmul.f32.gmra.mxu0 %v2480
      %v2623 = vpop.f32.mrf.mxu0
      %v2624 = vadd.f32 %v2386, %v2623
      %2625 = vmatmul.f32.gmra.mxu0 %v2483
      %v2626 = vpop.f32.mrf.mxu0
      %v2627 = vadd.f32 %v2386, %v2626
      %2628 = vmatmul.f32.gmra.mxu0 %v2486
      %v2629 = vpop.f32.mrf.mxu0
      %v2630 = vadd.f32 %v2386, %v2629
      %2631 = vmatmul.f32.gmra.mxu0 %v2489
      %v2632 = vpop.f32.mrf.mxu0
      %v2633 = vadd.f32 %v2386, %v2632
      %2634 = vmatmul.f32.gmra.mxu0 %v2492
      %v2635 = vpop.f32.mrf.mxu0
      %v2636 = vadd.f32 %v2386, %v2635
      %2637 = vmatmul.f32.gmra.mxu0 %v2495
      %v2638 = vpop.f32.mrf.mxu0
      %v2639 = vadd.f32 %v2386, %v2638
      %2640 = vmatmul.f32.gmra.mxu0 %v2498
      %v2641 = vpop.f32.mrf.mxu0
      %v2642 = vadd.f32 %v2386, %v2641
      %2643 = vmatmul.f32.gmra.mxu0 %v2501
      %v2644 = vpop.f32.mrf.mxu0
      %v2645 = vadd.f32 %v2386, %v2644
      %2646 = vmatmul.f32.gmra.mxu0 %v2504
      %v2647 = vpop.f32.mrf.mxu0
      %v2648 = vadd.f32 %v2386, %v2647
      %2649 = vmatmul.f32.gmra.mxu0 %v2507
      %v2650 = vpop.f32.mrf.mxu0
      %v2651 = vadd.f32 %v2386, %v2650
      %2652 = vmatmul.f32.gmra.mxu0 %v2510
      %v2653 = vpop.f32.mrf.mxu0
      %v2654 = vadd.f32 %v2386, %v2653
      %2655 = vdwg.mxu0
      %v2656 = vmax.f32 %v2534, 0.0
      %v2657 = vmax.f32 %v2537, 0.0
      %v2658 = vmax.f32 %v2540, 0.0
      %v2659 = vmax.f32 %v2543, 0.0
      %v2660 = vmax.f32 %v2546, 0.0
      %v2661 = vmax.f32 %v2549, 0.0
      %v2662 = vmax.f32 %v2552, 0.0
      %v2663 = vmax.f32 %v2555, 0.0
      %v2664 = vmax.f32 %v2558, 0.0
      %v2665 = vmax.f32 %v2561, 0.0
      %v2666 = vmax.f32 %v2564, 0.0
      %v2667 = vmax.f32 %v2567, 0.0
      %v2668 = vmax.f32 %v2570, 0.0
      %v2669 = vmax.f32 %v2573, 0.0
      %v2670 = vmax.f32 %v2576, 0.0
      %v2671 = vmax.f32 %v2579, 0.0
      %v2672 = vmax.f32 %v2582, 0.0
      %v2673 = vmax.f32 %v2585, 0.0
      %v2674 = vmax.f32 %v2588, 0.0
      %v2675 = vmax.f32 %v2591, 0.0
      %v2676 = vmax.f32 %v2594, 0.0
      %v2677 = vmax.f32 %v2597, 0.0
      %v2678 = vmax.f32 %v2600, 0.0
      %v2679 = vmax.f32 %v2603, 0.0
      %v2680 = vmax.f32 %v2606, 0.0
      %v2681 = vmax.f32 %v2609, 0.0
      %v2682 = vmax.f32 %v2612, 0.0
      %v2683 = vmax.f32 %v2615, 0.0
      %v2684 = vmax.f32 %v2618, 0.0
      %v2685 = vmax.f32 %v2621, 0.0
      %v2686 = vmax.f32 %v2624, 0.0
      %v2687 = vmax.f32 %v2627, 0.0
      %v2688 = vmax.f32 %v2630, 0.0
      %v2689 = vmax.f32 %v2633, 0.0
      %v2690 = vmax.f32 %v2636, 0.0
      %v2691 = vmax.f32 %v2639, 0.0
      %v2692 = vmax.f32 %v2642, 0.0
      %v2693 = vmax.f32 %v2645, 0.0
      %v2694 = vmax.f32 %v2648, 0.0
      %v2695 = vmax.f32 %v2651, 0.0
      %v2696 = vmax.f32 %v2654, 0.0
      %v2697 = vlaneseq
      %v2698 = vshrl.u32 %v2697, 7
      %v2699 = vadd.s32 %v2698, 8
      %v2700 = vadd.s32 %v2698, 16
      %v2701 = vadd.s32 %v2698, 24
      %v2702 = vadd.s32 %v2698, 32
      %v2703 = vadd.s32 %v2698, 40
      %v2704 = vadd.s32 %v2698, 48
      %v2705 = vadd.s32 %v2698, 56
      %v2706 = vadd.s32 %v2698, 64
      %v2707 = vadd.s32 %v2698, 72
      %v2708 = vadd.s32 %v2698, 80
      %v2709 = vadd.s32 %v2698, 88
      %v2710 = vadd.s32 %v2698, 96
      %v2711 = vadd.s32 %v2698, 104
      %v2712 = vadd.s32 %v2698, 112
      %v2713 = vadd.s32 %v2698, 120
      %v2714 = vadd.s32 %v2698, 128
      %v2715 = vadd.s32 %v2698, 136
      %v2716 = vadd.s32 %v2698, 144
      %v2717 = vadd.s32 %v2698, 152
      %v2718 = vadd.s32 %v2698, 160
      %v2719 = vadd.s32 %v2698, 168
      %v2720 = vadd.s32 %v2698, 176
      %v2721 = vadd.s32 %v2698, 184
      %v2722 = vadd.s32 %v2698, 192
      %v2723 = vadd.s32 %v2698, 200
      %v2724 = vadd.s32 %v2698, 208
      %v2725 = vadd.s32 %v2698, 216
      %v2726 = vadd.s32 %v2698, 224
      %v2727 = vadd.s32 %v2698, 232
      %v2728 = vadd.s32 %v2698, 240
      %v2729 = vadd.s32 %v2698, 248
      %v2730 = vadd.s32 %v2698, 256
      %v2731 = vadd.s32 %v2698, 264
      %v2732 = vadd.s32 %v2698, 272
      %v2733 = vadd.s32 %v2698, 280
      %v2734 = vadd.s32 %v2698, 288
      %v2735 = vadd.s32 %v2698, 296
      %v2736 = vadd.s32 %v2698, 304
      %v2737 = vadd.s32 %v2698, 312
      %v2738 = vadd.s32 %v2698, 320
      %v2739 = vcvt.s32.f32 %v2698
      %v2740 = vcvt.s32.f32 %v2699
      %v2741 = vcvt.s32.f32 %v2700
      %v2742 = vcvt.s32.f32 %v2701
      %v2743 = vcvt.s32.f32 %v2702
      %v2744 = vcvt.s32.f32 %v2703
      %v2745 = vcvt.s32.f32 %v2704
      %v2746 = vcvt.s32.f32 %v2705
      %v2747 = vcvt.s32.f32 %v2706
      %v2748 = vcvt.s32.f32 %v2707
      %v2749 = vcvt.s32.f32 %v2708
      %v2750 = vcvt.s32.f32 %v2709
      %v2751 = vcvt.s32.f32 %v2710
      %v2752 = vcvt.s32.f32 %v2711
      %v2753 = vcvt.s32.f32 %v2712
      %v2754 = vcvt.s32.f32 %v2713
      %v2755 = vcvt.s32.f32 %v2714
      %v2756 = vcvt.s32.f32 %v2715
      %v2757 = vcvt.s32.f32 %v2716
      %v2758 = vcvt.s32.f32 %v2717
      %v2759 = vcvt.s32.f32 %v2718
      %v2760 = vcvt.s32.f32 %v2719
      %v2761 = vcvt.s32.f32 %v2720
      %v2762 = vcvt.s32.f32 %v2721
      %v2763 = vcvt.s32.f32 %v2722
      %v2764 = vcvt.s32.f32 %v2723
      %v2765 = vcvt.s32.f32 %v2724
      %v2766 = vcvt.s32.f32 %v2725
      %v2767 = vcvt.s32.f32 %v2726
      %v2768 = vcvt.s32.f32 %v2727
      %v2769 = vcvt.s32.f32 %v2728
      %v2770 = vcvt.s32.f32 %v2729
      %v2771 = vcvt.s32.f32 %v2730
      %v2772 = vcvt.s32.f32 %v2731
      %v2773 = vcvt.s32.f32 %v2732
      %v2774 = vcvt.s32.f32 %v2733
      %v2775 = vcvt.s32.f32 %v2734
      %v2776 = vcvt.s32.f32 %v2735
      %v2777 = vcvt.s32.f32 %v2736
      %v2778 = vcvt.s32.f32 %v2737
      %v2779 = vcvt.s32.f32 %v2738
      %v2780 = vadd.f32 %v2739, 0.5
      %v2781 = vadd.f32 %v2740, 0.5
      %v2782 = vadd.f32 %v2741, 0.5
      %v2783 = vadd.f32 %v2742, 0.5
      %v2784 = vadd.f32 %v2743, 0.5
      %v2785 = vadd.f32 %v2744, 0.5
      %v2786 = vadd.f32 %v2745, 0.5
      %v2787 = vadd.f32 %v2746, 0.5
      %v2788 = vadd.f32 %v2747, 0.5
      %v2789 = vadd.f32 %v2748, 0.5
      %v2790 = vadd.f32 %v2749, 0.5
      %v2791 = vadd.f32 %v2750, 0.5
      %v2792 = vadd.f32 %v2751, 0.5
      %v2793 = vadd.f32 %v2752, 0.5
      %v2794 = vadd.f32 %v2753, 0.5
      %v2795 = vadd.f32 %v2754, 0.5
      %v2796 = vadd.f32 %v2755, 0.5
      %v2797 = vadd.f32 %v2756, 0.5
      %v2798 = vadd.f32 %v2757, 0.5
      %v2799 = vadd.f32 %v2758, 0.5
      %v2800 = vadd.f32 %v2759, 0.5
      %v2801 = vadd.f32 %v2760, 0.5
      %v2802 = vadd.f32 %v2761, 0.5
      %v2803 = vadd.f32 %v2762, 0.5
      %v2804 = vadd.f32 %v2763, 0.5
      %v2805 = vadd.f32 %v2764, 0.5
      %v2806 = vadd.f32 %v2765, 0.5
      %v2807 = vadd.f32 %v2766, 0.5
      %v2808 = vadd.f32 %v2767, 0.5
      %v2809 = vadd.f32 %v2768, 0.5
      %v2810 = vadd.f32 %v2769, 0.5
      %v2811 = vadd.f32 %v2770, 0.5
      %v2812 = vadd.f32 %v2771, 0.5
      %v2813 = vadd.f32 %v2772, 0.5
      %v2814 = vadd.f32 %v2773, 0.5
      %v2815 = vadd.f32 %v2774, 0.5
      %v2816 = vadd.f32 %v2775, 0.5
      %v2817 = vadd.f32 %v2776, 0.5
      %v2818 = vadd.f32 %v2777, 0.5
      %v2819 = vadd.f32 %v2778, 0.5
      %v2820 = vadd.f32 %v2779, 0.5
      %v2821 = vmul.f32 %v2780, 0.055555556
      %v2822 = vmul.f32 %v2781, 0.055555556
      %v2823 = vmul.f32 %v2782, 0.055555556
      %v2824 = vmul.f32 %v2783, 0.055555556
      %v2825 = vmul.f32 %v2784, 0.055555556
      %v2826 = vmul.f32 %v2785, 0.055555556
      %v2827 = vmul.f32 %v2786, 0.055555556
      %v2828 = vmul.f32 %v2787, 0.055555556
      %v2829 = vmul.f32 %v2788, 0.055555556
      %v2830 = vmul.f32 %v2789, 0.055555556
      %v2831 = vmul.f32 %v2790, 0.055555556
      %v2832 = vmul.f32 %v2791, 0.055555556
      %v2833 = vmul.f32 %v2792, 0.055555556
      %v2834 = vmul.f32 %v2793, 0.055555556
      %v2835 = vmul.f32 %v2794, 0.055555556
      %v2836 = vmul.f32 %v2795, 0.055555556
      %v2837 = vmul.f32 %v2796, 0.055555556
      %v2838 = vmul.f32 %v2797, 0.055555556
      %v2839 = vmul.f32 %v2798, 0.055555556
      %v2840 = vmul.f32 %v2799, 0.055555556
      %v2841 = vmul.f32 %v2800, 0.055555556
      %v2842 = vmul.f32 %v2801, 0.055555556
      %v2843 = vmul.f32 %v2802, 0.055555556
      %v2844 = vmul.f32 %v2803, 0.055555556
      %v2845 = vmul.f32 %v2804, 0.055555556
      %v2846 = vmul.f32 %v2805, 0.055555556
      %v2847 = vmul.f32 %v2806, 0.055555556
      %v2848 = vmul.f32 %v2807, 0.055555556
      %v2849 = vmul.f32 %v2808, 0.055555556
      %v2850 = vmul.f32 %v2809, 0.055555556
      %v2851 = vmul.f32 %v2810, 0.055555556
      %v2852 = vmul.f32 %v2811, 0.055555556
      %v2853 = vmul.f32 %v2812, 0.055555556
      %v2854 = vmul.f32 %v2813, 0.055555556
      %v2855 = vmul.f32 %v2814, 0.055555556
      %v2856 = vmul.f32 %v2815, 0.055555556
      %v2857 = vmul.f32 %v2816, 0.055555556
      %v2858 = vmul.f32 %v2817, 0.055555556
      %v2859 = vmul.f32 %v2818, 0.055555556
      %v2860 = vmul.f32 %v2819, 0.055555556
      %v2861 = vmul.f32 %v2820, 0.055555556
      %v2862 = vfloor.f32 %v2821
      %v2863 = vfloor.f32 %v2822
      %v2864 = vfloor.f32 %v2823
      %v2865 = vfloor.f32 %v2824
      %v2866 = vfloor.f32 %v2825
      %v2867 = vfloor.f32 %v2826
      %v2868 = vfloor.f32 %v2827
      %v2869 = vfloor.f32 %v2828
      %v2870 = vfloor.f32 %v2829
      %v2871 = vfloor.f32 %v2830
      %v2872 = vfloor.f32 %v2831
      %v2873 = vfloor.f32 %v2832
      %v2874 = vfloor.f32 %v2833
      %v2875 = vfloor.f32 %v2834
      %v2876 = vfloor.f32 %v2835
      %v2877 = vfloor.f32 %v2836
      %v2878 = vfloor.f32 %v2837
      %v2879 = vfloor.f32 %v2838
      %v2880 = vfloor.f32 %v2839
      %v2881 = vfloor.f32 %v2840
      %v2882 = vfloor.f32 %v2841
      %v2883 = vfloor.f32 %v2842
      %v2884 = vfloor.f32 %v2843
      %v2885 = vfloor.f32 %v2844
      %v2886 = vfloor.f32 %v2845
      %v2887 = vfloor.f32 %v2846
      %v2888 = vfloor.f32 %v2847
      %v2889 = vfloor.f32 %v2848
      %v2890 = vfloor.f32 %v2849
      %v2891 = vfloor.f32 %v2850
      %v2892 = vfloor.f32 %v2851
      %v2893 = vfloor.f32 %v2852
      %v2894 = vfloor.f32 %v2853
      %v2895 = vfloor.f32 %v2854
      %v2896 = vfloor.f32 %v2855
      %v2897 = vfloor.f32 %v2856
      %v2898 = vfloor.f32 %v2857
      %v2899 = vfloor.f32 %v2858
      %v2900 = vfloor.f32 %v2859
      %v2901 = vfloor.f32 %v2860
      %v2902 = vfloor.f32 %v2861
      %v2903 = vmul.f32 %v2862, 18.0
      %v2904 = vmul.f32 %v2863, 18.0
      %v2905 = vmul.f32 %v2864, 18.0
      %v2906 = vmul.f32 %v2865, 18.0
      %v2907 = vmul.f32 %v2866, 18.0
      %v2908 = vmul.f32 %v2867, 18.0
      %v2909 = vmul.f32 %v2868, 18.0
      %v2910 = vmul.f32 %v2869, 18.0
      %v2911 = vmul.f32 %v2870, 18.0
      %v2912 = vmul.f32 %v2871, 18.0
      %v2913 = vmul.f32 %v2872, 18.0
      %v2914 = vmul.f32 %v2873, 18.0
      %v2915 = vmul.f32 %v2874, 18.0
      %v2916 = vmul.f32 %v2875, 18.0
      %v2917 = vmul.f32 %v2876, 18.0
      %v2918 = vmul.f32 %v2877, 18.0
      %v2919 = vmul.f32 %v2878, 18.0
      %v2920 = vmul.f32 %v2879, 18.0
      %v2921 = vmul.f32 %v2880, 18.0
      %v2922 = vmul.f32 %v2881, 18.0
      %v2923 = vmul.f32 %v2882, 18.0
      %v2924 = vmul.f32 %v2883, 18.0
      %v2925 = vmul.f32 %v2884, 18.0
      %v2926 = vmul.f32 %v2885, 18.0
      %v2927 = vmul.f32 %v2886, 18.0
      %v2928 = vmul.f32 %v2887, 18.0
      %v2929 = vmul.f32 %v2888, 18.0
      %v2930 = vmul.f32 %v2889, 18.0
      %v2931 = vmul.f32 %v2890, 18.0
      %v2932 = vmul.f32 %v2891, 18.0
      %v2933 = vmul.f32 %v2892, 18.0
      %v2934 = vmul.f32 %v2893, 18.0
      %v2935 = vmul.f32 %v2894, 18.0
      %v2936 = vmul.f32 %v2895, 18.0
      %v2937 = vmul.f32 %v2896, 18.0
      %v2938 = vmul.f32 %v2897, 18.0
      %v2939 = vmul.f32 %v2898, 18.0
      %v2940 = vmul.f32 %v2899, 18.0
      %v2941 = vmul.f32 %v2900, 18.0
      %v2942 = vmul.f32 %v2901, 18.0
      %v2943 = vmul.f32 %v2902, 18.0
      %v2944 = vsub.f32 %v2739, %v2903
      %v2945 = vsub.f32 %v2740, %v2904
      %v2946 = vsub.f32 %v2741, %v2905
      %v2947 = vsub.f32 %v2742, %v2906
      %v2948 = vsub.f32 %v2743, %v2907
      %v2949 = vsub.f32 %v2744, %v2908
      %v2950 = vsub.f32 %v2745, %v2909
      %v2951 = vsub.f32 %v2746, %v2910
      %v2952 = vsub.f32 %v2747, %v2911
      %v2953 = vsub.f32 %v2748, %v2912
      %v2954 = vsub.f32 %v2749, %v2913
      %v2955 = vsub.f32 %v2750, %v2914
      %v2956 = vsub.f32 %v2751, %v2915
      %v2957 = vsub.f32 %v2752, %v2916
      %v2958 = vsub.f32 %v2753, %v2917
      %v2959 = vsub.f32 %v2754, %v2918
      %v2960 = vsub.f32 %v2755, %v2919
      %v2961 = vsub.f32 %v2756, %v2920
      %v2962 = vsub.f32 %v2757, %v2921
      %v2963 = vsub.f32 %v2758, %v2922
      %v2964 = vsub.f32 %v2759, %v2923
      %v2965 = vsub.f32 %v2760, %v2924
      %v2966 = vsub.f32 %v2761, %v2925
      %v2967 = vsub.f32 %v2762, %v2926
      %v2968 = vsub.f32 %v2763, %v2927
      %v2969 = vsub.f32 %v2764, %v2928
      %v2970 = vsub.f32 %v2765, %v2929
      %v2971 = vsub.f32 %v2766, %v2930
      %v2972 = vsub.f32 %v2767, %v2931
      %v2973 = vsub.f32 %v2768, %v2932
      %v2974 = vsub.f32 %v2769, %v2933
      %v2975 = vsub.f32 %v2770, %v2934
      %v2976 = vsub.f32 %v2771, %v2935
      %v2977 = vsub.f32 %v2772, %v2936
      %v2978 = vsub.f32 %v2773, %v2937
      %v2979 = vsub.f32 %v2774, %v2938
      %v2980 = vsub.f32 %v2775, %v2939
      %v2981 = vsub.f32 %v2776, %v2940
      %v2982 = vsub.f32 %v2777, %v2941
      %v2983 = vsub.f32 %v2778, %v2942
      %v2984 = vsub.f32 %v2779, %v2943
      %vm2985 = vcmp.lt.f32.partialorder %v2739, 324.0
      %vm2986 = vcmp.lt.f32.partialorder %v2740, 324.0
      %vm2987 = vcmp.lt.f32.partialorder %v2741, 324.0
      %vm2988 = vcmp.lt.f32.partialorder %v2742, 324.0
      %vm2989 = vcmp.lt.f32.partialorder %v2743, 324.0
      %vm2990 = vcmp.lt.f32.partialorder %v2744, 324.0
      %vm2991 = vcmp.lt.f32.partialorder %v2745, 324.0
      %vm2992 = vcmp.lt.f32.partialorder %v2746, 324.0
      %vm2993 = vcmp.lt.f32.partialorder %v2747, 324.0
      %vm2994 = vcmp.lt.f32.partialorder %v2748, 324.0
      %vm2995 = vcmp.lt.f32.partialorder %v2749, 324.0
      %vm2996 = vcmp.lt.f32.partialorder %v2750, 324.0
      %vm2997 = vcmp.lt.f32.partialorder %v2751, 324.0
      %vm2998 = vcmp.lt.f32.partialorder %v2752, 324.0
      %vm2999 = vcmp.lt.f32.partialorder %v2753, 324.0
      %vm3000 = vcmp.lt.f32.partialorder %v2754, 324.0
      %vm3001 = vcmp.lt.f32.partialorder %v2755, 324.0
      %vm3002 = vcmp.lt.f32.partialorder %v2756, 324.0
      %vm3003 = vcmp.lt.f32.partialorder %v2757, 324.0
      %vm3004 = vcmp.lt.f32.partialorder %v2758, 324.0
      %vm3005 = vcmp.lt.f32.partialorder %v2759, 324.0
      %vm3006 = vcmp.lt.f32.partialorder %v2760, 324.0
      %vm3007 = vcmp.lt.f32.partialorder %v2761, 324.0
      %vm3008 = vcmp.lt.f32.partialorder %v2762, 324.0
      %vm3009 = vcmp.lt.f32.partialorder %v2763, 324.0
      %vm3010 = vcmp.lt.f32.partialorder %v2764, 324.0
      %vm3011 = vcmp.lt.f32.partialorder %v2765, 324.0
      %vm3012 = vcmp.lt.f32.partialorder %v2766, 324.0
      %vm3013 = vcmp.lt.f32.partialorder %v2767, 324.0
      %vm3014 = vcmp.lt.f32.partialorder %v2768, 324.0
      %vm3015 = vcmp.lt.f32.partialorder %v2769, 324.0
      %vm3016 = vcmp.lt.f32.partialorder %v2770, 324.0
      %vm3017 = vcmp.lt.f32.partialorder %v2771, 324.0
      %vm3018 = vcmp.lt.f32.partialorder %v2772, 324.0
      %vm3019 = vcmp.lt.f32.partialorder %v2773, 324.0
      %vm3020 = vcmp.lt.f32.partialorder %v2774, 324.0
      %vm3021 = vcmp.lt.f32.partialorder %v2775, 324.0
      %vm3022 = vcmp.lt.f32.partialorder %v2776, 324.0
      %vm3023 = vcmp.lt.f32.partialorder %v2777, 324.0
      %vm3024 = vcmp.lt.f32.partialorder %v2778, 324.0
      %vm3025 = vcmp.lt.f32.partialorder %v2779, 324.0
      %vm3026 = vcmp.ge.f32.partialorder %v2862, 1.0
      %vm3027 = vcmp.ge.f32.partialorder %v2863, 1.0
      %vm3028 = vcmp.ge.f32.partialorder %v2864, 1.0
      %vm3029 = vcmp.ge.f32.partialorder %v2865, 1.0
      %vm3030 = vcmp.ge.f32.partialorder %v2866, 1.0
      %vm3031 = vcmp.ge.f32.partialorder %v2867, 1.0
      %vm3032 = vcmp.ge.f32.partialorder %v2868, 1.0
      %vm3033 = vcmp.ge.f32.partialorder %v2869, 1.0
      %vm3034 = vcmp.ge.f32.partialorder %v2870, 1.0
      %vm3035 = vcmp.ge.f32.partialorder %v2871, 1.0
      %vm3036 = vcmp.ge.f32.partialorder %v2872, 1.0
      %vm3037 = vcmp.ge.f32.partialorder %v2873, 1.0
      %vm3038 = vcmp.ge.f32.partialorder %v2874, 1.0
      %vm3039 = vcmp.ge.f32.partialorder %v2875, 1.0
      %vm3040 = vcmp.ge.f32.partialorder %v2876, 1.0
      %vm3041 = vcmp.ge.f32.partialorder %v2877, 1.0
      %vm3042 = vcmp.ge.f32.partialorder %v2878, 1.0
      %vm3043 = vcmp.ge.f32.partialorder %v2879, 1.0
      %vm3044 = vcmp.ge.f32.partialorder %v2880, 1.0
      %vm3045 = vcmp.ge.f32.partialorder %v2881, 1.0
      %vm3046 = vcmp.ge.f32.partialorder %v2882, 1.0
      %vm3047 = vcmp.ge.f32.partialorder %v2883, 1.0
      %vm3048 = vcmp.ge.f32.partialorder %v2884, 1.0
      %vm3049 = vcmp.ge.f32.partialorder %v2885, 1.0
      %vm3050 = vcmp.ge.f32.partialorder %v2886, 1.0
      %vm3051 = vcmp.ge.f32.partialorder %v2887, 1.0
      %vm3052 = vcmp.ge.f32.partialorder %v2888, 1.0
      %vm3053 = vcmp.ge.f32.partialorder %v2889, 1.0
      %vm3054 = vcmp.ge.f32.partialorder %v2890, 1.0
      %vm3055 = vcmp.ge.f32.partialorder %v2891, 1.0
      %vm3056 = vcmp.ge.f32.partialorder %v2892, 1.0
      %vm3057 = vcmp.ge.f32.partialorder %v2893, 1.0
      %vm3058 = vcmp.ge.f32.partialorder %v2894, 1.0
      %vm3059 = vcmp.ge.f32.partialorder %v2895, 1.0
      %vm3060 = vcmp.ge.f32.partialorder %v2896, 1.0
      %vm3061 = vcmp.ge.f32.partialorder %v2897, 1.0
      %vm3062 = vcmp.ge.f32.partialorder %v2898, 1.0
      %vm3063 = vcmp.ge.f32.partialorder %v2899, 1.0
      %vm3064 = vcmp.ge.f32.partialorder %v2900, 1.0
      %vm3065 = vcmp.ge.f32.partialorder %v2901, 1.0
      %vm3066 = vcmp.ge.f32.partialorder %v2902, 1.0
      %vm3067 = vmand %vm2985, %vm3026
      %vm3068 = vmand %vm2986, %vm3027
      %vm3069 = vmand %vm2987, %vm3028
      %vm3070 = vmand %vm2988, %vm3029
      %vm3071 = vmand %vm2989, %vm3030
      %vm3072 = vmand %vm2990, %vm3031
      %vm3073 = vmand %vm2991, %vm3032
      %vm3074 = vmand %vm2992, %vm3033
      %vm3075 = vmand %vm2993, %vm3034
      %vm3076 = vmand %vm2994, %vm3035
      %vm3077 = vmand %vm2995, %vm3036
      %vm3078 = vmand %vm2996, %vm3037
      %vm3079 = vmand %vm2997, %vm3038
      %vm3080 = vmand %vm2998, %vm3039
      %vm3081 = vmand %vm2999, %vm3040
      %vm3082 = vmand %vm3000, %vm3041
      %vm3083 = vmand %vm3001, %vm3042
      %vm3084 = vmand %vm3002, %vm3043
      %vm3085 = vmand %vm3003, %vm3044
      %vm3086 = vmand %vm3004, %vm3045
      %vm3087 = vmand %vm3005, %vm3046
      %vm3088 = vmand %vm3006, %vm3047
      %vm3089 = vmand %vm3007, %vm3048
      %vm3090 = vmand %vm3008, %vm3049
      %vm3091 = vmand %vm3009, %vm3050
      %vm3092 = vmand %vm3010, %vm3051
      %vm3093 = vmand %vm3011, %vm3052
      %vm3094 = vmand %vm3012, %vm3053
      %vm3095 = vmand %vm3013, %vm3054
      %vm3096 = vmand %vm3014, %vm3055
      %vm3097 = vmand %vm3015, %vm3056
      %vm3098 = vmand %vm3016, %vm3057
      %vm3099 = vmand %vm3017, %vm3058
      %vm3100 = vmand %vm3018, %vm3059
      %vm3101 = vmand %vm3019, %vm3060
      %vm3102 = vmand %vm3020, %vm3061
      %vm3103 = vmand %vm3021, %vm3062
      %vm3104 = vmand %vm3022, %vm3063
      %vm3105 = vmand %vm3023, %vm3064
      %vm3106 = vmand %vm3024, %vm3065
      %vm3107 = vmand %vm3025, %vm3066
      %vm3108 = vcmp.le.f32.partialorder %v2862, 16.0
      %vm3109 = vcmp.le.f32.partialorder %v2863, 16.0
      %vm3110 = vcmp.le.f32.partialorder %v2864, 16.0
      %vm3111 = vcmp.le.f32.partialorder %v2865, 16.0
      %vm3112 = vcmp.le.f32.partialorder %v2866, 16.0
      %vm3113 = vcmp.le.f32.partialorder %v2867, 16.0
      %vm3114 = vcmp.le.f32.partialorder %v2868, 16.0
      %vm3115 = vcmp.le.f32.partialorder %v2869, 16.0
      %vm3116 = vcmp.le.f32.partialorder %v2870, 16.0
      %vm3117 = vcmp.le.f32.partialorder %v2871, 16.0
      %vm3118 = vcmp.le.f32.partialorder %v2872, 16.0
      %vm3119 = vcmp.le.f32.partialorder %v2873, 16.0
      %vm3120 = vcmp.le.f32.partialorder %v2874, 16.0
      %vm3121 = vcmp.le.f32.partialorder %v2875, 16.0
      %vm3122 = vcmp.le.f32.partialorder %v2876, 16.0
      %vm3123 = vcmp.le.f32.partialorder %v2877, 16.0
      %vm3124 = vcmp.le.f32.partialorder %v2878, 16.0
      %vm3125 = vcmp.le.f32.partialorder %v2879, 16.0
      %vm3126 = vcmp.le.f32.partialorder %v2880, 16.0
      %vm3127 = vcmp.le.f32.partialorder %v2881, 16.0
      %vm3128 = vcmp.le.f32.partialorder %v2882, 16.0
      %vm3129 = vcmp.le.f32.partialorder %v2883, 16.0
      %vm3130 = vcmp.le.f32.partialorder %v2884, 16.0
      %vm3131 = vcmp.le.f32.partialorder %v2885, 16.0
      %vm3132 = vcmp.le.f32.partialorder %v2886, 16.0
      %vm3133 = vcmp.le.f32.partialorder %v2887, 16.0
      %vm3134 = vcmp.le.f32.partialorder %v2888, 16.0
      %vm3135 = vcmp.le.f32.partialorder %v2889, 16.0
      %vm3136 = vcmp.le.f32.partialorder %v2890, 16.0
      %vm3137 = vcmp.le.f32.partialorder %v2891, 16.0
      %vm3138 = vcmp.le.f32.partialorder %v2892, 16.0
      %vm3139 = vcmp.le.f32.partialorder %v2893, 16.0
      %vm3140 = vcmp.le.f32.partialorder %v2894, 16.0
      %vm3141 = vcmp.le.f32.partialorder %v2895, 16.0
      %vm3142 = vcmp.le.f32.partialorder %v2896, 16.0
      %vm3143 = vcmp.le.f32.partialorder %v2897, 16.0
      %vm3144 = vcmp.le.f32.partialorder %v2898, 16.0
      %vm3145 = vcmp.le.f32.partialorder %v2899, 16.0
      %vm3146 = vcmp.le.f32.partialorder %v2900, 16.0
      %vm3147 = vcmp.le.f32.partialorder %v2901, 16.0
      %vm3148 = vcmp.le.f32.partialorder %v2902, 16.0
      %vm3149 = vmand %vm3067, %vm3108
      %vm3150 = vmand %vm3068, %vm3109
      %vm3151 = vmand %vm3069, %vm3110
      %vm3152 = vmand %vm3070, %vm3111
      %vm3153 = vmand %vm3071, %vm3112
      %vm3154 = vmand %vm3072, %vm3113
      %vm3155 = vmand %vm3073, %vm3114
      %vm3156 = vmand %vm3074, %vm3115
      %vm3157 = vmand %vm3075, %vm3116
      %vm3158 = vmand %vm3076, %vm3117
      %vm3159 = vmand %vm3077, %vm3118
      %vm3160 = vmand %vm3078, %vm3119
      %vm3161 = vmand %vm3079, %vm3120
      %vm3162 = vmand %vm3080, %vm3121
      %vm3163 = vmand %vm3081, %vm3122
      %vm3164 = vmand %vm3082, %vm3123
      %vm3165 = vmand %vm3083, %vm3124
      %vm3166 = vmand %vm3084, %vm3125
      %vm3167 = vmand %vm3085, %vm3126
      %vm3168 = vmand %vm3086, %vm3127
      %vm3169 = vmand %vm3087, %vm3128
      %vm3170 = vmand %vm3088, %vm3129
      %vm3171 = vmand %vm3089, %vm3130
      %vm3172 = vmand %vm3090, %vm3131
      %vm3173 = vmand %vm3091, %vm3132
      %vm3174 = vmand %vm3092, %vm3133
      %vm3175 = vmand %vm3093, %vm3134
      %vm3176 = vmand %vm3094, %vm3135
      %vm3177 = vmand %vm3095, %vm3136
      %vm3178 = vmand %vm3096, %vm3137
      %vm3179 = vmand %vm3097, %vm3138
      %vm3180 = vmand %vm3098, %vm3139
      %vm3181 = vmand %vm3099, %vm3140
      %vm3182 = vmand %vm3100, %vm3141
      %vm3183 = vmand %vm3101, %vm3142
      %vm3184 = vmand %vm3102, %vm3143
      %vm3185 = vmand %vm3103, %vm3144
      %vm3186 = vmand %vm3104, %vm3145
      %vm3187 = vmand %vm3105, %vm3146
      %vm3188 = vmand %vm3106, %vm3147
      %vm3189 = vmand %vm3107, %vm3148
      %vm3190 = vcmp.ge.f32.partialorder %v2944, 1.0
      %vm3191 = vcmp.ge.f32.partialorder %v2945, 1.0
      %vm3192 = vcmp.ge.f32.partialorder %v2946, 1.0
      %vm3193 = vcmp.ge.f32.partialorder %v2947, 1.0
      %vm3194 = vcmp.ge.f32.partialorder %v2948, 1.0
      %vm3195 = vcmp.ge.f32.partialorder %v2949, 1.0
      %vm3196 = vcmp.ge.f32.partialorder %v2950, 1.0
      %vm3197 = vcmp.ge.f32.partialorder %v2951, 1.0
      %vm3198 = vcmp.ge.f32.partialorder %v2952, 1.0
      %vm3199 = vcmp.ge.f32.partialorder %v2953, 1.0
      %vm3200 = vcmp.ge.f32.partialorder %v2954, 1.0
      %vm3201 = vcmp.ge.f32.partialorder %v2955, 1.0
      %vm3202 = vcmp.ge.f32.partialorder %v2956, 1.0
      %vm3203 = vcmp.ge.f32.partialorder %v2957, 1.0
      %vm3204 = vcmp.ge.f32.partialorder %v2958, 1.0
      %vm3205 = vcmp.ge.f32.partialorder %v2959, 1.0
      %vm3206 = vcmp.ge.f32.partialorder %v2960, 1.0
      %vm3207 = vcmp.ge.f32.partialorder %v2961, 1.0
      %vm3208 = vcmp.ge.f32.partialorder %v2962, 1.0
      %vm3209 = vcmp.ge.f32.partialorder %v2963, 1.0
      %vm3210 = vcmp.ge.f32.partialorder %v2964, 1.0
      %vm3211 = vcmp.ge.f32.partialorder %v2965, 1.0
      %vm3212 = vcmp.ge.f32.partialorder %v2966, 1.0
      %vm3213 = vcmp.ge.f32.partialorder %v2967, 1.0
      %vm3214 = vcmp.ge.f32.partialorder %v2968, 1.0
      %vm3215 = vcmp.ge.f32.partialorder %v2969, 1.0
      %vm3216 = vcmp.ge.f32.partialorder %v2970, 1.0
      %vm3217 = vcmp.ge.f32.partialorder %v2971, 1.0
      %vm3218 = vcmp.ge.f32.partialorder %v2972, 1.0
      %vm3219 = vcmp.ge.f32.partialorder %v2973, 1.0
      %vm3220 = vcmp.ge.f32.partialorder %v2974, 1.0
      %vm3221 = vcmp.ge.f32.partialorder %v2975, 1.0
      %vm3222 = vcmp.ge.f32.partialorder %v2976, 1.0
      %vm3223 = vcmp.ge.f32.partialorder %v2977, 1.0
      %vm3224 = vcmp.ge.f32.partialorder %v2978, 1.0
      %vm3225 = vcmp.ge.f32.partialorder %v2979, 1.0
      %vm3226 = vcmp.ge.f32.partialorder %v2980, 1.0
      %vm3227 = vcmp.ge.f32.partialorder %v2981, 1.0
      %vm3228 = vcmp.ge.f32.partialorder %v2982, 1.0
      %vm3229 = vcmp.ge.f32.partialorder %v2983, 1.0
      %vm3230 = vcmp.ge.f32.partialorder %v2984, 1.0
      %vm3231 = vmand %vm3149, %vm3190
      %vm3232 = vmand %vm3150, %vm3191
      %vm3233 = vmand %vm3151, %vm3192
      %vm3234 = vmand %vm3152, %vm3193
      %vm3235 = vmand %vm3153, %vm3194
      %vm3236 = vmand %vm3154, %vm3195
      %vm3237 = vmand %vm3155, %vm3196
      %vm3238 = vmand %vm3156, %vm3197
      %vm3239 = vmand %vm3157, %vm3198
      %vm3240 = vmand %vm3158, %vm3199
      %vm3241 = vmand %vm3159, %vm3200
      %vm3242 = vmand %vm3160, %vm3201
      %vm3243 = vmand %vm3161, %vm3202
      %vm3244 = vmand %vm3162, %vm3203
      %vm3245 = vmand %vm3163, %vm3204
      %vm3246 = vmand %vm3164, %vm3205
      %vm3247 = vmand %vm3165, %vm3206
      %vm3248 = vmand %vm3166, %vm3207
      %vm3249 = vmand %vm3167, %vm3208
      %vm3250 = vmand %vm3168, %vm3209
      %vm3251 = vmand %vm3169, %vm3210
      %vm3252 = vmand %vm3170, %vm3211
      %vm3253 = vmand %vm3171, %vm3212
      %vm3254 = vmand %vm3172, %vm3213
      %vm3255 = vmand %vm3173, %vm3214
      %vm3256 = vmand %vm3174, %vm3215
      %vm3257 = vmand %vm3175, %vm3216
      %vm3258 = vmand %vm3176, %vm3217
      %vm3259 = vmand %vm3177, %vm3218
      %vm3260 = vmand %vm3178, %vm3219
      %vm3261 = vmand %vm3179, %vm3220
      %vm3262 = vmand %vm3180, %vm3221
      %vm3263 = vmand %vm3181, %vm3222
      %vm3264 = vmand %vm3182, %vm3223
      %vm3265 = vmand %vm3183, %vm3224
      %vm3266 = vmand %vm3184, %vm3225
      %vm3267 = vmand %vm3185, %vm3226
      %vm3268 = vmand %vm3186, %vm3227
      %vm3269 = vmand %vm3187, %vm3228
      %vm3270 = vmand %vm3188, %vm3229
      %vm3271 = vmand %vm3189, %vm3230
      %vm3272 = vcmp.le.f32.partialorder %v2944, 16.0
      %vm3273 = vcmp.le.f32.partialorder %v2945, 16.0
      %vm3274 = vcmp.le.f32.partialorder %v2946, 16.0
      %vm3275 = vcmp.le.f32.partialorder %v2947, 16.0
      %vm3276 = vcmp.le.f32.partialorder %v2948, 16.0
      %vm3277 = vcmp.le.f32.partialorder %v2949, 16.0
      %vm3278 = vcmp.le.f32.partialorder %v2950, 16.0
      %vm3279 = vcmp.le.f32.partialorder %v2951, 16.0
      %vm3280 = vcmp.le.f32.partialorder %v2952, 16.0
      %vm3281 = vcmp.le.f32.partialorder %v2953, 16.0
      %vm3282 = vcmp.le.f32.partialorder %v2954, 16.0
      %vm3283 = vcmp.le.f32.partialorder %v2955, 16.0
      %vm3284 = vcmp.le.f32.partialorder %v2956, 16.0
      %vm3285 = vcmp.le.f32.partialorder %v2957, 16.0
      %vm3286 = vcmp.le.f32.partialorder %v2958, 16.0
      %vm3287 = vcmp.le.f32.partialorder %v2959, 16.0
      %vm3288 = vcmp.le.f32.partialorder %v2960, 16.0
      %vm3289 = vcmp.le.f32.partialorder %v2961, 16.0
      %vm3290 = vcmp.le.f32.partialorder %v2962, 16.0
      %vm3291 = vcmp.le.f32.partialorder %v2963, 16.0
      %vm3292 = vcmp.le.f32.partialorder %v2964, 16.0
      %vm3293 = vcmp.le.f32.partialorder %v2965, 16.0
      %vm3294 = vcmp.le.f32.partialorder %v2966, 16.0
      %vm3295 = vcmp.le.f32.partialorder %v2967, 16.0
      %vm3296 = vcmp.le.f32.partialorder %v2968, 16.0
      %vm3297 = vcmp.le.f32.partialorder %v2969, 16.0
      %vm3298 = vcmp.le.f32.partialorder %v2970, 16.0
      %vm3299 = vcmp.le.f32.partialorder %v2971, 16.0
      %vm3300 = vcmp.le.f32.partialorder %v2972, 16.0
      %vm3301 = vcmp.le.f32.partialorder %v2973, 16.0
      %vm3302 = vcmp.le.f32.partialorder %v2974, 16.0
      %vm3303 = vcmp.le.f32.partialorder %v2975, 16.0
      %vm3304 = vcmp.le.f32.partialorder %v2976, 16.0
      %vm3305 = vcmp.le.f32.partialorder %v2977, 16.0
      %vm3306 = vcmp.le.f32.partialorder %v2978, 16.0
      %vm3307 = vcmp.le.f32.partialorder %v2979, 16.0
      %vm3308 = vcmp.le.f32.partialorder %v2980, 16.0
      %vm3309 = vcmp.le.f32.partialorder %v2981, 16.0
      %vm3310 = vcmp.le.f32.partialorder %v2982, 16.0
      %vm3311 = vcmp.le.f32.partialorder %v2983, 16.0
      %vm3312 = vcmp.le.f32.partialorder %v2984, 16.0
      %vm3313 = vmand %vm3231, %vm3272
      %vm3314 = vmand %vm3232, %vm3273
      %vm3315 = vmand %vm3233, %vm3274
      %vm3316 = vmand %vm3234, %vm3275
      %vm3317 = vmand %vm3235, %vm3276
      %vm3318 = vmand %vm3236, %vm3277
      %vm3319 = vmand %vm3237, %vm3278
      %vm3320 = vmand %vm3238, %vm3279
      %vm3321 = vmand %vm3239, %vm3280
      %vm3322 = vmand %vm3240, %vm3281
      %vm3323 = vmand %vm3241, %vm3282
      %vm3324 = vmand %vm3242, %vm3283
      %vm3325 = vmand %vm3243, %vm3284
      %vm3326 = vmand %vm3244, %vm3285
      %vm3327 = vmand %vm3245, %vm3286
      %vm3328 = vmand %vm3246, %vm3287
      %vm3329 = vmand %vm3247, %vm3288
      %vm3330 = vmand %vm3248, %vm3289
      %vm3331 = vmand %vm3249, %vm3290
      %vm3332 = vmand %vm3250, %vm3291
      %vm3333 = vmand %vm3251, %vm3292
      %vm3334 = vmand %vm3252, %vm3293
      %vm3335 = vmand %vm3253, %vm3294
      %vm3336 = vmand %vm3254, %vm3295
      %vm3337 = vmand %vm3255, %vm3296
      %vm3338 = vmand %vm3256, %vm3297
      %vm3339 = vmand %vm3257, %vm3298
      %vm3340 = vmand %vm3258, %vm3299
      %vm3341 = vmand %vm3259, %vm3300
      %vm3342 = vmand %vm3260, %vm3301
      %vm3343 = vmand %vm3261, %vm3302
      %vm3344 = vmand %vm3262, %vm3303
      %vm3345 = vmand %vm3263, %vm3304
      %vm3346 = vmand %vm3264, %vm3305
      %vm3347 = vmand %vm3265, %vm3306
      %vm3348 = vmand %vm3266, %vm3307
      %vm3349 = vmand %vm3267, %vm3308
      %vm3350 = vmand %vm3268, %vm3309
      %vm3351 = vmand %vm3269, %vm3310
      %vm3352 = vmand %vm3270, %vm3311
      %vm3353 = vmand %vm3271, %vm3312
      %v3354 = vsel %vm3313, 1, 0
      %v3355 = vsel %vm3314, 1, 0
      %v3356 = vsel %vm3315, 1, 0
      %v3357 = vsel %vm3316, 1, 0
      %v3358 = vsel %vm3317, 1, 0
      %v3359 = vsel %vm3318, 1, 0
      %v3360 = vsel %vm3319, 1, 0
      %v3361 = vsel %vm3320, 1, 0
      %v3362 = vsel %vm3321, 1, 0
      %v3363 = vsel %vm3322, 1, 0
      %v3364 = vsel %vm3323, 1, 0
      %v3365 = vsel %vm3324, 1, 0
      %v3366 = vsel %vm3325, 1, 0
      %v3367 = vsel %vm3326, 1, 0
      %v3368 = vsel %vm3327, 1, 0
      %v3369 = vsel %vm3328, 1, 0
      %v3370 = vsel %vm3329, 1, 0
      %v3371 = vsel %vm3330, 1, 0
      %v3372 = vsel %vm3331, 1, 0
      %v3373 = vsel %vm3332, 1, 0
      %v3374 = vsel %vm3333, 1, 0
      %v3375 = vsel %vm3334, 1, 0
      %v3376 = vsel %vm3335, 1, 0
      %v3377 = vsel %vm3336, 1, 0
      %v3378 = vsel %vm3337, 1, 0
      %v3379 = vsel %vm3338, 1, 0
      %v3380 = vsel %vm3339, 1, 0
      %v3381 = vsel %vm3340, 1, 0
      %v3382 = vsel %vm3341, 1, 0
      %v3383 = vsel %vm3342, 1, 0
      %v3384 = vsel %vm3343, 1, 0
      %v3385 = vsel %vm3344, 1, 0
      %v3386 = vsel %vm3345, 1, 0
      %v3387 = vsel %vm3346, 1, 0
      %v3388 = vsel %vm3347, 1, 0
      %v3389 = vsel %vm3348, 1, 0
      %v3390 = vsel %vm3349, 1, 0
      %v3391 = vsel %vm3350, 1, 0
      %v3392 = vsel %vm3351, 1, 0
      %v3393 = vsel %vm3352, 1, 0
      %v3394 = vsel %vm3353, 1, 0
      %vm3395 = vcmp.eq.s32.totalorder %v3354, 1
      %vm3396 = vcmp.eq.s32.totalorder %v3355, 1
      %vm3397 = vcmp.eq.s32.totalorder %v3356, 1
      %vm3398 = vcmp.eq.s32.totalorder %v3357, 1
      %vm3399 = vcmp.eq.s32.totalorder %v3358, 1
      %vm3400 = vcmp.eq.s32.totalorder %v3359, 1
      %vm3401 = vcmp.eq.s32.totalorder %v3360, 1
      %vm3402 = vcmp.eq.s32.totalorder %v3361, 1
      %vm3403 = vcmp.eq.s32.totalorder %v3362, 1
      %vm3404 = vcmp.eq.s32.totalorder %v3363, 1
      %vm3405 = vcmp.eq.s32.totalorder %v3364, 1
      %vm3406 = vcmp.eq.s32.totalorder %v3365, 1
      %vm3407 = vcmp.eq.s32.totalorder %v3366, 1
      %vm3408 = vcmp.eq.s32.totalorder %v3367, 1
      %vm3409 = vcmp.eq.s32.totalorder %v3368, 1
      %vm3410 = vcmp.eq.s32.totalorder %v3369, 1
      %vm3411 = vcmp.eq.s32.totalorder %v3370, 1
      %vm3412 = vcmp.eq.s32.totalorder %v3371, 1
      %vm3413 = vcmp.eq.s32.totalorder %v3372, 1
      %vm3414 = vcmp.eq.s32.totalorder %v3373, 1
      %vm3415 = vcmp.eq.s32.totalorder %v3374, 1
      %vm3416 = vcmp.eq.s32.totalorder %v3375, 1
      %vm3417 = vcmp.eq.s32.totalorder %v3376, 1
      %vm3418 = vcmp.eq.s32.totalorder %v3377, 1
      %vm3419 = vcmp.eq.s32.totalorder %v3378, 1
      %vm3420 = vcmp.eq.s32.totalorder %v3379, 1
      %vm3421 = vcmp.eq.s32.totalorder %v3380, 1
      %vm3422 = vcmp.eq.s32.totalorder %v3381, 1
      %vm3423 = vcmp.eq.s32.totalorder %v3382, 1
      %vm3424 = vcmp.eq.s32.totalorder %v3383, 1
      %vm3425 = vcmp.eq.s32.totalorder %v3384, 1
      %vm3426 = vcmp.eq.s32.totalorder %v3385, 1
      %vm3427 = vcmp.eq.s32.totalorder %v3386, 1
      %vm3428 = vcmp.eq.s32.totalorder %v3387, 1
      %vm3429 = vcmp.eq.s32.totalorder %v3388, 1
      %vm3430 = vcmp.eq.s32.totalorder %v3389, 1
      %vm3431 = vcmp.eq.s32.totalorder %v3390, 1
      %vm3432 = vcmp.eq.s32.totalorder %v3391, 1
      %vm3433 = vcmp.eq.s32.totalorder %v3392, 1
      %vm3434 = vcmp.eq.s32.totalorder %v3393, 1
      %vm3435 = vcmp.eq.s32.totalorder %v3394, 1
      %v3436 = vsel %vm3395, %v2656, 0.0
      %v3437 = vsel %vm3396, %v2657, 0.0
      %v3438 = vsel %vm3397, %v2658, 0.0
      %v3439 = vsel %vm3398, %v2659, 0.0
      %v3440 = vsel %vm3399, %v2660, 0.0
      %v3441 = vsel %vm3400, %v2661, 0.0
      %v3442 = vsel %vm3401, %v2662, 0.0
      %v3443 = vsel %vm3402, %v2663, 0.0
      %v3444 = vsel %vm3403, %v2664, 0.0
      %v3445 = vsel %vm3404, %v2665, 0.0
      %v3446 = vsel %vm3405, %v2666, 0.0
      %v3447 = vsel %vm3406, %v2667, 0.0
      %v3448 = vsel %vm3407, %v2668, 0.0
      %v3449 = vsel %vm3408, %v2669, 0.0
      %v3450 = vsel %vm3409, %v2670, 0.0
      %v3451 = vsel %vm3410, %v2671, 0.0
      %v3452 = vsel %vm3411, %v2672, 0.0
      %v3453 = vsel %vm3412, %v2673, 0.0
      %v3454 = vsel %vm3413, %v2674, 0.0
      %v3455 = vsel %vm3414, %v2675, 0.0
      %v3456 = vsel %vm3415, %v2676, 0.0
      %v3457 = vsel %vm3416, %v2677, 0.0
      %v3458 = vsel %vm3417, %v2678, 0.0
      %v3459 = vsel %vm3418, %v2679, 0.0
      %v3460 = vsel %vm3419, %v2680, 0.0
      %v3461 = vsel %vm3420, %v2681, 0.0
      %v3462 = vsel %vm3421, %v2682, 0.0
      %v3463 = vsel %vm3422, %v2683, 0.0
      %v3464 = vsel %vm3423, %v2684, 0.0
      %v3465 = vsel %vm3424, %v2685, 0.0
      %v3466 = vsel %vm3425, %v2686, 0.0
      %v3467 = vsel %vm3426, %v2687, 0.0
      %v3468 = vsel %vm3427, %v2688, 0.0
      %v3469 = vsel %vm3428, %v2689, 0.0
      %v3470 = vsel %vm3429, %v2690, 0.0
      %v3471 = vsel %vm3430, %v2691, 0.0
      %v3472 = vsel %vm3431, %v2692, 0.0
      %v3473 = vsel %vm3432, %v2693, 0.0
      %v3474 = vsel %vm3433, %v2694, 0.0
      %v3475 = vsel %vm3434, %v2695, 0.0
      %v3476 = vsel %vm3435, %v2696, 0.0
      %vm3477 = vcmask 64512
      %3478 = vst.msk [vmem:[#allocation2] sm:$0xff] %vm3477, %v3436
      %3479 = vst.msk [vmem:[#allocation2 + $0x8] sm:$0xff] %vm3477, %v3437
      %3480 = vst.msk [vmem:[#allocation2 + $0x10] sm:$0xff] %vm3477, %v3438
      %3481 = vst.msk [vmem:[#allocation2 + $0x18] sm:$0xff] %vm3477, %v3439
      %3482 = vst.msk [vmem:[#allocation2 + $0x20] sm:$0xff] %vm3477, %v3440
      %3483 = vst.msk [vmem:[#allocation2 + $0x28] sm:$0xff] %vm3477, %v3441
      %3484 = vst.msk [vmem:[#allocation2 + $0x30] sm:$0xff] %vm3477, %v3442
      %3485 = vst.msk [vmem:[#allocation2 + $0x38] sm:$0xff] %vm3477, %v3443
      %3486 = vst.msk [vmem:[#allocation2 + $0x40] sm:$0xff] %vm3477, %v3444
      %3487 = vst.msk [vmem:[#allocation2 + $0x48] sm:$0xff] %vm3477, %v3445
      %3488 = vst.msk [vmem:[#allocation2 + $0x50] sm:$0xff] %vm3477, %v3446
      %3489 = vst.msk [vmem:[#allocation2 + $0x58] sm:$0xff] %vm3477, %v3447
      %3490 = vst.msk [vmem:[#allocation2 + $0x60] sm:$0xff] %vm3477, %v3448
      %3491 = vst.msk [vmem:[#allocation2 + $0x68] sm:$0xff] %vm3477, %v3449
      %3492 = vst.msk [vmem:[#allocation2 + $0x70] sm:$0xff] %vm3477, %v3450
      %3493 = vst.msk [vmem:[#allocation2 + $0x78] sm:$0xff] %vm3477, %v3451
      %3494 = vst.msk [vmem:[#allocation2 + $0x80] sm:$0xff] %vm3477, %v3452
      %3495 = vst.msk [vmem:[#allocation2 + $0x88] sm:$0xff] %vm3477, %v3453
      %3496 = vst.msk [vmem:[#allocation2 + $0x90] sm:$0xff] %vm3477, %v3454
      %3497 = vst.msk [vmem:[#allocation2 + $0x98] sm:$0xff] %vm3477, %v3455
      %3498 = vst.msk [vmem:[#allocation2 + $0xa0] sm:$0xff] %vm3477, %v3456
      %3499 = vst.msk [vmem:[#allocation2 + $0xa8] sm:$0xff] %vm3477, %v3457
      %3500 = vst.msk [vmem:[#allocation2 + $0xb0] sm:$0xff] %vm3477, %v3458
      %3501 = vst.msk [vmem:[#allocation2 + $0xb8] sm:$0xff] %vm3477, %v3459
      %3502 = vst.msk [vmem:[#allocation2 + $0xc0] sm:$0xff] %vm3477, %v3460
      %3503 = vst.msk [vmem:[#allocation2 + $0xc8] sm:$0xff] %vm3477, %v3461
      %3504 = vst.msk [vmem:[#allocation2 + $0xd0] sm:$0xff] %vm3477, %v3462
      %3505 = vst.msk [vmem:[#allocation2 + $0xd8] sm:$0xff] %vm3477, %v3463
      %3506 = vst.msk [vmem:[#allocation2 + $0xe0] sm:$0xff] %vm3477, %v3464
      %3507 = vst.msk [vmem:[#allocation2 + $0xe8] sm:$0xff] %vm3477, %v3465
      %3508 = vst.msk [vmem:[#allocation2 + $0xf0] sm:$0xff] %vm3477, %v3466
      %3509 = vst.msk [vmem:[#allocation2 + $0xf8] sm:$0xff] %vm3477, %v3467
      %3510 = vst.msk [vmem:[#allocation2 + $0x100] sm:$0xff] %vm3477, %v3468
      %3511 = vst.msk [vmem:[#allocation2 + $0x108] sm:$0xff] %vm3477, %v3469
      %3512 = vst.msk [vmem:[#allocation2 + $0x110] sm:$0xff] %vm3477, %v3470
      %3513 = vst.msk [vmem:[#allocation2 + $0x118] sm:$0xff] %vm3477, %v3471
      %3514 = vst.msk [vmem:[#allocation2 + $0x120] sm:$0xff] %vm3477, %v3472
      %3515 = vst.msk [vmem:[#allocation2 + $0x128] sm:$0xff] %vm3477, %v3473
      %3516 = vst.msk [vmem:[#allocation2 + $0x130] sm:$0xff] %vm3477, %v3474
      %3517 = vst.msk [vmem:[#allocation2 + $0x138] sm:$0xff] %vm3477, %v3475
      %3518 = vst.msk [vmem:[#allocation2 + $0x140] sm:$0xff] %vm3477, %v3476
      %v3519 = vld [vmem:[#allocation2] ss:$2 sm:$0xff]
      %3520 = vst.msk [vmem:[#allocation4] sm:$0xff] %vm3477, %v3519
      %s3521 = scalar_lea.vmem [#allocation2], 1
      %v3522 = vld [vmem:[%s3521] ss:$2 sm:$0xff]
      %3524 = vrot.lane.b32.xlu0 %v3522, 8
      %v3525 = vpop.permute.xlu0 %3524
      %vm3527 = vcmask 130112
      %3528 = vst.msk [vmem:[#allocation4] sm:$0xff] %vm3527, %v3525
      %s3529 = scalar_lea.vmem [#allocation2], 2
      %v3530 = vld [vmem:[%s3529] ss:$2 sm:$0xff]
      %3532 = vrot.lane.b32.xlu0 %v3530, 16
      %v3533 = vpop.permute.xlu0 %3532
      %vm3535 = vcmask 195712
      %3536 = vst.msk [vmem:[#allocation4] sm:$0xff] %vm3535, %v3533
      %s3537 = scalar_lea.vmem [#allocation2], 18
      %v3538 = vld [vmem:[%s3537] ss:$2 sm:$0xff]
      %3540 = vrot.lane.b32.xlu0 %v3538, 24
      %v3541 = vpop.permute.xlu0 %3540
      %vm3543 = vcmask 261312
      %3544 = vst.msk [vmem:[#allocation4] sm:$0xff] %vm3543, %v3541
      %s3545 = scalar_lea.vmem [#allocation2], 19
      %v3546 = vld [vmem:[%s3545] ss:$2 sm:$0xff]
      %3548 = vrot.lane.b32.xlu0 %v3546, 32
      %v3549 = vpop.permute.xlu0 %3548
      %vm3551 = vcmask 326912
      %3552 = vst.msk [vmem:[#allocation4] sm:$0xff] %vm3551, %v3549
      %s3553 = scalar_lea.vmem [#allocation2], 20
      %v3554 = vld [vmem:[%s3553] ss:$2 sm:$0xff]
      %3556 = vrot.lane.b32.xlu0 %v3554, 40
      %v3557 = vpop.permute.xlu0 %3556
      %vm3559 = vcmask 392512
      %3560 = vst.msk [vmem:[#allocation4] sm:$0xff] %vm3559, %v3557
      %s3561 = scalar_lea.vmem [#allocation2], 36
      %v3562 = vld [vmem:[%s3561] ss:$2 sm:$0xff]
      %3564 = vrot.lane.b32.xlu0 %v3562, 48
      %v3565 = vpop.permute.xlu0 %3564
      %vm3567 = vcmask 458112
      %3568 = vst.msk [vmem:[#allocation4] sm:$0xff] %vm3567, %v3565
      %s3569 = scalar_lea.vmem [#allocation2], 37
      %v3570 = vld [vmem:[%s3569] ss:$2 sm:$0xff]
      %3572 = vrot.lane.b32.xlu0 %v3570, 56
      %v3573 = vpop.permute.xlu0 %3572
      %vm3575 = vcmask 523712
      %3576 = vst.msk [vmem:[#allocation4] sm:$0xff] %vm3575, %v3573
      %s3577 = scalar_lea.vmem [#allocation2], 38
      %v3578 = vld [vmem:[%s3577] ss:$2 sm:$0xff]
      %3580 = vrot.lane.b32.xlu0 %v3578, 64
      %v3581 = vpop.permute.xlu0 %3580
      %vm3583 = vcmask 589312
      %3584 = vst.msk [vmem:[#allocation4] sm:$0xff] %vm3583, %v3581
      %s3585 = scalar_lea.vmem %s273, 55
      %v3586 = vld [vmem:[%s3585] ss:$2 sm:$0xff]
      %v3587 = vadd.f32 %v3586, 0.0
      %s3588 = scalar_lea.vmem %s273, 56
      %v3589 = vld [vmem:[%s3588] ss:$2 sm:$0xff]
      %v3590 = vadd.f32 %v3587, %v3589
      %s3591 = scalar_lea.vmem %s273, 73
      %v3592 = vld [vmem:[%s3591] ss:$2 sm:$0xff]
      %v3593 = vadd.f32 %v3590, %v3592
      %s3594 = scalar_lea.vmem %s273, 74
      %v3595 = vld [vmem:[%s3594] ss:$2 sm:$0xff]
      %v3596 = vadd.f32 %v3593, %v3595
      %v3597 = vmul.f32 %v3596, 0.25
      %3598 = vst.msk [vmem:[#allocation5] sm:$0xff] %vm320, %v3597
      %v3599 = vld [vmem:[%s3561] ss:$2 sm:$0xff]
      %3600 = vst.msk [vmem:[#allocation4 + $0x8] sm:$0xff] %vm3477, %v3599
      %v3601 = vld [vmem:[%s3569] ss:$2 sm:$0xff]
      %3603 = vrot.lane.b32.xlu0 %v3601, 8
      %v3604 = vpop.permute.xlu0 %3603
      %3606 = vst.msk [vmem:[#allocation4 + $0x8] sm:$0xff] %vm3527, %v3604
      %v3607 = vld [vmem:[%s3577] ss:$2 sm:$0xff]
      %3609 = vrot.lane.b32.xlu0 %v3607, 16
      %v3610 = vpop.permute.xlu0 %3609
      %3612 = vst.msk [vmem:[#allocation4 + $0x8] sm:$0xff] %vm3535, %v3610
      %s3613 = scalar_lea.vmem [#allocation2], 54
      %v3614 = vld [vmem:[%s3613] ss:$2 sm:$0xff]
      %3616 = vrot.lane.b32.xlu0 %v3614, 24
      %v3617 = vpop.permute.xlu0 %3616
      %3619 = vst.msk [vmem:[#allocation4 + $0x8] sm:$0xff] %vm3543, %v3617
      %s3620 = scalar_lea.vmem [#allocation2], 55
      %v3621 = vld [vmem:[%s3620] ss:$2 sm:$0xff]
      %3623 = vrot.lane.b32.xlu0 %v3621, 32
      %v3624 = vpop.permute.xlu0 %3623
      %3626 = vst.msk [vmem:[#allocation4 + $0x8] sm:$0xff] %vm3551, %v3624
      %s3627 = scalar_lea.vmem [#allocation2], 56
      %v3628 = vld [vmem:[%s3627] ss:$2 sm:$0xff]
      %3630 = vrot.lane.b32.xlu0 %v3628, 40
      %v3631 = vpop.permute.xlu0 %3630
      %3633 = vst.msk [vmem:[#allocation4 + $0x8] sm:$0xff] %vm3559, %v3631
      %s3634 = scalar_lea.vmem [#allocation2], 72
      %v3635 = vld [vmem:[%s3634] ss:$2 sm:$0xff]
      %3637 = vrot.lane.b32.xlu0 %v3635, 48
      %v3638 = vpop.permute.xlu0 %3637
      %3640 = vst.msk [vmem:[#allocation4 + $0x8] sm:$0xff] %vm3567, %v3638
      %s3641 = scalar_lea.vmem [#allocation2], 73
      %v3642 = vld [vmem:[%s3641] ss:$2 sm:$0xff]
      %3644 = vrot.lane.b32.xlu0 %v3642, 56
      %v3645 = vpop.permute.xlu0 %3644
      %3647 = vst.msk [vmem:[#allocation4 + $0x8] sm:$0xff] %vm3575, %v3645
      %s3648 = scalar_lea.vmem [#allocation2], 74
      %v3649 = vld [vmem:[%s3648] ss:$2 sm:$0xff]
      %3651 = vrot.lane.b32.xlu0 %v3649, 64
      %v3652 = vpop.permute.xlu0 %3651
      %3654 = vst.msk [vmem:[#allocation4 + $0x8] sm:$0xff] %vm3583, %v3652
      %s3655 = scalar_lea.vmem %s273, 91
      %v3656 = vld [vmem:[%s3655] ss:$2 sm:$0xff]
      %v3657 = vadd.f32 %v3656, 0.0
      %s3658 = scalar_lea.vmem %s273, 92
      %v3659 = vld [vmem:[%s3658] ss:$2 sm:$0xff]
      %v3660 = vadd.f32 %v3657, %v3659
      %s3661 = scalar_lea.vmem %s273, 109
      %v3662 = vld [vmem:[%s3661] ss:$2 sm:$0xff]
      %v3663 = vadd.f32 %v3660, %v3662
      %s3664 = scalar_lea.vmem %s273, 110
      %v3665 = vld [vmem:[%s3664] ss:$2 sm:$0xff]
      %v3666 = vadd.f32 %v3663, %v3665
      %v3667 = vmul.f32 %v3666, 0.25
      %3668 = vst.msk [vmem:[#allocation5 + $0x8] sm:$0xff] %vm320, %v3667
      %v3669 = vld [vmem:[%s3634] ss:$2 sm:$0xff]
      %3670 = vst.msk [vmem:[#allocation4 + $0x10] sm:$0xff] %vm3477, %v3669
      %v3671 = vld [vmem:[%s3641] ss:$2 sm:$0xff]
      %3673 = vrot.lane.b32.xlu0 %v3671, 8
      %v3674 = vpop.permute.xlu0 %3673
      %3676 = vst.msk [vmem:[#allocation4 + $0x10] sm:$0xff] %vm3527, %v3674
      %v3677 = vld [vmem:[%s3648] ss:$2 sm:$0xff]
      %3679 = vrot.lane.b32.xlu0 %v3677, 16
      %v3680 = vpop.permute.xlu0 %3679
      %3682 = vst.msk [vmem:[#allocation4 + $0x10] sm:$0xff] %vm3535, %v3680
      %s3683 = scalar_lea.vmem [#allocation2], 90
      %v3684 = vld [vmem:[%s3683] ss:$2 sm:$0xff]
      %3686 = vrot.lane.b32.xlu0 %v3684, 24
      %v3687 = vpop.permute.xlu0 %3686
      %3689 = vst.msk [vmem:[#allocation4 + $0x10] sm:$0xff] %vm3543, %v3687
      %s3690 = scalar_lea.vmem [#allocation2], 91
      %v3691 = vld [vmem:[%s3690] ss:$2 sm:$0xff]
      %3693 = vrot.lane.b32.xlu0 %v3691, 32
      %v3694 = vpop.permute.xlu0 %3693
      %3696 = vst.msk [vmem:[#allocation4 + $0x10] sm:$0xff] %vm3551, %v3694
      %s3697 = scalar_lea.vmem [#allocation2], 92
      %v3698 = vld [vmem:[%s3697] ss:$2 sm:$0xff]
      %3700 = vrot.lane.b32.xlu0 %v3698, 40
      %v3701 = vpop.permute.xlu0 %3700
      %3703 = vst.msk [vmem:[#allocation4 + $0x10] sm:$0xff] %vm3559, %v3701
      %s3704 = scalar_lea.vmem [#allocation2], 108
      %v3705 = vld [vmem:[%s3704] ss:$2 sm:$0xff]
      %3707 = vrot.lane.b32.xlu0 %v3705, 48
      %v3708 = vpop.permute.xlu0 %3707
      %3710 = vst.msk [vmem:[#allocation4 + $0x10] sm:$0xff] %vm3567, %v3708
      %s3711 = scalar_lea.vmem [#allocation2], 109
      %v3712 = vld [vmem:[%s3711] ss:$2 sm:$0xff]
      %3714 = vrot.lane.b32.xlu0 %v3712, 56
      %v3715 = vpop.permute.xlu0 %3714
      %3717 = vst.msk [vmem:[#allocation4 + $0x10] sm:$0xff] %vm3575, %v3715
      %s3718 = scalar_lea.vmem [#allocation2], 110
      %v3719 = vld [vmem:[%s3718] ss:$2 sm:$0xff]
      %3721 = vrot.lane.b32.xlu0 %v3719, 64
      %v3722 = vpop.permute.xlu0 %3721
      %3724 = vst.msk [vmem:[#allocation4 + $0x10] sm:$0xff] %vm3583, %v3722
      %s3725 = scalar_lea.vmem %s273, 127
      %v3726 = vld [vmem:[%s3725] ss:$2 sm:$0xff]
      %v3727 = vadd.f32 %v3726, 0.0
      %s3728 = scalar_lea.vmem %s273, 128
      %v3729 = vld [vmem:[%s3728] ss:$2 sm:$0xff]
      %v3730 = vadd.f32 %v3727, %v3729
      %s3731 = scalar_lea.vmem %s273, 145
      %v3732 = vld [vmem:[%s3731] ss:$2 sm:$0xff]
      %v3733 = vadd.f32 %v3730, %v3732
      %s3734 = scalar_lea.vmem %s273, 146
      %v3735 = vld [vmem:[%s3734] ss:$2 sm:$0xff]
      %v3736 = vadd.f32 %v3733, %v3735
      %v3737 = vmul.f32 %v3736, 0.25
      %3738 = vst.msk [vmem:[#allocation5 + $0x10] sm:$0xff] %vm320, %v3737
      %v3739 = vld [vmem:[%s3704] ss:$2 sm:$0xff]
      %3740 = vst.msk [vmem:[#allocation4 + $0x18] sm:$0xff] %vm3477, %v3739
      %v3741 = vld [vmem:[%s3711] ss:$2 sm:$0xff]
      %3743 = vrot.lane.b32.xlu0 %v3741, 8
      %v3744 = vpop.permute.xlu0 %3743
      %3746 = vst.msk [vmem:[#allocation4 + $0x18] sm:$0xff] %vm3527, %v3744
      %v3747 = vld [vmem:[%s3718] ss:$2 sm:$0xff]
      %3749 = vrot.lane.b32.xlu0 %v3747, 16
      %v3750 = vpop.permute.xlu0 %3749
      %3752 = vst.msk [vmem:[#allocation4 + $0x18] sm:$0xff] %vm3535, %v3750
      %s3753 = scalar_lea.vmem [#allocation2], 126
      %v3754 = vld [vmem:[%s3753] ss:$2 sm:$0xff]
      %3756 = vrot.lane.b32.xlu0 %v3754, 24
      %v3757 = vpop.permute.xlu0 %3756
      %3759 = vst.msk [vmem:[#allocation4 + $0x18] sm:$0xff] %vm3543, %v3757
      %s3760 = scalar_lea.vmem [#allocation2], 127
      %v3761 = vld [vmem:[%s3760] ss:$2 sm:$0xff]
      %3763 = vrot.lane.b32.xlu0 %v3761, 32
      %v3764 = vpop.permute.xlu0 %3763
      %3766 = vst.msk [vmem:[#allocation4 + $0x18] sm:$0xff] %vm3551, %v3764
      %s3767 = scalar_lea.vmem [#allocation2], 128
      %v3768 = vld [vmem:[%s3767] ss:$2 sm:$0xff]
      %3770 = vrot.lane.b32.xlu0 %v3768, 40
      %v3771 = vpop.permute.xlu0 %3770
      %3773 = vst.msk [vmem:[#allocation4 + $0x18] sm:$0xff] %vm3559, %v3771
      %s3774 = scalar_lea.vmem [#allocation2], 144
      %v3775 = vld [vmem:[%s3774] ss:$2 sm:$0xff]
      %3777 = vrot.lane.b32.xlu0 %v3775, 48
      %v3778 = vpop.permute.xlu0 %3777
      %3780 = vst.msk [vmem:[#allocation4 + $0x18] sm:$0xff] %vm3567, %v3778
      %s3781 = scalar_lea.vmem [#allocation2], 145
      %v3782 = vld [vmem:[%s3781] ss:$2 sm:$0xff]
      %3784 = vrot.lane.b32.xlu0 %v3782, 56
      %v3785 = vpop.permute.xlu0 %3784
      %3787 = vst.msk [vmem:[#allocation4 + $0x18] sm:$0xff] %vm3575, %v3785
      %s3788 = scalar_lea.vmem [#allocation2], 146
      %v3789 = vld [vmem:[%s3788] ss:$2 sm:$0xff]
      %3791 = vrot.lane.b32.xlu0 %v3789, 64
      %v3792 = vpop.permute.xlu0 %3791
      %3794 = vst.msk [vmem:[#allocation4 + $0x18] sm:$0xff] %vm3583, %v3792
      %s3795 = scalar_lea.vmem %s273, 163
      %v3796 = vld [vmem:[%s3795] ss:$2 sm:$0xff]
      %v3797 = vadd.f32 %v3796, 0.0
      %s3798 = scalar_lea.vmem %s273, 164
      %v3799 = vld [vmem:[%s3798] ss:$2 sm:$0xff]
      %v3800 = vadd.f32 %v3797, %v3799
      %s3801 = scalar_lea.vmem %s273, 181
      %v3802 = vld [vmem:[%s3801] ss:$2 sm:$0xff]
      %v3803 = vadd.f32 %v3800, %v3802
      %s3804 = scalar_lea.vmem %s273, 182
      %v3805 = vld [vmem:[%s3804] ss:$2 sm:$0xff]
      %v3806 = vadd.f32 %v3803, %v3805
      %v3807 = vmul.f32 %v3806, 0.25
      %3808 = vst.msk [vmem:[#allocation5 + $0x18] sm:$0xff] %vm320, %v3807
      %v3809 = vld [vmem:[%s3774] ss:$2 sm:$0xff]
      %3810 = vst.msk [vmem:[#allocation4 + $0x20] sm:$0xff] %vm3477, %v3809
      %v3811 = vld [vmem:[%s3781] ss:$2 sm:$0xff]
      %3813 = vrot.lane.b32.xlu0 %v3811, 8
      %v3814 = vpop.permute.xlu0 %3813
      %3816 = vst.msk [vmem:[#allocation4 + $0x20] sm:$0xff] %vm3527, %v3814
      %v3817 = vld [vmem:[%s3788] ss:$2 sm:$0xff]
      %3819 = vrot.lane.b32.xlu0 %v3817, 16
      %v3820 = vpop.permute.xlu0 %3819
      %3822 = vst.msk [vmem:[#allocation4 + $0x20] sm:$0xff] %vm3535, %v3820
      %s3823 = scalar_lea.vmem [#allocation2], 162
      %v3824 = vld [vmem:[%s3823] ss:$2 sm:$0xff]
      %3826 = vrot.lane.b32.xlu0 %v3824, 24
      %v3827 = vpop.permute.xlu0 %3826
      %3829 = vst.msk [vmem:[#allocation4 + $0x20] sm:$0xff] %vm3543, %v3827
      %s3830 = scalar_lea.vmem [#allocation2], 163
      %v3831 = vld [vmem:[%s3830] ss:$2 sm:$0xff]
      %3833 = vrot.lane.b32.xlu0 %v3831, 32
      %v3834 = vpop.permute.xlu0 %3833
      %3836 = vst.msk [vmem:[#allocation4 + $0x20] sm:$0xff] %vm3551, %v3834
      %s3837 = scalar_lea.vmem [#allocation2], 164
      %v3838 = vld [vmem:[%s3837] ss:$2 sm:$0xff]
      %3840 = vrot.lane.b32.xlu0 %v3838, 40
      %v3841 = vpop.permute.xlu0 %3840
      %3843 = vst.msk [vmem:[#allocation4 + $0x20] sm:$0xff] %vm3559, %v3841
      %s3844 = scalar_lea.vmem [#allocation2], 180
      %v3845 = vld [vmem:[%s3844] ss:$2 sm:$0xff]
      %3847 = vrot.lane.b32.xlu0 %v3845, 48
      %v3848 = vpop.permute.xlu0 %3847
      %3850 = vst.msk [vmem:[#allocation4 + $0x20] sm:$0xff] %vm3567, %v3848
      %s3851 = scalar_lea.vmem [#allocation2], 181
      %v3852 = vld [vmem:[%s3851] ss:$2 sm:$0xff]
      %3854 = vrot.lane.b32.xlu0 %v3852, 56
      %v3855 = vpop.permute.xlu0 %3854
      %3857 = vst.msk [vmem:[#allocation4 + $0x20] sm:$0xff] %vm3575, %v3855
      %s3858 = scalar_lea.vmem [#allocation2], 182
      %v3859 = vld [vmem:[%s3858] ss:$2 sm:$0xff]
      %3861 = vrot.lane.b32.xlu0 %v3859, 64
      %v3862 = vpop.permute.xlu0 %3861
      %3864 = vst.msk [vmem:[#allocation4 + $0x20] sm:$0xff] %vm3583, %v3862
      %s3865 = scalar_lea.vmem %s273, 199
      %v3866 = vld [vmem:[%s3865] ss:$2 sm:$0xff]
      %v3867 = vadd.f32 %v3866, 0.0
      %s3868 = scalar_lea.vmem %s273, 200
      %v3869 = vld [vmem:[%s3868] ss:$2 sm:$0xff]
      %v3870 = vadd.f32 %v3867, %v3869
      %s3871 = scalar_lea.vmem %s273, 217
      %v3872 = vld [vmem:[%s3871] ss:$2 sm:$0xff]
      %v3873 = vadd.f32 %v3870, %v3872
      %s3874 = scalar_lea.vmem %s273, 218
      %v3875 = vld [vmem:[%s3874] ss:$2 sm:$0xff]
      %v3876 = vadd.f32 %v3873, %v3875
      %v3877 = vmul.f32 %v3876, 0.25
      %3878 = vst.msk [vmem:[#allocation5 + $0x20] sm:$0xff] %vm320, %v3877
      %v3879 = vld [vmem:[%s3844] ss:$2 sm:$0xff]
      %3880 = vst.msk [vmem:[#allocation4 + $0x28] sm:$0xff] %vm3477, %v3879
      %v3881 = vld [vmem:[%s3851] ss:$2 sm:$0xff]
      %3883 = vrot.lane.b32.xlu0 %v3881, 8
      %v3884 = vpop.permute.xlu0 %3883
      %3886 = vst.msk [vmem:[#allocation4 + $0x28] sm:$0xff] %vm3527, %v3884
      %v3887 = vld [vmem:[%s3858] ss:$2 sm:$0xff]
      %3889 = vrot.lane.b32.xlu0 %v3887, 16
      %v3890 = vpop.permute.xlu0 %3889
      %3892 = vst.msk [vmem:[#allocation4 + $0x28] sm:$0xff] %vm3535, %v3890
      %s3893 = scalar_lea.vmem [#allocation2], 198
      %v3894 = vld [vmem:[%s3893] ss:$2 sm:$0xff]
      %3896 = vrot.lane.b32.xlu0 %v3894, 24
      %v3897 = vpop.permute.xlu0 %3896
      %3899 = vst.msk [vmem:[#allocation4 + $0x28] sm:$0xff] %vm3543, %v3897
      %s3900 = scalar_lea.vmem [#allocation2], 199
      %v3901 = vld [vmem:[%s3900] ss:$2 sm:$0xff]
      %3903 = vrot.lane.b32.xlu0 %v3901, 32
      %v3904 = vpop.permute.xlu0 %3903
      %3906 = vst.msk [vmem:[#allocation4 + $0x28] sm:$0xff] %vm3551, %v3904
      %s3907 = scalar_lea.vmem [#allocation2], 200
      %v3908 = vld [vmem:[%s3907] ss:$2 sm:$0xff]
      %3910 = vrot.lane.b32.xlu0 %v3908, 40
      %v3911 = vpop.permute.xlu0 %3910
      %3913 = vst.msk [vmem:[#allocation4 + $0x28] sm:$0xff] %vm3559, %v3911
      %s3914 = scalar_lea.vmem [#allocation2], 216
      %v3915 = vld [vmem:[%s3914] ss:$2 sm:$0xff]
      %3917 = vrot.lane.b32.xlu0 %v3915, 48
      %v3918 = vpop.permute.xlu0 %3917
      %3920 = vst.msk [vmem:[#allocation4 + $0x28] sm:$0xff] %vm3567, %v3918
      %s3921 = scalar_lea.vmem [#allocation2], 217
      %v3922 = vld [vmem:[%s3921] ss:$2 sm:$0xff]
      %3924 = vrot.lane.b32.xlu0 %v3922, 56
      %v3925 = vpop.permute.xlu0 %3924
      %3927 = vst.msk [vmem:[#allocation4 + $0x28] sm:$0xff] %vm3575, %v3925
      %s3928 = scalar_lea.vmem [#allocation2], 218
      %v3929 = vld [vmem:[%s3928] ss:$2 sm:$0xff]
      %3931 = vrot.lane.b32.xlu0 %v3929, 64
      %v3932 = vpop.permute.xlu0 %3931
      %3934 = vst.msk [vmem:[#allocation4 + $0x28] sm:$0xff] %vm3583, %v3932
      %s3935 = scalar_lea.vmem %s273, 235
      %v3936 = vld [vmem:[%s3935] ss:$2 sm:$0xff]
      %v3937 = vadd.f32 %v3936, 0.0
      %s3938 = scalar_lea.vmem %s273, 236
      %v3939 = vld [vmem:[%s3938] ss:$2 sm:$0xff]
      %v3940 = vadd.f32 %v3937, %v3939
      %s3941 = scalar_lea.vmem %s273, 253
      %v3942 = vld [vmem:[%s3941] ss:$2 sm:$0xff]
      %v3943 = vadd.f32 %v3940, %v3942
      %s3944 = scalar_lea.vmem %s273, 254
      %v3945 = vld [vmem:[%s3944] ss:$2 sm:$0xff]
      %v3946 = vadd.f32 %v3943, %v3945
      %v3947 = vmul.f32 %v3946, 0.25
      %3948 = vst.msk [vmem:[#allocation5 + $0x28] sm:$0xff] %vm320, %v3947
      %v3949 = vld [vmem:[%s3914] ss:$2 sm:$0xff]
      %3950 = vst.msk [vmem:[#allocation4 + $0x30] sm:$0xff] %vm3477, %v3949
      %v3951 = vld [vmem:[%s3921] ss:$2 sm:$0xff]
      %3953 = vrot.lane.b32.xlu0 %v3951, 8
      %v3954 = vpop.permute.xlu0 %3953
      %3956 = vst.msk [vmem:[#allocation4 + $0x30] sm:$0xff] %vm3527, %v3954
      %v3957 = vld [vmem:[%s3928] ss:$2 sm:$0xff]
      %3959 = vrot.lane.b32.xlu0 %v3957, 16
      %v3960 = vpop.permute.xlu0 %3959
      %3962 = vst.msk [vmem:[#allocation4 + $0x30] sm:$0xff] %vm3535, %v3960
      %s3963 = scalar_lea.vmem [#allocation2], 234
      %v3964 = vld [vmem:[%s3963] ss:$2 sm:$0xff]
      %3966 = vrot.lane.b32.xlu0 %v3964, 24
      %v3967 = vpop.permute.xlu0 %3966
      %3969 = vst.msk [vmem:[#allocation4 + $0x30] sm:$0xff] %vm3543, %v3967
      %s3970 = scalar_lea.vmem [#allocation2], 235
      %v3971 = vld [vmem:[%s3970] ss:$2 sm:$0xff]
      %3973 = vrot.lane.b32.xlu0 %v3971, 32
      %v3974 = vpop.permute.xlu0 %3973
      %3976 = vst.msk [vmem:[#allocation4 + $0x30] sm:$0xff] %vm3551, %v3974
      %s3977 = scalar_lea.vmem [#allocation2], 236
      %v3978 = vld [vmem:[%s3977] ss:$2 sm:$0xff]
      %3980 = vrot.lane.b32.xlu0 %v3978, 40
      %v3981 = vpop.permute.xlu0 %3980
      %3983 = vst.msk [vmem:[#allocation4 + $0x30] sm:$0xff] %vm3559, %v3981
      %s3984 = scalar_lea.vmem [#allocation2], 252
      %v3985 = vld [vmem:[%s3984] ss:$2 sm:$0xff]
      %3987 = vrot.lane.b32.xlu0 %v3985, 48
      %v3988 = vpop.permute.xlu0 %3987
      %3990 = vst.msk [vmem:[#allocation4 + $0x30] sm:$0xff] %vm3567, %v3988
      %s3991 = scalar_lea.vmem [#allocation2], 253
      %v3992 = vld [vmem:[%s3991] ss:$2 sm:$0xff]
      %3994 = vrot.lane.b32.xlu0 %v3992, 56
      %v3995 = vpop.permute.xlu0 %3994
      %3997 = vst.msk [vmem:[#allocation4 + $0x30] sm:$0xff] %vm3575, %v3995
      %s3998 = scalar_lea.vmem [#allocation2], 254
      %v3999 = vld [vmem:[%s3998] ss:$2 sm:$0xff]
      %4001 = vrot.lane.b32.xlu0 %v3999, 64
      %v4002 = vpop.permute.xlu0 %4001
      %4004 = vst.msk [vmem:[#allocation4 + $0x30] sm:$0xff] %vm3583, %v4002
      %s4005 = scalar_lea.vmem %s273, 271
      %v4006 = vld [vmem:[%s4005] ss:$2 sm:$0xff]
      %v4007 = vadd.f32 %v4006, 0.0
      %s4008 = scalar_lea.vmem %s273, 272
      %v4009 = vld [vmem:[%s4008] ss:$2 sm:$0xff]
      %v4010 = vadd.f32 %v4007, %v4009
      %s4011 = scalar_lea.vmem %s273, 289
      %v4012 = vld [vmem:[%s4011] ss:$2 sm:$0xff]
      %v4013 = vadd.f32 %v4010, %v4012
      %s4014 = scalar_lea.vmem %s273, 290
      %v4015 = vld [vmem:[%s4014] ss:$2 sm:$0xff]
      %v4016 = vadd.f32 %v4013, %v4015
      %v4017 = vmul.f32 %v4016, 0.25
      %4018 = vst.msk [vmem:[#allocation5 + $0x30] sm:$0xff] %vm320, %v4017
      %v4019 = vld [vmem:[%s3984] ss:$2 sm:$0xff]
      %4020 = vst.msk [vmem:[#allocation4 + $0x38] sm:$0xff] %vm3477, %v4019
      %v4021 = vld [vmem:[%s3991] ss:$2 sm:$0xff]
      %4023 = vrot.lane.b32.xlu0 %v4021, 8
      %v4024 = vpop.permute.xlu0 %4023
      %4026 = vst.msk [vmem:[#allocation4 + $0x38] sm:$0xff] %vm3527, %v4024
      %v4027 = vld [vmem:[%s3998] ss:$2 sm:$0xff]
      %4029 = vrot.lane.b32.xlu0 %v4027, 16
      %v4030 = vpop.permute.xlu0 %4029
      %4032 = vst.msk [vmem:[#allocation4 + $0x38] sm:$0xff] %vm3535, %v4030
      %s4033 = scalar_lea.vmem [#allocation2], 270
      %v4034 = vld [vmem:[%s4033] ss:$2 sm:$0xff]
      %4036 = vrot.lane.b32.xlu0 %v4034, 24
      %v4037 = vpop.permute.xlu0 %4036
      %4039 = vst.msk [vmem:[#allocation4 + $0x38] sm:$0xff] %vm3543, %v4037
      %s4040 = scalar_lea.vmem [#allocation2], 271
      %v4041 = vld [vmem:[%s4040] ss:$2 sm:$0xff]
      %4043 = vrot.lane.b32.xlu0 %v4041, 32
      %v4044 = vpop.permute.xlu0 %4043
      %4046 = vst.msk [vmem:[#allocation4 + $0x38] sm:$0xff] %vm3551, %v4044
      %s4047 = scalar_lea.vmem [#allocation2], 272
      %v4048 = vld [vmem:[%s4047] ss:$2 sm:$0xff]
      %4050 = vrot.lane.b32.xlu0 %v4048, 40
      %v4051 = vpop.permute.xlu0 %4050
      %4053 = vst.msk [vmem:[#allocation4 + $0x38] sm:$0xff] %vm3559, %v4051
      %s4054 = scalar_lea.vmem [#allocation2], 288
      %v4055 = vld [vmem:[%s4054] ss:$2 sm:$0xff]
      %4057 = vrot.lane.b32.xlu0 %v4055, 48
      %v4058 = vpop.permute.xlu0 %4057
      %4060 = vst.msk [vmem:[#allocation4 + $0x38] sm:$0xff] %vm3567, %v4058
      %s4061 = scalar_lea.vmem [#allocation2], 289
      %v4062 = vld [vmem:[%s4061] ss:$2 sm:$0xff]
      %4064 = vrot.lane.b32.xlu0 %v4062, 56
      %v4065 = vpop.permute.xlu0 %4064
      %4067 = vst.msk [vmem:[#allocation4 + $0x38] sm:$0xff] %vm3575, %v4065
      %s4068 = scalar_lea.vmem [#allocation2], 290
      %v4069 = vld [vmem:[%s4068] ss:$2 sm:$0xff]
      %4071 = vrot.lane.b32.xlu0 %v4069, 64
      %v4072 = vpop.permute.xlu0 %4071
      %4074 = vst.msk [vmem:[#allocation4 + $0x38] sm:$0xff] %vm3583, %v4072
      %s4075 = scalar_lea.vmem %s273, 307
      %v4076 = vld [vmem:[%s4075] ss:$2 sm:$0xff]
      %v4077 = vadd.f32 %v4076, 0.0
      %s4078 = scalar_lea.vmem %s273, 308
      %v4079 = vld [vmem:[%s4078] ss:$2 sm:$0xff]
      %v4080 = vadd.f32 %v4077, %v4079
      %s4081 = scalar_lea.vmem %s273, 325
      %v4082 = vld [vmem:[%s4081] ss:$2 sm:$0xff]
      %v4083 = vadd.f32 %v4080, %v4082
      %s4084 = scalar_lea.vmem %s273, 326
      %v4085 = vld [vmem:[%s4084] ss:$2 sm:$0xff]
      %v4086 = vadd.f32 %v4083, %v4085
      %v4087 = vmul.f32 %v4086, 0.25
      %4088 = vst.msk [vmem:[#allocation5 + $0x38] sm:$0xff] %vm320, %v4087
      %v4089 = vld [vmem:[#allocation4] sm:$0xff]
      %v4090 = vld [vmem:[#allocation4 + $0x8] sm:$0xff]
      %v4091 = vld [vmem:[#allocation4 + $0x10] sm:$0xff]
      %v4092 = vld [vmem:[#allocation4 + $0x18] sm:$0xff]
      %v4093 = vld [vmem:[#allocation4 + $0x20] sm:$0xff]
      %v4094 = vld [vmem:[#allocation4 + $0x28] sm:$0xff]
      %v4095 = vld [vmem:[#allocation4 + $0x30] sm:$0xff]
      %v4096 = vld [vmem:[#allocation4 + $0x38] sm:$0xff]
      %v4097 = vld [vmem:[%s3] sm:$0xff]
      %v4098 = vld [vmem:[%s3 + $0x8] sm:$0xff]
      %v4099 = vld [vmem:[%s3 + $0x10] sm:$0xff]
      %v4100 = vld [vmem:[%s3 + $0x18] sm:$0xff]
      %v4101 = vld [vmem:[%s3 + $0x20] sm:$0xff]
      %v4102 = vld [vmem:[%s3 + $0x28] sm:$0xff]
      %v4103 = vld [vmem:[%s3 + $0x30] sm:$0xff]
      %v4104 = vld [vmem:[%s3 + $0x38] sm:$0xff]
      %v4105 = vld [vmem:[%s3 + $0x40] sm:$0xff]
      %v4106 = vld [vmem:[%s4] sm:$0x1]
      %v4108 = vperm.slane %v4106, 0
      %vm4110 = vcmask 588800
      %v4112 = vsel %vm4110, %v4089, 0
      %v4115 = vsel %vm4110, %v4090, 0
      %v4118 = vsel %vm4110, %v4091, 0
      %v4121 = vsel %vm4110, %v4092, 0
      %v4124 = vsel %vm4110, %v4093, 0
      %v4127 = vsel %vm4110, %v4094, 0
      %v4130 = vsel %vm4110, %v4095, 0
      %v4133 = vsel %vm4110, %v4096, 0
      %4135 = vmatpush.msra.mxu0 0.0
      %4136 = vmatpush.msra.mxu0 0.0
      %4137 = vmatpush.msra.mxu0 0.0
      %4138 = vmatpush.msra.mxu0 0.0
      %4139 = vmatpush.msra.mxu0 0.0
      %4140 = vmatpush.msra.mxu0 0.0
      %4141 = vmatpush.msra.mxu0 0.0
      %4142 = vmatpush.msra.mxu0 %v4105
      %4143 = vmatpush.msra.mxu0 %v4104
      %4144 = vmatpush.msra.mxu0 %v4103
      %4145 = vmatpush.msra.mxu0 %v4102
      %4146 = vmatpush.msra.mxu0 %v4101
      %4147 = vmatpush.msra.mxu0 %v4100
      %4148 = vmatpush.msra.mxu0 %v4099
      %4149 = vmatpush.msra.mxu0 %v4098
      %4150 = vmatpush.msra.mxu0 %v4097
      %4151 = vmatmul.f32.gmra.mxu0 %v4112
      %v4152 = vpop.f32.mrf.mxu0
      %v4153 = vadd.f32 %v4108, %v4152
      %4154 = vmatmul.f32.gmra.mxu0 %v4115
      %v4155 = vpop.f32.mrf.mxu0
      %v4156 = vadd.f32 %v4108, %v4155
      %4157 = vmatmul.f32.gmra.mxu0 %v4118
      %v4158 = vpop.f32.mrf.mxu0
      %v4159 = vadd.f32 %v4108, %v4158
      %4160 = vmatmul.f32.gmra.mxu0 %v4121
      %v4161 = vpop.f32.mrf.mxu0
      %v4162 = vadd.f32 %v4108, %v4161
      %4163 = vmatmul.f32.gmra.mxu0 %v4124
      %v4164 = vpop.f32.mrf.mxu0
      %v4165 = vadd.f32 %v4108, %v4164
      %4166 = vmatmul.f32.gmra.mxu0 %v4127
      %v4167 = vpop.f32.mrf.mxu0
      %v4168 = vadd.f32 %v4108, %v4167
      %4169 = vmatmul.f32.gmra.mxu0 %v4130
      %v4170 = vpop.f32.mrf.mxu0
      %v4171 = vadd.f32 %v4108, %v4170
      %4172 = vmatmul.f32.gmra.mxu0 %v4133
      %v4173 = vpop.f32.mrf.mxu0
      %v4174 = vadd.f32 %v4108, %v4173
      %4175 = vdwg.mxu0
      %v4176 = vmax.f32 %v4153, 0.0
      %v4177 = vmax.f32 %v4156, 0.0
      %v4178 = vmax.f32 %v4159, 0.0
      %v4179 = vmax.f32 %v4162, 0.0
      %v4180 = vmax.f32 %v4165, 0.0
      %v4181 = vmax.f32 %v4168, 0.0
      %v4182 = vmax.f32 %v4171, 0.0
      %v4183 = vmax.f32 %v4174, 0.0
      %v4184 = vld [vmem:[#allocation5] sm:$0xff]
      %v4185 = vld [vmem:[#allocation5 + $0x8] sm:$0xff]
      %v4186 = vld [vmem:[#allocation5 + $0x10] sm:$0xff]
      %v4187 = vld [vmem:[#allocation5 + $0x18] sm:$0xff]
      %v4188 = vld [vmem:[#allocation5 + $0x20] sm:$0xff]
      %v4189 = vld [vmem:[#allocation5 + $0x28] sm:$0xff]
      %v4190 = vld [vmem:[#allocation5 + $0x30] sm:$0xff]
      %v4191 = vld [vmem:[#allocation5 + $0x38] sm:$0xff]
      %v4192 = vld [vmem:[%s5] sm:$0xf]
      %v4193 = vld [vmem:[%s6] sm:$0x1]
      %v4195 = vperm.slane %v4193, 0
      %v4198 = vsel %vm320, %v4184, 0
      %v4201 = vsel %vm320, %v4185, 0
      %v4204 = vsel %vm320, %v4186, 0
      %v4207 = vsel %vm320, %v4187, 0
      %v4210 = vsel %vm320, %v4188, 0
      %v4213 = vsel %vm320, %v4189, 0
      %v4216 = vsel %vm320, %v4190, 0
      %v4219 = vsel %vm320, %v4191, 0
      %v4222 = vsel %vm2512, %v4192, 0
      %4224 = vmatpush.msra.mxu0 0.0
      %4225 = vmatpush.msra.mxu0 0.0
      %4226 = vmatpush.msra.mxu0 0.0
      %4227 = vmatpush.msra.mxu0 0.0
      %4228 = vmatpush.msra.mxu0 0.0
      %4229 = vmatpush.msra.mxu0 0.0
      %4230 = vmatpush.msra.mxu0 0.0
      %4231 = vmatpush.msra.mxu0 0.0
      %4232 = vmatpush.msra.mxu0 0.0
      %4233 = vmatpush.msra.mxu0 0.0
      %4234 = vmatpush.msra.mxu0 0.0
      %4235 = vmatpush.msra.mxu0 0.0
      %4236 = vmatpush.msra.mxu0 0.0
      %4237 = vmatpush.msra.mxu0 0.0
      %4238 = vmatpush.msra.mxu0 0.0
      %4239 = vmatpush.msra.mxu0 %v4222
      %4240 = vmatmul.f32.gmra.mxu0 %v4198
      %v4241 = vpop.f32.mrf.mxu0
      %v4242 = vadd.f32 %v4195, %v4241
      %4243 = vmatmul.f32.gmra.mxu0 %v4201
      %v4244 = vpop.f32.mrf.mxu0
      %v4245 = vadd.f32 %v4195, %v4244
      %4246 = vmatmul.f32.gmra.mxu0 %v4204
      %v4247 = vpop.f32.mrf.mxu0
      %v4248 = vadd.f32 %v4195, %v4247
      %4249 = vmatmul.f32.gmra.mxu0 %v4207
      %v4250 = vpop.f32.mrf.mxu0
      %v4251 = vadd.f32 %v4195, %v4250
      %4252 = vmatmul.f32.gmra.mxu0 %v4210
      %v4253 = vpop.f32.mrf.mxu0
      %v4254 = vadd.f32 %v4195, %v4253
      %4255 = vmatmul.f32.gmra.mxu0 %v4213
      %v4256 = vpop.f32.mrf.mxu0
      %v4257 = vadd.f32 %v4195, %v4256
      %4258 = vmatmul.f32.gmra.mxu0 %v4216
      %v4259 = vpop.f32.mrf.mxu0
      %v4260 = vadd.f32 %v4195, %v4259
      %4261 = vmatmul.f32.gmra.mxu0 %v4219
      %v4262 = vpop.f32.mrf.mxu0
      %v4263 = vadd.f32 %v4195, %v4262
      %4264 = vdwg.mxu0
      %v4265 = vadd.f32 %v4176, %v4242
      %v4266 = vadd.f32 %v4177, %v4245
      %v4267 = vadd.f32 %v4178, %v4248
      %v4268 = vadd.f32 %v4179, %v4251
      %v4269 = vadd.f32 %v4180, %v4254
      %v4270 = vadd.f32 %v4181, %v4257
      %v4271 = vadd.f32 %v4182, %v4260
      %v4272 = vadd.f32 %v4183, %v4263
      %v4273 = vmax.f32 %v4265, 0.0
      %v4274 = vmax.f32 %v4266, 0.0
      %v4275 = vmax.f32 %v4267, 0.0
      %v4276 = vmax.f32 %v4268, 0.0
      %v4277 = vmax.f32 %v4269, 0.0
      %v4278 = vmax.f32 %v4270, 0.0
      %v4279 = vmax.f32 %v4271, 0.0
      %v4280 = vmax.f32 %v4272, 0.0
      %4281 = vst.msk [vmem:[%s278] sm:$0xff] %vm3477, %v4273
      %4282 = vst.msk [vmem:[%s278 + $0x8] sm:$0xff] %vm3477, %v4274
      %4283 = vst.msk [vmem:[%s278 + $0x10] sm:$0xff] %vm3477, %v4275
      %4284 = vst.msk [vmem:[%s278 + $0x18] sm:$0xff] %vm3477, %v4276
      %4285 = vst.msk [vmem:[%s278 + $0x20] sm:$0xff] %vm3477, %v4277
      %4286 = vst.msk [vmem:[%s278 + $0x28] sm:$0xff] %vm3477, %v4278
      %4287 = vst.msk [vmem:[%s278 + $0x30] sm:$0xff] %vm3477, %v4279
      %4288 = vst.msk [vmem:[%s278 + $0x38] sm:$0xff] %vm3477, %v4280
      %p4289 = scmp.lt.s32.totalorder %s18, 1
      %s4290 = scalar_select %p4289, %s18, 1
      %s4291 = smul.addr %s4290, 8
      %s4292 = smul.addr %s4291, 8
      %s4293 = scalar_lea.vmem %s7, %s4292
      // Predicated region
      $region49: #{_lambda_.1} parent=47 // pred_check
        %p4294 = pneg %p188
      $region50: #{_lambda_.1} parent=47 // pred_check_branch
        %4296 = sbr.rel (%p4294) target = $region52
      $region51: #{_lambda_.1} parent=47 // pred_region
        _
      $region52: #{_lambda_.1} parent=47 // pred_fallthru
        _
    $region48: #{_lambda_.1} parent=5 // pred_fallthru
      _
    %p4297 = scmp.le.s32.totalorder 2, %s13
    // Predicated region
    $region53: #{_lambda_.1} parent=5 // pred_check
      %p4298 = pneg %p4297
    $region54: #{_lambda_.1} parent=5 // pred_check_branch
      %4300 = sbr.rel (%p4298) target = $region56
    $region55: #{_lambda_.1} parent=5 // pred_region
      %s4301 = ssub.s32 %s13, 2
      // Predicated region
      $region57: #{_lambda_.1} parent=55 // pred_check
        %p4302 = pneg %p194
      $region58: #{_lambda_.1} parent=55 // pred_check_branch
        %4304 = sbr.rel (%p4302) target = $region60
      $region59: #{_lambda_.1} parent=55 // pred_region
        %p4305 = scmp.lt.s32.totalorder %s19, 1
        %s4306 = scalar_select %p4305, %s19, 1
        %s4307 = smul.addr %s4306, 8
        %s4308 = smul.addr %s4307, 8
        %s4309 = scalar_lea.vmem %s7, %s4308
      $region60: #{_lambda_.1} parent=55 // pred_fallthru
        _
    $region56: #{_lambda_.1} parent=5 // pred_fallthru
      _
  $region6: #{_lambda_.1} parent=0 // loop_footer
    %s17 = sadd.s32 1, %s13
  $region7: #{_lambda_.1} parent=0 // loop_footer_branch
    %12 = sbr.rel target = $region3
  $region8: #{_lambda_.1} parent=0 // loop_exit
    _

</llo_original>
